<compile_context>
chip_gen: v7x
topology: tpu7x:2x2x1
jax: 0.10.0
libtpu: 0.0.40
codegen_flags: <defaults>
</compile_context>

<pallas_src>
import functools

import numpy as np

import jax
import jax.numpy as jnp
from jax import lax
from jax.experimental import pallas as pl
from jax.experimental.pallas import tpu as pltpu


# ---------------------------------------------------------------------------
# Single fused Pallas kernel: conv1 -> conv2 -> conv3 -> flatten -> fc
# ---------------------------------------------------------------------------
def _fused_net_kernel(p1_ref, w1b_ref, b1_ref,
                      m2_ref, w2_ref, b2_ref,
                      m3_ref, w3_ref, b3_ref,
                      wfc_ref, bfc_ref,
                      out_ref,
                      *, batch, ch, k, ow, q, lw):
    f32 = jnp.float32

    # ---- conv1 (stride 2): one lane-dense MXU matmul -----------------------
    # (B*CH, B*K1p) @ (B*K1p, 256); output lanes are phase-major (stride-2
    # phase, then 8x8 row-major) so the next layer's taps are pure lane rolls.
    a1 = jnp.dot(w1b_ref[...], p1_ref[...], preferred_element_type=f32)
    a1 = jnp.maximum(a1 + b1_ref[...], 0.0)                  # (B*CH, 4*q)
    n1 = a1.shape[1]

    # ---- conv2 (stride 2): 25 taps = lane roll + static border mask,
    # then ONE (B*CH, 25*B*CH) @ (25*B*CH, lw) matmul (no gather matrices). --
    taps = []
    for ki in range(k):
        for kj in range(k):
            t = ki * k + kj
            pi, pj = ki % 2, kj % 2
            dr, dc = (ki - 2 - pi) // 2, (kj - 2 - pj) // 2
            off = (pi * 2 + pj) * q + dr * ow + dc
            rolled = a1 if off == 0 else pltpu.roll(a1, shift=(-off) % n1,
                                                    axis=1)
            taps.append(rolled[:, :lw] * m2_ref[t:t + 1, :])
    p2 = jnp.concatenate(taps, axis=0)                       # (25*B*CH, lw)
    a2 = jnp.dot(w2_ref[...], p2, preferred_element_type=f32)
    a2 = jnp.maximum(a2 + b2_ref[...], 0.0)       # (B*CH, lw); lanes >= q dead

    # ---- conv3 (stride 1): same roll+mask machinery directly on a2 ---------
    taps = []
    for ki in range(k):
        for kj in range(k):
            t = ki * k + kj
            off = (ki - 2) * ow + (kj - 2)
            rolled = a2 if off == 0 else pltpu.roll(a2, shift=(-off) % lw,
                                                    axis=1)
            taps.append(rolled * m3_ref[t:t + 1, :])
    p3 = jnp.concatenate(taps, axis=0)                       # (25*B*CH, lw)
    a3 = jnp.dot(w3_ref[...], p3, preferred_element_type=f32)
    a3 = jnp.maximum(a3 + b3_ref[...], 0.0)       # (B*CH, lw); rows = c*B + b

    # ---- NCHW flatten folded into the Linear --------------------------------
    # Rows are (channel, batch), so each channel's B rows are contiguous:
    # accumulate 12 per-channel (B, q) x (ncls, q)^T dots against the
    # lane-dense (ncls, CH*q) fc weight.  No flatten scratch, no row copies.
    ncls = wfc_ref.shape[0]
    logits = jnp.zeros((batch, ncls), f32)
    for c in range(ch):
        a3_c = a3[c * batch:(c + 1) * batch, :q]             # (B, q)
        w_c = wfc_ref[:, c * q:(c + 1) * q]                  # (ncls, q)
        logits = logits + lax.dot_general(
            a3_c, w_c, (((1,), (1,)), ((), ())), preferred_element_type=f32)
    out_ref[...] = logits + bfc_ref[...]


# ---------------------------------------------------------------------------
# Wrapper-side (trace-time) constant construction
# ---------------------------------------------------------------------------
def _im2col_conv1(x, k, stride, pad, oh, ow, ph_h, ph_w, kpad):
    """(B,C,H,W) -> (kpad*B, oh*ow) im2col of conv1.  Columns are in stride-2
    phase-major order ((y%2, x%2) major, (y//2, x//2) 8x8 row-major minor);
    rows are (patch-index, batch) ordered to match kron(W1, I_B)."""
    b, c, _, _ = x.shape
    xp = jnp.pad(x, ((0, 0), (0, 0), (pad, pad), (pad, pad)))
    cols = []
    for ki in range(k):
        for kj in range(k):
            cols.append(xp[:, :, ki:ki + stride * oh:stride,
                           kj:kj + stride * ow:stride])
    pat = jnp.stack(cols, axis=2).reshape(b, c * k * k, oh, ow)
    phases = [pat[:, :, pi::2, pj::2].reshape(b, c * k * k, ph_h * ph_w)
              for pi in range(2) for pj in range(2)]
    pat = jnp.concatenate(phases, axis=2)                    # (B, 75, 256)
    pat = jnp.pad(pat, ((0, 0), (0, kpad - c * k * k), (0, 0)))
    return jnp.transpose(pat, (1, 0, 2)).reshape(kpad * b, oh * ow)


def _border_masks(k, oh, ow, lanes, drdc):
    """(K*K, lanes) 0/1 mask: mask[t, r*ow+c] = 1 iff tap t's source pixel for
    output (r, c) lies inside the (zero-padded) input; lanes >= oh*ow are 0."""
    m = np.zeros((k * k, lanes), np.float32)
    for ki in range(k):
        for kj in range(k):
            dr, dc = drdc(ki, kj)
            for r in range(oh):
                for c in range(ow):
                    if 0 <= r + dr < oh and 0 <= c + dc < ow:
                        m[ki * k + kj, r * ow + c] = 1.0
    return m


# ---------------------------------------------------------------------------
# Full Net forward (single fused pallas_call, no grid)
# ---------------------------------------------------------------------------
def net_forward(params, x):
    B, C, H, W = x.shape
    K, P = 5, 2
    CH = params["w1"].shape[0]                                      # 12
    OH1, OW1 = (H + 2 * P - K) // 2 + 1, (W + 2 * P - K) // 2 + 1   # 16, 16
    OH2, OW2 = (OH1 + 2 * P - K) // 2 + 1, (OW1 + 2 * P - K) // 2 + 1  # 8, 8
    Q = OH2 * OW2                                                   # 64
    LW = ((Q + 127) // 128) * 128                                   # 128
    K1 = C * K * K                                                  # 75
    K1P = ((K1 + 7) // 8) * 8                                       # 80
    num_classes = params["wfc"].shape[0]
    eye_b = jnp.eye(B, dtype=jnp.float32)

    # conv1 operands: phase-major im2col of the input + batch-folded weights
    p1 = _im2col_conv1(x, K, 2, P, OH1, OW1, OH2, OW2, K1P)   # (B*80, 256)
    w1 = jnp.pad(params["w1"].reshape(CH, K1), ((0, 0), (0, K1P - K1)))
    w1b = jnp.kron(w1, eye_b)                                 # (B*CH, B*80)
    b1r = jnp.repeat(params["b1"], B).reshape(B * CH, 1)

    # lane-dense concatenated per-tap (kron-batched) conv weights: (24, 600)
    w2cat = jnp.concatenate(
        [jnp.kron(params["w2"][:, :, ki, kj], eye_b)
         for ki in range(K) for kj in range(K)], axis=1)
    b2r = jnp.repeat(params["b2"], B).reshape(B * CH, 1)
    w3cat = jnp.concatenate(
        [jnp.kron(params["w3"][:, :, ki, kj], eye_b)
         for ki in range(K) for kj in range(K)], axis=1)
    b3r = jnp.repeat(params["b3"], B).reshape(B * CH, 1)

    # tiny static border masks (replace the MB-scale im2col gather matrices)
    m2 = jnp.asarray(_border_masks(
        K, OH2, OW2, LW,
        lambda ki, kj: ((ki - 2 - ki % 2) // 2, (kj - 2 - kj % 2) // 2)))
    m3 = jnp.asarray(_border_masks(
        K, OH2, OW2, LW, lambda ki, kj: (ki - 2, kj - 2)))

    wfc = params["wfc"]                                       # (10, 768) lane-dense
    bfc = params["bfc"].reshape(1, -1)

    kernel = functools.partial(_fused_net_kernel, batch=B, ch=CH, k=K,
                               ow=OW2, q=Q, lw=LW)
    return pl.pallas_call(
        kernel,
        out_shape=jax.ShapeDtypeStruct((B, num_classes), jnp.float32),
    )(p1, w1b, b1r, m2, w2cat, b2r, m3, w3cat, b3r, wfc, bfc)


# ---------------------------------------------------------------------------
# Parameter init + pure-JAX reference (lax conv) used for a correctness check
# ---------------------------------------------------------------------------
def init_params(key, channel=3, hidden=768, num_classes=10):
    ks = jax.random.split(key, 8)

    def u(k, shape, fan_in):
        bound = 1.0 / jnp.sqrt(fan_in)
        return jax.random.uniform(k, shape, jnp.float32, -bound, bound)

    return {
        "w1": u(ks[0], (12, channel, 5, 5), channel * 25),
        "b1": u(ks[1], (12,), channel * 25),
        "w2": u(ks[2], (12, 12, 5, 5), 12 * 25),
        "b2": u(ks[3], (12,), 12 * 25),
        "w3": u(ks[4], (12, 12, 5, 5), 12 * 25),
        "b3": u(ks[5], (12,), 12 * 25),
        "wfc": u(ks[6], (num_classes, hidden), hidden),
        "bfc": u(ks[7], (num_classes,), hidden),
    }


def net_forward_ref(params, x):
    hp = lax.Precision.HIGHEST

    def conv(x, w, b, stride, pad):
        y = lax.conv_general_dilated(
            x, w, window_strides=(stride, stride),
            padding=[(pad, pad), (pad, pad)],
            dimension_numbers=("NCHW", "OIHW", "NCHW"),
            precision=hp)
        return jnp.maximum(y + b.reshape(1, -1, 1, 1), 0.0)

    out = conv(x, params["w1"], params["b1"], 2, 2)
    out = conv(out, params["w2"], params["b2"], 2, 2)
    out = conv(out, params["w3"], params["b3"], 1, 2)
    flat = out.reshape(out.shape[0], -1)
    return jnp.dot(flat, params["wfc"].T, precision=hp) + params["bfc"]


if __name__ == "__main__":
    key = jax.random.PRNGKey(0)
    pkey, xkey = jax.random.split(key)
    params = init_params(pkey)

    # hidden=768 implies 32x32x3 inputs (32 -> 16 -> 8 -> 8, 8*8*12 = 768)
    x = jax.random.normal(xkey, (2, 3, 32, 32), jnp.float32)

    logits = jax.jit(net_forward)(params, x)
    logits = jax.block_until_ready(logits)

    ref = net_forward_ref(params, x)
    assert logits.shape == (2, 10)
    # in-kernel MXU matmuls use default precision vs HIGHEST reference;
    # 1e-3 tolerance is the documented bound for this size (passed previously).
    assert jnp.allclose(logits, ref, atol=1e-3, rtol=1e-3), (
        float(jnp.max(jnp.abs(logits - ref))))

    print("KERNEL_OK")
</pallas_src>

<mosaic_0001>
module attributes {stable_mosaic.version = 11 : i64} {
  func.func @_fused_net_kernel(%arg0: memref<160x256xf32, #tpu.memory_space<vmem>>, %arg1: memref<24x160xf32, #tpu.memory_space<vmem>>, %arg2: memref<24x1xf32, #tpu.memory_space<vmem>>, %arg3: memref<25x128xf32, #tpu.memory_space<vmem>>, %arg4: memref<24x600xf32, #tpu.memory_space<vmem>>, %arg5: memref<24x1xf32, #tpu.memory_space<vmem>>, %arg6: memref<25x128xf32, #tpu.memory_space<vmem>>, %arg7: memref<24x600xf32, #tpu.memory_space<vmem>>, %arg8: memref<24x1xf32, #tpu.memory_space<vmem>>, %arg9: memref<10x768xf32, #tpu.memory_space<vmem>>, %arg10: memref<1x10xf32, #tpu.memory_space<vmem>>, %arg11: memref<2x10xf32, #tpu.memory_space<vmem>>) attributes {dimension_semantics = [], scalar_prefetch = 0 : i64, scratch_operands = 0 : i64, tpu.core_type = #tpu.core_type<tc>} {
    %c0 = arith.constant 0 : index
    %c0_0 = arith.constant 0 : index
    %0 = vector.load %arg1[%c0, %c0_0] : memref<24x160xf32, #tpu.memory_space<vmem>>, vector<24x160xf32>
    %c0_1 = arith.constant 0 : index
    %c0_2 = arith.constant 0 : index
    %1 = vector.load %arg0[%c0_1, %c0_2] : memref<160x256xf32, #tpu.memory_space<vmem>>, vector<160x256xf32>
    %cst = arith.constant dense<0.000000e+00> : vector<24x256xf32>
    %2 = tpu.matmul %0, %1, %cst {dimension_numbers = #tpu.dot_dimension_numbers<[1], [0], [0], [1], [0, 0, 1, 1], [], []>} : vector<24x160xf32>, vector<160x256xf32>, vector<24x256xf32> -> vector<24x256xf32>
    %c0_3 = arith.constant 0 : index
    %c0_4 = arith.constant 0 : index
    %3 = vector.load %arg2[%c0_3, %c0_4] : memref<24x1xf32, #tpu.memory_space<vmem>>, vector<24x1xf32>
    %4 = vector.broadcast %3 : vector<24x1xf32> to vector<24x256xf32>
    %5 = arith.addf %2, %4 : vector<24x256xf32>
    %cst_5 = arith.constant 0.000000e+00 : f32
    %6 = vector.broadcast %cst_5 : f32 to vector<24x256xf32>
    %7 = arith.maximumf %5, %6 : vector<24x256xf32>
    %c9_i32 = arith.constant 9 : i32
    %8 = tpu.dynamic_rotate %7 by %c9_i32 dim 1 : vector<24x256xf32>, i32 -> vector<24x256xf32>
    %9 = vector.extract_strided_slice %8 {offsets = [0, 0], sizes = [24, 128], strides = [1, 1]} : vector<24x256xf32> to vector<24x128xf32>
    %c0_6 = arith.constant 0 : index
    %c0_7 = arith.constant 0 : index
    %10 = vector.load %arg3[%c0_6, %c0_7] : memref<25x128xf32, #tpu.memory_space<vmem>>, vector<1x128xf32>
    %11 = vector.broadcast %10 : vector<1x128xf32> to vector<24x128xf32>
    %12 = arith.mulf %9, %11 : vector<24x128xf32>
    %c201_i32 = arith.constant 201 : i32
    %13 = tpu.dynamic_rotate %7 by %c201_i32 dim 1 : vector<24x256xf32>, i32 -> vector<24x256xf32>
    %14 = vector.extract_strided_slice %13 {offsets = [0, 0], sizes = [24, 128], strides = [1, 1]} : vector<24x256xf32> to vector<24x128xf32>
    %c1 = arith.constant 1 : index
    %c0_8 = arith.constant 0 : index
    %15 = vector.load %arg3[%c1, %c0_8] : memref<25x128xf32, #tpu.memory_space<vmem>>, vector<1x128xf32>
    %16 = vector.broadcast %15 : vector<1x128xf32> to vector<24x128xf32>
    %17 = arith.mulf %14, %16 : vector<24x128xf32>
    %c8_i32 = arith.constant 8 : i32
    %18 = tpu.dynamic_rotate %7 by %c8_i32 dim 1 : vector<24x256xf32>, i32 -> vector<24x256xf32>
    %19 = vector.extract_strided_slice %18 {offsets = [0, 0], sizes = [24, 128], strides = [1, 1]} : vector<24x256xf32> to vector<24x128xf32>
    %c2 = arith.constant 2 : index
    %c0_9 = arith.constant 0 : index
    %20 = vector.load %arg3[%c2, %c0_9] : memref<25x128xf32, #tpu.memory_space<vmem>>, vector<1x128xf32>
    %21 = vector.broadcast %20 : vector<1x128xf32> to vector<24x128xf32>
    %22 = arith.mulf %19, %21 : vector<24x128xf32>
    %c200_i32 = arith.constant 200 : i32
    %23 = tpu.dynamic_rotate %7 by %c200_i32 dim 1 : vector<24x256xf32>, i32 -> vector<24x256xf32>
    %24 = vector.extract_strided_slice %23 {offsets = [0, 0], sizes = [24, 128], strides = [1, 1]} : vector<24x256xf32> to vector<24x128xf32>
    %c3 = arith.constant 3 : index
    %c0_10 = arith.constant 0 : index
    %25 = vector.load %arg3[%c3, %c0_10] : memref<25x128xf32, #tpu.memory_space<vmem>>, vector<1x128xf32>
    %26 = vector.broadcast %25 : vector<1x128xf32> to vector<24x128xf32>
    %27 = arith.mulf %24, %26 : vector<24x128xf32>
    %c7_i32 = arith.constant 7 : i32
    %28 = tpu.dynamic_rotate %7 by %c7_i32 dim 1 : vector<24x256xf32>, i32 -> vector<24x256xf32>
    %29 = vector.extract_strided_slice %28 {offsets = [0, 0], sizes = [24, 128], strides = [1, 1]} : vector<24x256xf32> to vector<24x128xf32>
    %c4 = arith.constant 4 : index
    %c0_11 = arith.constant 0 : index
    %30 = vector.load %arg3[%c4, %c0_11] : memref<25x128xf32, #tpu.memory_space<vmem>>, vector<1x128xf32>
    %31 = vector.broadcast %30 : vector<1x128xf32> to vector<24x128xf32>
    %32 = arith.mulf %29, %31 : vector<24x128xf32>
    %c137_i32 = arith.constant 137 : i32
    %33 = tpu.dynamic_rotate %7 by %c137_i32 dim 1 : vector<24x256xf32>, i32 -> vector<24x256xf32>
    %34 = vector.extract_strided_slice %33 {offsets = [0, 0], sizes = [24, 128], strides = [1, 1]} : vector<24x256xf32> to vector<24x128xf32>
    %c5 = arith.constant 5 : index
    %c0_12 = arith.constant 0 : index
    %35 = vector.load %arg3[%c5, %c0_12] : memref<25x128xf32, #tpu.memory_space<vmem>>, vector<1x128xf32>
    %36 = vector.broadcast %35 : vector<1x128xf32> to vector<24x128xf32>
    %37 = arith.mulf %34, %36 : vector<24x128xf32>
    %c73_i32 = arith.constant 73 : i32
    %38 = tpu.dynamic_rotate %7 by %c73_i32 dim 1 : vector<24x256xf32>, i32 -> vector<24x256xf32>
    %39 = vector.extract_strided_slice %38 {offsets = [0, 0], sizes = [24, 128], strides = [1, 1]} : vector<24x256xf32> to vector<24x128xf32>
    %c6 = arith.constant 6 : index
    %c0_13 = arith.constant 0 : index
    %40 = vector.load %arg3[%c6, %c0_13] : memref<25x128xf32, #tpu.memory_space<vmem>>, vector<1x128xf32>
    %41 = vector.broadcast %40 : vector<1x128xf32> to vector<24x128xf32>
    %42 = arith.mulf %39, %41 : vector<24x128xf32>
    %c136_i32 = arith.constant 136 : i32
    %43 = tpu.dynamic_rotate %7 by %c136_i32 dim 1 : vector<24x256xf32>, i32 -> vector<24x256xf32>
    %44 = vector.extract_strided_slice %43 {offsets = [0, 0], sizes = [24, 128], strides = [1, 1]} : vector<24x256xf32> to vector<24x128xf32>
    %c7 = arith.constant 7 : index
    %c0_14 = arith.constant 0 : index
    %45 = vector.load %arg3[%c7, %c0_14] : memref<25x128xf32, #tpu.memory_space<vmem>>, vector<1x128xf32>
    %46 = vector.broadcast %45 : vector<1x128xf32> to vector<24x128xf32>
    %47 = arith.mulf %44, %46 : vector<24x128xf32>
    %c72_i32 = arith.constant 72 : i32
    %48 = tpu.dynamic_rotate %7 by %c72_i32 dim 1 : vector<24x256xf32>, i32 -> vector<24x256xf32>
    %49 = vector.extract_strided_slice %48 {offsets = [0, 0], sizes = [24, 128], strides = [1, 1]} : vector<24x256xf32> to vector<24x128xf32>
    %c8 = arith.constant 8 : index
    %c0_15 = arith.constant 0 : index
    %50 = vector.load %arg3[%c8, %c0_15] : memref<25x128xf32, #tpu.memory_space<vmem>>, vector<1x128xf32>
    %51 = vector.broadcast %50 : vector<1x128xf32> to vector<24x128xf32>
    %52 = arith.mulf %49, %51 : vector<24x128xf32>
    %c135_i32 = arith.constant 135 : i32
    %53 = tpu.dynamic_rotate %7 by %c135_i32 dim 1 : vector<24x256xf32>, i32 -> vector<24x256xf32>
    %54 = vector.extract_strided_slice %53 {offsets = [0, 0], sizes = [24, 128], strides = [1, 1]} : vector<24x256xf32> to vector<24x128xf32>
    %c9 = arith.constant 9 : index
    %c0_16 = arith.constant 0 : index
    %55 = vector.load %arg3[%c9, %c0_16] : memref<25x128xf32, #tpu.memory_space<vmem>>, vector<1x128xf32>
    %56 = vector.broadcast %55 : vector<1x128xf32> to vector<24x128xf32>
    %57 = arith.mulf %54, %56 : vector<24x128xf32>
    %c1_i32 = arith.constant 1 : i32
    %58 = tpu.dynamic_rotate %7 by %c1_i32 dim 1 : vector<24x256xf32>, i32 -> vector<24x256xf32>
    %59 = vector.extract_strided_slice %58 {offsets = [0, 0], sizes = [24, 128], strides = [1, 1]} : vector<24x256xf32> to vector<24x128xf32>
    %c10 = arith.constant 10 : index
    %c0_17 = arith.constant 0 : index
    %60 = vector.load %arg3[%c10, %c0_17] : memref<25x128xf32, #tpu.memory_space<vmem>>, vector<1x128xf32>
    %61 = vector.broadcast %60 : vector<1x128xf32> to vector<24x128xf32>
    %62 = arith.mulf %59, %61 : vector<24x128xf32>
    %c193_i32 = arith.constant 193 : i32
    %63 = tpu.dynamic_rotate %7 by %c193_i32 dim 1 : vector<24x256xf32>, i32 -> vector<24x256xf32>
    %64 = vector.extract_strided_slice %63 {offsets = [0, 0], sizes = [24, 128], strides = [1, 1]} : vector<24x256xf32> to vector<24x128xf32>
    %c11 = arith.constant 11 : index
    %c0_18 = arith.constant 0 : index
    %65 = vector.load %arg3[%c11, %c0_18] : memref<25x128xf32, #tpu.memory_space<vmem>>, vector<1x128xf32>
    %66 = vector.broadcast %65 : vector<1x128xf32> to vector<24x128xf32>
    %67 = arith.mulf %64, %66 : vector<24x128xf32>
    %68 = vector.extract_strided_slice %7 {offsets = [0, 0], sizes = [24, 128], strides = [1, 1]} : vector<24x256xf32> to vector<24x128xf32>
    %c12 = arith.constant 12 : index
    %c0_19 = arith.constant 0 : index
    %69 = vector.load %arg3[%c12, %c0_19] : memref<25x128xf32, #tpu.memory_space<vmem>>, vector<1x128xf32>
    %70 = vector.broadcast %69 : vector<1x128xf32> to vector<24x128xf32>
    %71 = arith.mulf %68, %70 : vector<24x128xf32>
    %c192_i32 = arith.constant 192 : i32
    %72 = tpu.dynamic_rotate %7 by %c192_i32 dim 1 : vector<24x256xf32>, i32 -> vector<24x256xf32>
    %73 = vector.extract_strided_slice %72 {offsets = [0, 0], sizes = [24, 128], strides = [1, 1]} : vector<24x256xf32> to vector<24x128xf32>
    %c13 = arith.constant 13 : index
    %c0_20 = arith.constant 0 : index
    %74 = vector.load %arg3[%c13, %c0_20] : memref<25x128xf32, #tpu.memory_space<vmem>>, vector<1x128xf32>
    %75 = vector.broadcast %74 : vector<1x128xf32> to vector<24x128xf32>
    %76 = arith.mulf %73, %75 : vector<24x128xf32>
    %c255_i32 = arith.constant 255 : i32
    %77 = tpu.dynamic_rotate %7 by %c255_i32 dim 1 : vector<24x256xf32>, i32 -> vector<24x256xf32>
    %78 = vector.extract_strided_slice %77 {offsets = [0, 0], sizes = [24, 128], strides = [1, 1]} : vector<24x256xf32> to vector<24x128xf32>
    %c14 = arith.constant 14 : index
    %c0_21 = arith.constant 0 : index
    %79 = vector.load %arg3[%c14, %c0_21] : memref<25x128xf32, #tpu.memory_space<vmem>>, vector<1x128xf32>
    %80 = vector.broadcast %79 : vector<1x128xf32> to vector<24x128xf32>
    %81 = arith.mulf %78, %80 : vector<24x128xf32>
    %c129_i32 = arith.constant 129 : i32
    %82 = tpu.dynamic_rotate %7 by %c129_i32 dim 1 : vector<24x256xf32>, i32 -> vector<24x256xf32>
    %83 = vector.extract_strided_slice %82 {offsets = [0, 0], sizes = [24, 128], strides = [1, 1]} : vector<24x256xf32> to vector<24x128xf32>
    %c15 = arith.constant 15 : index
    %c0_22 = arith.constant 0 : index
    %84 = vector.load %arg3[%c15, %c0_22] : memref<25x128xf32, #tpu.memory_space<vmem>>, vector<1x128xf32>
    %85 = vector.broadcast %84 : vector<1x128xf32> to vector<24x128xf32>
    %86 = arith.mulf %83, %85 : vector<24x128xf32>
    %c65_i32 = arith.constant 65 : i32
    %87 = tpu.dynamic_rotate %7 by %c65_i32 dim 1 : vector<24x256xf32>, i32 -> vector<24x256xf32>
    %88 = vector.extract_strided_slice %87 {offsets = [0, 0], sizes = [24, 128], strides = [1, 1]} : vector<24x256xf32> to vector<24x128xf32>
    %c16 = arith.constant 16 : index
    %c0_23 = arith.constant 0 : index
    %89 = vector.load %arg3[%c16, %c0_23] : memref<25x128xf32, #tpu.memory_space<vmem>>, vector<1x128xf32>
    %90 = vector.broadcast %89 : vector<1x128xf32> to vector<24x128xf32>
    %91 = arith.mulf %88, %90 : vector<24x128xf32>
    %c128_i32 = arith.constant 128 : i32
    %92 = tpu.dynamic_rotate %7 by %c128_i32 dim 1 : vector<24x256xf32>, i32 -> vector<24x256xf32>
    %93 = vector.extract_strided_slice %92 {offsets = [0, 0], sizes = [24, 128], strides = [1, 1]} : vector<24x256xf32> to vector<24x128xf32>
    %c17 = arith.constant 17 : index
    %c0_24 = arith.constant 0 : index
    %94 = vector.load %arg3[%c17, %c0_24] : memref<25x128xf32, #tpu.memory_space<vmem>>, vector<1x128xf32>
    %95 = vector.broadcast %94 : vector<1x128xf32> to vector<24x128xf32>
    %96 = arith.mulf %93, %95 : vector<24x128xf32>
    %c64_i32 = arith.constant 64 : i32
    %97 = tpu.dynamic_rotate %7 by %c64_i32 dim 1 : vector<24x256xf32>, i32 -> vector<24x256xf32>
    %98 = vector.extract_strided_slice %97 {offsets = [0, 0], sizes = [24, 128], strides = [1, 1]} : vector<24x256xf32> to vector<24x128xf32>
    %c18 = arith.constant 18 : index
    %c0_25 = arith.constant 0 : index
    %99 = vector.load %arg3[%c18, %c0_25] : memref<25x128xf32, #tpu.memory_space<vmem>>, vector<1x128xf32>
    %100 = vector.broadcast %99 : vector<1x128xf32> to vector<24x128xf32>
    %101 = arith.mulf %98, %100 : vector<24x128xf32>
    %c127_i32 = arith.constant 127 : i32
    %102 = tpu.dynamic_rotate %7 by %c127_i32 dim 1 : vector<24x256xf32>, i32 -> vector<24x256xf32>
    %103 = vector.extract_strided_slice %102 {offsets = [0, 0], sizes = [24, 128], strides = [1, 1]} : vector<24x256xf32> to vector<24x128xf32>
    %c19 = arith.constant 19 : index
    %c0_26 = arith.constant 0 : index
    %104 = vector.load %arg3[%c19, %c0_26] : memref<25x128xf32, #tpu.memory_space<vmem>>, vector<1x128xf32>
    %105 = vector.broadcast %104 : vector<1x128xf32> to vector<24x128xf32>
    %106 = arith.mulf %103, %105 : vector<24x128xf32>
    %c249_i32 = arith.constant 249 : i32
    %107 = tpu.dynamic_rotate %7 by %c249_i32 dim 1 : vector<24x256xf32>, i32 -> vector<24x256xf32>
    %108 = vector.extract_strided_slice %107 {offsets = [0, 0], sizes = [24, 128], strides = [1, 1]} : vector<24x256xf32> to vector<24x128xf32>
    %c20 = arith.constant 20 : index
    %c0_27 = arith.constant 0 : index
    %109 = vector.load %arg3[%c20, %c0_27] : memref<25x128xf32, #tpu.memory_space<vmem>>, vector<1x128xf32>
    %110 = vector.broadcast %109 : vector<1x128xf32> to vector<24x128xf32>
    %111 = arith.mulf %108, %110 : vector<24x128xf32>
    %c185_i32 = arith.constant 185 : i32
    %112 = tpu.dynamic_rotate %7 by %c185_i32 dim 1 : vector<24x256xf32>, i32 -> vector<24x256xf32>
    %113 = vector.extract_strided_slice %112 {offsets = [0, 0], sizes = [24, 128], strides = [1, 1]} : vector<24x256xf32> to vector<24x128xf32>
    %c21 = arith.constant 21 : index
    %c0_28 = arith.constant 0 : index
    %114 = vector.load %arg3[%c21, %c0_28] : memref<25x128xf32, #tpu.memory_space<vmem>>, vector<1x128xf32>
    %115 = vector.broadcast %114 : vector<1x128xf32> to vector<24x128xf32>
    %116 = arith.mulf %113, %115 : vector<24x128xf32>
    %c248_i32 = arith.constant 248 : i32
    %117 = tpu.dynamic_rotate %7 by %c248_i32 dim 1 : vector<24x256xf32>, i32 -> vector<24x256xf32>
    %118 = vector.extract_strided_slice %117 {offsets = [0, 0], sizes = [24, 128], strides = [1, 1]} : vector<24x256xf32> to vector<24x128xf32>
    %c22 = arith.constant 22 : index
    %c0_29 = arith.constant 0 : index
    %119 = vector.load %arg3[%c22, %c0_29] : memref<25x128xf32, #tpu.memory_space<vmem>>, vector<1x128xf32>
    %120 = vector.broadcast %119 : vector<1x128xf32> to vector<24x128xf32>
    %121 = arith.mulf %118, %120 : vector<24x128xf32>
    %c184_i32 = arith.constant 184 : i32
    %122 = tpu.dynamic_rotate %7 by %c184_i32 dim 1 : vector<24x256xf32>, i32 -> vector<24x256xf32>
    %123 = vector.extract_strided_slice %122 {offsets = [0, 0], sizes = [24, 128], strides = [1, 1]} : vector<24x256xf32> to vector<24x128xf32>
    %c23 = arith.constant 23 : index
    %c0_30 = arith.constant 0 : index
    %124 = vector.load %arg3[%c23, %c0_30] : memref<25x128xf32, #tpu.memory_space<vmem>>, vector<1x128xf32>
    %125 = vector.broadcast %124 : vector<1x128xf32> to vector<24x128xf32>
    %126 = arith.mulf %123, %125 : vector<24x128xf32>
    %c247_i32 = arith.constant 247 : i32
    %127 = tpu.dynamic_rotate %7 by %c247_i32 dim 1 : vector<24x256xf32>, i32 -> vector<24x256xf32>
    %128 = vector.extract_strided_slice %127 {offsets = [0, 0], sizes = [24, 128], strides = [1, 1]} : vector<24x256xf32> to vector<24x128xf32>
    %c24 = arith.constant 24 : index
    %c0_31 = arith.constant 0 : index
    %129 = vector.load %arg3[%c24, %c0_31] : memref<25x128xf32, #tpu.memory_space<vmem>>, vector<1x128xf32>
    %130 = vector.broadcast %129 : vector<1x128xf32> to vector<24x128xf32>
    %131 = arith.mulf %128, %130 : vector<24x128xf32>
    %132 = tpu.concatenate %12, %17, %22, %27, %32, %37, %42, %47, %52, %57, %62, %67, %71, %76, %81, %86 in 0 : vector<24x128xf32>, vector<24x128xf32>, vector<24x128xf32>, vector<24x128xf32>, vector<24x128xf32>, vector<24x128xf32>, vector<24x128xf32>, vector<24x128xf32>, vector<24x128xf32>, vector<24x128xf32>, vector<24x128xf32>, vector<24x128xf32>, vector<24x128xf32>, vector<24x128xf32>, vector<24x128xf32>, vector<24x128xf32> -> vector<384x128xf32>
    %133 = tpu.concatenate %91, %96, %101, %106, %111, %116, %121, %126, %131 in 0 : vector<24x128xf32>, vector<24x128xf32>, vector<24x128xf32>, vector<24x128xf32>, vector<24x128xf32>, vector<24x128xf32>, vector<24x128xf32>, vector<24x128xf32>, vector<24x128xf32> -> vector<216x128xf32>
    %134 = tpu.concatenate %132, %133 in 0 : vector<384x128xf32>, vector<216x128xf32> -> vector<600x128xf32>
    %c0_32 = arith.constant 0 : index
    %c0_33 = arith.constant 0 : index
    %135 = vector.load %arg4[%c0_32, %c0_33] : memref<24x600xf32, #tpu.memory_space<vmem>>, vector<24x600xf32>
    %cst_34 = arith.constant dense<0.000000e+00> : vector<24x128xf32>
    %136 = tpu.matmul %135, %134, %cst_34 {dimension_numbers = #tpu.dot_dimension_numbers<[1], [0], [0], [1], [0, 0, 1, 1], [], []>} : vector<24x600xf32>, vector<600x128xf32>, vector<24x128xf32> -> vector<24x128xf32>
    %c0_35 = arith.constant 0 : index
    %c0_36 = arith.constant 0 : index
    %137 = vector.load %arg5[%c0_35, %c0_36] : memref<24x1xf32, #tpu.memory_space<vmem>>, vector<24x1xf32>
    %138 = vector.broadcast %137 : vector<24x1xf32> to vector<24x128xf32>
    %139 = arith.addf %136, %138 : vector<24x128xf32>
    %cst_37 = arith.constant 0.000000e+00 : f32
    %140 = vector.broadcast %cst_37 : f32 to vector<24x128xf32>
    %141 = arith.maximumf %139, %140 : vector<24x128xf32>
    %c18_i32 = arith.constant 18 : i32
    %142 = tpu.dynamic_rotate %141 by %c18_i32 dim 1 : vector<24x128xf32>, i32 -> vector<24x128xf32>
    %c0_38 = arith.constant 0 : index
    %c0_39 = arith.constant 0 : index
    %143 = vector.load %arg6[%c0_38, %c0_39] : memref<25x128xf32, #tpu.memory_space<vmem>>, vector<1x128xf32>
    %144 = vector.broadcast %143 : vector<1x128xf32> to vector<24x128xf32>
    %145 = arith.mulf %142, %144 : vector<24x128xf32>
    %c17_i32 = arith.constant 17 : i32
    %146 = tpu.dynamic_rotate %141 by %c17_i32 dim 1 : vector<24x128xf32>, i32 -> vector<24x128xf32>
    %c1_40 = arith.constant 1 : index
    %c0_41 = arith.constant 0 : index
    %147 = vector.load %arg6[%c1_40, %c0_41] : memref<25x128xf32, #tpu.memory_space<vmem>>, vector<1x128xf32>
    %148 = vector.broadcast %147 : vector<1x128xf32> to vector<24x128xf32>
    %149 = arith.mulf %146, %148 : vector<24x128xf32>
    %c16_i32 = arith.constant 16 : i32
    %150 = tpu.dynamic_rotate %141 by %c16_i32 dim 1 : vector<24x128xf32>, i32 -> vector<24x128xf32>
    %c2_42 = arith.constant 2 : index
    %c0_43 = arith.constant 0 : index
    %151 = vector.load %arg6[%c2_42, %c0_43] : memref<25x128xf32, #tpu.memory_space<vmem>>, vector<1x128xf32>
    %152 = vector.broadcast %151 : vector<1x128xf32> to vector<24x128xf32>
    %153 = arith.mulf %150, %152 : vector<24x128xf32>
    %c15_i32 = arith.constant 15 : i32
    %154 = tpu.dynamic_rotate %141 by %c15_i32 dim 1 : vector<24x128xf32>, i32 -> vector<24x128xf32>
    %c3_44 = arith.constant 3 : index
    %c0_45 = arith.constant 0 : index
    %155 = vector.load %arg6[%c3_44, %c0_45] : memref<25x128xf32, #tpu.memory_space<vmem>>, vector<1x128xf32>
    %156 = vector.broadcast %155 : vector<1x128xf32> to vector<24x128xf32>
    %157 = arith.mulf %154, %156 : vector<24x128xf32>
    %c14_i32 = arith.constant 14 : i32
    %158 = tpu.dynamic_rotate %141 by %c14_i32 dim 1 : vector<24x128xf32>, i32 -> vector<24x128xf32>
    %c4_46 = arith.constant 4 : index
    %c0_47 = arith.constant 0 : index
    %159 = vector.load %arg6[%c4_46, %c0_47] : memref<25x128xf32, #tpu.memory_space<vmem>>, vector<1x128xf32>
    %160 = vector.broadcast %159 : vector<1x128xf32> to vector<24x128xf32>
    %161 = arith.mulf %158, %160 : vector<24x128xf32>
    %c10_i32 = arith.constant 10 : i32
    %162 = tpu.dynamic_rotate %141 by %c10_i32 dim 1 : vector<24x128xf32>, i32 -> vector<24x128xf32>
    %c5_48 = arith.constant 5 : index
    %c0_49 = arith.constant 0 : index
    %163 = vector.load %arg6[%c5_48, %c0_49] : memref<25x128xf32, #tpu.memory_space<vmem>>, vector<1x128xf32>
    %164 = vector.broadcast %163 : vector<1x128xf32> to vector<24x128xf32>
    %165 = arith.mulf %162, %164 : vector<24x128xf32>
    %c9_i32_50 = arith.constant 9 : i32
    %166 = tpu.dynamic_rotate %141 by %c9_i32_50 dim 1 : vector<24x128xf32>, i32 -> vector<24x128xf32>
    %c6_51 = arith.constant 6 : index
    %c0_52 = arith.constant 0 : index
    %167 = vector.load %arg6[%c6_51, %c0_52] : memref<25x128xf32, #tpu.memory_space<vmem>>, vector<1x128xf32>
    %168 = vector.broadcast %167 : vector<1x128xf32> to vector<24x128xf32>
    %169 = arith.mulf %166, %168 : vector<24x128xf32>
    %c8_i32_53 = arith.constant 8 : i32
    %170 = tpu.dynamic_rotate %141 by %c8_i32_53 dim 1 : vector<24x128xf32>, i32 -> vector<24x128xf32>
    %c7_54 = arith.constant 7 : index
    %c0_55 = arith.constant 0 : index
    %171 = vector.load %arg6[%c7_54, %c0_55] : memref<25x128xf32, #tpu.memory_space<vmem>>, vector<1x128xf32>
    %172 = vector.broadcast %171 : vector<1x128xf32> to vector<24x128xf32>
    %173 = arith.mulf %170, %172 : vector<24x128xf32>
    %c7_i32_56 = arith.constant 7 : i32
    %174 = tpu.dynamic_rotate %141 by %c7_i32_56 dim 1 : vector<24x128xf32>, i32 -> vector<24x128xf32>
    %c8_57 = arith.constant 8 : index
    %c0_58 = arith.constant 0 : index
    %175 = vector.load %arg6[%c8_57, %c0_58] : memref<25x128xf32, #tpu.memory_space<vmem>>, vector<1x128xf32>
    %176 = vector.broadcast %175 : vector<1x128xf32> to vector<24x128xf32>
    %177 = arith.mulf %174, %176 : vector<24x128xf32>
    %c6_i32 = arith.constant 6 : i32
    %178 = tpu.dynamic_rotate %141 by %c6_i32 dim 1 : vector<24x128xf32>, i32 -> vector<24x128xf32>
    %c9_59 = arith.constant 9 : index
    %c0_60 = arith.constant 0 : index
    %179 = vector.load %arg6[%c9_59, %c0_60] : memref<25x128xf32, #tpu.memory_space<vmem>>, vector<1x128xf32>
    %180 = vector.broadcast %179 : vector<1x128xf32> to vector<24x128xf32>
    %181 = arith.mulf %178, %180 : vector<24x128xf32>
    %c2_i32 = arith.constant 2 : i32
    %182 = tpu.dynamic_rotate %141 by %c2_i32 dim 1 : vector<24x128xf32>, i32 -> vector<24x128xf32>
    %c10_61 = arith.constant 10 : index
    %c0_62 = arith.constant 0 : index
    %183 = vector.load %arg6[%c10_61, %c0_62] : memref<25x128xf32, #tpu.memory_space<vmem>>, vector<1x128xf32>
    %184 = vector.broadcast %183 : vector<1x128xf32> to vector<24x128xf32>
    %185 = arith.mulf %182, %184 : vector<24x128xf32>
    %c1_i32_63 = arith.constant 1 : i32
    %186 = tpu.dynamic_rotate %141 by %c1_i32_63 dim 1 : vector<24x128xf32>, i32 -> vector<24x128xf32>
    %c11_64 = arith.constant 11 : index
    %c0_65 = arith.constant 0 : index
    %187 = vector.load %arg6[%c11_64, %c0_65] : memref<25x128xf32, #tpu.memory_space<vmem>>, vector<1x128xf32>
    %188 = vector.broadcast %187 : vector<1x128xf32> to vector<24x128xf32>
    %189 = arith.mulf %186, %188 : vector<24x128xf32>
    %c12_66 = arith.constant 12 : index
    %c0_67 = arith.constant 0 : index
    %190 = vector.load %arg6[%c12_66, %c0_67] : memref<25x128xf32, #tpu.memory_space<vmem>>, vector<1x128xf32>
    %191 = vector.broadcast %190 : vector<1x128xf32> to vector<24x128xf32>
    %192 = arith.mulf %141, %191 : vector<24x128xf32>
    %c127_i32_68 = arith.constant 127 : i32
    %193 = tpu.dynamic_rotate %141 by %c127_i32_68 dim 1 : vector<24x128xf32>, i32 -> vector<24x128xf32>
    %c13_69 = arith.constant 13 : index
    %c0_70 = arith.constant 0 : index
    %194 = vector.load %arg6[%c13_69, %c0_70] : memref<25x128xf32, #tpu.memory_space<vmem>>, vector<1x128xf32>
    %195 = vector.broadcast %194 : vector<1x128xf32> to vector<24x128xf32>
    %196 = arith.mulf %193, %195 : vector<24x128xf32>
    %c126_i32 = arith.constant 126 : i32
    %197 = tpu.dynamic_rotate %141 by %c126_i32 dim 1 : vector<24x128xf32>, i32 -> vector<24x128xf32>
    %c14_71 = arith.constant 14 : index
    %c0_72 = arith.constant 0 : index
    %198 = vector.load %arg6[%c14_71, %c0_72] : memref<25x128xf32, #tpu.memory_space<vmem>>, vector<1x128xf32>
    %199 = vector.broadcast %198 : vector<1x128xf32> to vector<24x128xf32>
    %200 = arith.mulf %197, %199 : vector<24x128xf32>
    %c122_i32 = arith.constant 122 : i32
    %201 = tpu.dynamic_rotate %141 by %c122_i32 dim 1 : vector<24x128xf32>, i32 -> vector<24x128xf32>
    %c15_73 = arith.constant 15 : index
    %c0_74 = arith.constant 0 : index
    %202 = vector.load %arg6[%c15_73, %c0_74] : memref<25x128xf32, #tpu.memory_space<vmem>>, vector<1x128xf32>
    %203 = vector.broadcast %202 : vector<1x128xf32> to vector<24x128xf32>
    %204 = arith.mulf %201, %203 : vector<24x128xf32>
    %c121_i32 = arith.constant 121 : i32
    %205 = tpu.dynamic_rotate %141 by %c121_i32 dim 1 : vector<24x128xf32>, i32 -> vector<24x128xf32>
    %c16_75 = arith.constant 16 : index
    %c0_76 = arith.constant 0 : index
    %206 = vector.load %arg6[%c16_75, %c0_76] : memref<25x128xf32, #tpu.memory_space<vmem>>, vector<1x128xf32>
    %207 = vector.broadcast %206 : vector<1x128xf32> to vector<24x128xf32>
    %208 = arith.mulf %205, %207 : vector<24x128xf32>
    %c120_i32 = arith.constant 120 : i32
    %209 = tpu.dynamic_rotate %141 by %c120_i32 dim 1 : vector<24x128xf32>, i32 -> vector<24x128xf32>
    %c17_77 = arith.constant 17 : index
    %c0_78 = arith.constant 0 : index
    %210 = vector.load %arg6[%c17_77, %c0_78] : memref<25x128xf32, #tpu.memory_space<vmem>>, vector<1x128xf32>
    %211 = vector.broadcast %210 : vector<1x128xf32> to vector<24x128xf32>
    %212 = arith.mulf %209, %211 : vector<24x128xf32>
    %c119_i32 = arith.constant 119 : i32
    %213 = tpu.dynamic_rotate %141 by %c119_i32 dim 1 : vector<24x128xf32>, i32 -> vector<24x128xf32>
    %c18_79 = arith.constant 18 : index
    %c0_80 = arith.constant 0 : index
    %214 = vector.load %arg6[%c18_79, %c0_80] : memref<25x128xf32, #tpu.memory_space<vmem>>, vector<1x128xf32>
    %215 = vector.broadcast %214 : vector<1x128xf32> to vector<24x128xf32>
    %216 = arith.mulf %213, %215 : vector<24x128xf32>
    %c118_i32 = arith.constant 118 : i32
    %217 = tpu.dynamic_rotate %141 by %c118_i32 dim 1 : vector<24x128xf32>, i32 -> vector<24x128xf32>
    %c19_81 = arith.constant 19 : index
    %c0_82 = arith.constant 0 : index
    %218 = vector.load %arg6[%c19_81, %c0_82] : memref<25x128xf32, #tpu.memory_space<vmem>>, vector<1x128xf32>
    %219 = vector.broadcast %218 : vector<1x128xf32> to vector<24x128xf32>
    %220 = arith.mulf %217, %219 : vector<24x128xf32>
    %c114_i32 = arith.constant 114 : i32
    %221 = tpu.dynamic_rotate %141 by %c114_i32 dim 1 : vector<24x128xf32>, i32 -> vector<24x128xf32>
    %c20_83 = arith.constant 20 : index
    %c0_84 = arith.constant 0 : index
    %222 = vector.load %arg6[%c20_83, %c0_84] : memref<25x128xf32, #tpu.memory_space<vmem>>, vector<1x128xf32>
    %223 = vector.broadcast %222 : vector<1x128xf32> to vector<24x128xf32>
    %224 = arith.mulf %221, %223 : vector<24x128xf32>
    %c113_i32 = arith.constant 113 : i32
    %225 = tpu.dynamic_rotate %141 by %c113_i32 dim 1 : vector<24x128xf32>, i32 -> vector<24x128xf32>
    %c21_85 = arith.constant 21 : index
    %c0_86 = arith.constant 0 : index
    %226 = vector.load %arg6[%c21_85, %c0_86] : memref<25x128xf32, #tpu.memory_space<vmem>>, vector<1x128xf32>
    %227 = vector.broadcast %226 : vector<1x128xf32> to vector<24x128xf32>
    %228 = arith.mulf %225, %227 : vector<24x128xf32>
    %c112_i32 = arith.constant 112 : i32
    %229 = tpu.dynamic_rotate %141 by %c112_i32 dim 1 : vector<24x128xf32>, i32 -> vector<24x128xf32>
    %c22_87 = arith.constant 22 : index
    %c0_88 = arith.constant 0 : index
    %230 = vector.load %arg6[%c22_87, %c0_88] : memref<25x128xf32, #tpu.memory_space<vmem>>, vector<1x128xf32>
    %231 = vector.broadcast %230 : vector<1x128xf32> to vector<24x128xf32>
    %232 = arith.mulf %229, %231 : vector<24x128xf32>
    %c111_i32 = arith.constant 111 : i32
    %233 = tpu.dynamic_rotate %141 by %c111_i32 dim 1 : vector<24x128xf32>, i32 -> vector<24x128xf32>
    %c23_89 = arith.constant 23 : index
    %c0_90 = arith.constant 0 : index
    %234 = vector.load %arg6[%c23_89, %c0_90] : memref<25x128xf32, #tpu.memory_space<vmem>>, vector<1x128xf32>
    %235 = vector.broadcast %234 : vector<1x128xf32> to vector<24x128xf32>
    %236 = arith.mulf %233, %235 : vector<24x128xf32>
    %c110_i32 = arith.constant 110 : i32
    %237 = tpu.dynamic_rotate %141 by %c110_i32 dim 1 : vector<24x128xf32>, i32 -> vector<24x128xf32>
    %c24_91 = arith.constant 24 : index
    %c0_92 = arith.constant 0 : index
    %238 = vector.load %arg6[%c24_91, %c0_92] : memref<25x128xf32, #tpu.memory_space<vmem>>, vector<1x128xf32>
    %239 = vector.broadcast %238 : vector<1x128xf32> to vector<24x128xf32>
    %240 = arith.mulf %237, %239 : vector<24x128xf32>
    %241 = tpu.concatenate %145, %149, %153, %157, %161, %165, %169, %173, %177, %181, %185, %189, %192, %196, %200, %204 in 0 : vector<24x128xf32>, vector<24x128xf32>, vector<24x128xf32>, vector<24x128xf32>, vector<24x128xf32>, vector<24x128xf32>, vector<24x128xf32>, vector<24x128xf32>, vector<24x128xf32>, vector<24x128xf32>, vector<24x128xf32>, vector<24x128xf32>, vector<24x128xf32>, vector<24x128xf32>, vector<24x128xf32>, vector<24x128xf32> -> vector<384x128xf32>
    %242 = tpu.concatenate %208, %212, %216, %220, %224, %228, %232, %236, %240 in 0 : vector<24x128xf32>, vector<24x128xf32>, vector<24x128xf32>, vector<24x128xf32>, vector<24x128xf32>, vector<24x128xf32>, vector<24x128xf32>, vector<24x128xf32>, vector<24x128xf32> -> vector<216x128xf32>
    %243 = tpu.concatenate %241, %242 in 0 : vector<384x128xf32>, vector<216x128xf32> -> vector<600x128xf32>
    %c0_93 = arith.constant 0 : index
    %c0_94 = arith.constant 0 : index
    %244 = vector.load %arg7[%c0_93, %c0_94] : memref<24x600xf32, #tpu.memory_space<vmem>>, vector<24x600xf32>
    %cst_95 = arith.constant dense<0.000000e+00> : vector<24x128xf32>
    %245 = tpu.matmul %244, %243, %cst_95 {dimension_numbers = #tpu.dot_dimension_numbers<[1], [0], [0], [1], [0, 0, 1, 1], [], []>} : vector<24x600xf32>, vector<600x128xf32>, vector<24x128xf32> -> vector<24x128xf32>
    %c0_96 = arith.constant 0 : index
    %c0_97 = arith.constant 0 : index
    %246 = vector.load %arg8[%c0_96, %c0_97] : memref<24x1xf32, #tpu.memory_space<vmem>>, vector<24x1xf32>
    %247 = vector.broadcast %246 : vector<24x1xf32> to vector<24x128xf32>
    %248 = arith.addf %245, %247 : vector<24x128xf32>
    %cst_98 = arith.constant 0.000000e+00 : f32
    %249 = vector.broadcast %cst_98 : f32 to vector<24x128xf32>
    %250 = arith.maximumf %248, %249 : vector<24x128xf32>
    %cst_99 = arith.constant 0.000000e+00 : f32
    %251 = vector.broadcast %cst_99 : f32 to vector<2x10xf32>
    %252 = vector.extract_strided_slice %250 {offsets = [0, 0], sizes = [2, 64], strides = [1, 1]} : vector<24x128xf32> to vector<2x64xf32>
    %c0_100 = arith.constant 0 : index
    %c0_101 = arith.constant 0 : index
    %253 = vector.load %arg9[%c0_100, %c0_101] : memref<10x768xf32, #tpu.memory_space<vmem>>, vector<10x64xf32>
    %cst_102 = arith.constant dense<0.000000e+00> : vector<2x10xf32>
    %254 = tpu.matmul %252, %253, %cst_102 {dimension_numbers = #tpu.dot_dimension_numbers<[1], [1], [0], [0], [0, 0, 1, 0], [], []>} : vector<2x64xf32>, vector<10x64xf32>, vector<2x10xf32> -> vector<2x10xf32>
    %255 = arith.addf %251, %254 : vector<2x10xf32>
    %256 = vector.extract_strided_slice %250 {offsets = [2, 0], sizes = [2, 64], strides = [1, 1]} : vector<24x128xf32> to vector<2x64xf32>
    %c0_103 = arith.constant 0 : index
    %c64 = arith.constant 64 : index
    %257 = vector.load %arg9[%c0_103, %c64] : memref<10x768xf32, #tpu.memory_space<vmem>>, vector<10x64xf32>
    %cst_104 = arith.constant dense<0.000000e+00> : vector<2x10xf32>
    %258 = tpu.matmul %256, %257, %cst_104 {dimension_numbers = #tpu.dot_dimension_numbers<[1], [1], [0], [0], [0, 0, 1, 0], [], []>} : vector<2x64xf32>, vector<10x64xf32>, vector<2x10xf32> -> vector<2x10xf32>
    %259 = arith.addf %255, %258 : vector<2x10xf32>
    %260 = vector.extract_strided_slice %250 {offsets = [4, 0], sizes = [2, 64], strides = [1, 1]} : vector<24x128xf32> to vector<2x64xf32>
    %c0_105 = arith.constant 0 : index
    %c128 = arith.constant 128 : index
    %261 = vector.load %arg9[%c0_105, %c128] : memref<10x768xf32, #tpu.memory_space<vmem>>, vector<10x64xf32>
    %cst_106 = arith.constant dense<0.000000e+00> : vector<2x10xf32>
    %262 = tpu.matmul %260, %261, %cst_106 {dimension_numbers = #tpu.dot_dimension_numbers<[1], [1], [0], [0], [0, 0, 1, 0], [], []>} : vector<2x64xf32>, vector<10x64xf32>, vector<2x10xf32> -> vector<2x10xf32>
    %263 = arith.addf %259, %262 : vector<2x10xf32>
    %264 = vector.extract_strided_slice %250 {offsets = [6, 0], sizes = [2, 64], strides = [1, 1]} : vector<24x128xf32> to vector<2x64xf32>
    %c0_107 = arith.constant 0 : index
    %c192 = arith.constant 192 : index
    %265 = vector.load %arg9[%c0_107, %c192] : memref<10x768xf32, #tpu.memory_space<vmem>>, vector<10x64xf32>
    %cst_108 = arith.constant dense<0.000000e+00> : vector<2x10xf32>
    %266 = tpu.matmul %264, %265, %cst_108 {dimension_numbers = #tpu.dot_dimension_numbers<[1], [1], [0], [0], [0, 0, 1, 0], [], []>} : vector<2x64xf32>, vector<10x64xf32>, vector<2x10xf32> -> vector<2x10xf32>
    %267 = arith.addf %263, %266 : vector<2x10xf32>
    %268 = vector.extract_strided_slice %250 {offsets = [8, 0], sizes = [2, 64], strides = [1, 1]} : vector<24x128xf32> to vector<2x64xf32>
    %c0_109 = arith.constant 0 : index
    %c256 = arith.constant 256 : index
    %269 = vector.load %arg9[%c0_109, %c256] : memref<10x768xf32, #tpu.memory_space<vmem>>, vector<10x64xf32>
    %cst_110 = arith.constant dense<0.000000e+00> : vector<2x10xf32>
    %270 = tpu.matmul %268, %269, %cst_110 {dimension_numbers = #tpu.dot_dimension_numbers<[1], [1], [0], [0], [0, 0, 1, 0], [], []>} : vector<2x64xf32>, vector<10x64xf32>, vector<2x10xf32> -> vector<2x10xf32>
    %271 = arith.addf %267, %270 : vector<2x10xf32>
    %272 = vector.extract_strided_slice %250 {offsets = [10, 0], sizes = [2, 64], strides = [1, 1]} : vector<24x128xf32> to vector<2x64xf32>
    %c0_111 = arith.constant 0 : index
    %c320 = arith.constant 320 : index
    %273 = vector.load %arg9[%c0_111, %c320] : memref<10x768xf32, #tpu.memory_space<vmem>>, vector<10x64xf32>
    %cst_112 = arith.constant dense<0.000000e+00> : vector<2x10xf32>
    %274 = tpu.matmul %272, %273, %cst_112 {dimension_numbers = #tpu.dot_dimension_numbers<[1], [1], [0], [0], [0, 0, 1, 0], [], []>} : vector<2x64xf32>, vector<10x64xf32>, vector<2x10xf32> -> vector<2x10xf32>
    %275 = arith.addf %271, %274 : vector<2x10xf32>
    %276 = vector.extract_strided_slice %250 {offsets = [12, 0], sizes = [2, 64], strides = [1, 1]} : vector<24x128xf32> to vector<2x64xf32>
    %c0_113 = arith.constant 0 : index
    %c384 = arith.constant 384 : index
    %277 = vector.load %arg9[%c0_113, %c384] : memref<10x768xf32, #tpu.memory_space<vmem>>, vector<10x64xf32>
    %cst_114 = arith.constant dense<0.000000e+00> : vector<2x10xf32>
    %278 = tpu.matmul %276, %277, %cst_114 {dimension_numbers = #tpu.dot_dimension_numbers<[1], [1], [0], [0], [0, 0, 1, 0], [], []>} : vector<2x64xf32>, vector<10x64xf32>, vector<2x10xf32> -> vector<2x10xf32>
    %279 = arith.addf %275, %278 : vector<2x10xf32>
    %280 = vector.extract_strided_slice %250 {offsets = [14, 0], sizes = [2, 64], strides = [1, 1]} : vector<24x128xf32> to vector<2x64xf32>
    %c0_115 = arith.constant 0 : index
    %c448 = arith.constant 448 : index
    %281 = vector.load %arg9[%c0_115, %c448] : memref<10x768xf32, #tpu.memory_space<vmem>>, vector<10x64xf32>
    %cst_116 = arith.constant dense<0.000000e+00> : vector<2x10xf32>
    %282 = tpu.matmul %280, %281, %cst_116 {dimension_numbers = #tpu.dot_dimension_numbers<[1], [1], [0], [0], [0, 0, 1, 0], [], []>} : vector<2x64xf32>, vector<10x64xf32>, vector<2x10xf32> -> vector<2x10xf32>
    %283 = arith.addf %279, %282 : vector<2x10xf32>
    %284 = vector.extract_strided_slice %250 {offsets = [16, 0], sizes = [2, 64], strides = [1, 1]} : vector<24x128xf32> to vector<2x64xf32>
    %c0_117 = arith.constant 0 : index
    %c512 = arith.constant 512 : index
    %285 = vector.load %arg9[%c0_117, %c512] : memref<10x768xf32, #tpu.memory_space<vmem>>, vector<10x64xf32>
    %cst_118 = arith.constant dense<0.000000e+00> : vector<2x10xf32>
    %286 = tpu.matmul %284, %285, %cst_118 {dimension_numbers = #tpu.dot_dimension_numbers<[1], [1], [0], [0], [0, 0, 1, 0], [], []>} : vector<2x64xf32>, vector<10x64xf32>, vector<2x10xf32> -> vector<2x10xf32>
    %287 = arith.addf %283, %286 : vector<2x10xf32>
    %288 = vector.extract_strided_slice %250 {offsets = [18, 0], sizes = [2, 64], strides = [1, 1]} : vector<24x128xf32> to vector<2x64xf32>
    %c0_119 = arith.constant 0 : index
    %c576 = arith.constant 576 : index
    %289 = vector.load %arg9[%c0_119, %c576] : memref<10x768xf32, #tpu.memory_space<vmem>>, vector<10x64xf32>
    %cst_120 = arith.constant dense<0.000000e+00> : vector<2x10xf32>
    %290 = tpu.matmul %288, %289, %cst_120 {dimension_numbers = #tpu.dot_dimension_numbers<[1], [1], [0], [0], [0, 0, 1, 0], [], []>} : vector<2x64xf32>, vector<10x64xf32>, vector<2x10xf32> -> vector<2x10xf32>
    %291 = arith.addf %287, %290 : vector<2x10xf32>
    %292 = vector.extract_strided_slice %250 {offsets = [20, 0], sizes = [2, 64], strides = [1, 1]} : vector<24x128xf32> to vector<2x64xf32>
    %c0_121 = arith.constant 0 : index
    %c640 = arith.constant 640 : index
    %293 = vector.load %arg9[%c0_121, %c640] : memref<10x768xf32, #tpu.memory_space<vmem>>, vector<10x64xf32>
    %cst_122 = arith.constant dense<0.000000e+00> : vector<2x10xf32>
    %294 = tpu.matmul %292, %293, %cst_122 {dimension_numbers = #tpu.dot_dimension_numbers<[1], [1], [0], [0], [0, 0, 1, 0], [], []>} : vector<2x64xf32>, vector<10x64xf32>, vector<2x10xf32> -> vector<2x10xf32>
    %295 = arith.addf %291, %294 : vector<2x10xf32>
    %296 = vector.extract_strided_slice %250 {offsets = [22, 0], sizes = [2, 64], strides = [1, 1]} : vector<24x128xf32> to vector<2x64xf32>
    %c0_123 = arith.constant 0 : index
    %c704 = arith.constant 704 : index
    %297 = vector.load %arg9[%c0_123, %c704] : memref<10x768xf32, #tpu.memory_space<vmem>>, vector<10x64xf32>
    %cst_124 = arith.constant dense<0.000000e+00> : vector<2x10xf32>
    %298 = tpu.matmul %296, %297, %cst_124 {dimension_numbers = #tpu.dot_dimension_numbers<[1], [1], [0], [0], [0, 0, 1, 0], [], []>} : vector<2x64xf32>, vector<10x64xf32>, vector<2x10xf32> -> vector<2x10xf32>
    %299 = arith.addf %295, %298 : vector<2x10xf32>
    %c0_125 = arith.constant 0 : index
    %c0_126 = arith.constant 0 : index
    %300 = vector.load %arg10[%c0_125, %c0_126] : memref<1x10xf32, #tpu.memory_space<vmem>>, vector<1x10xf32>
    %301 = vector.broadcast %300 : vector<1x10xf32> to vector<2x10xf32>
    %302 = arith.addf %299, %301 : vector<2x10xf32>
    %c0_127 = arith.constant 0 : index
    %c0_128 = arith.constant 0 : index
    %303 = vector.load %arg11[%c0_127, %c0_128] : memref<2x10xf32, #tpu.memory_space<vmem>>, vector<2x10xf32>
    tpu.vector_store %arg11[%c0_127, %c0_128], %302 {strides = array<i32>} : memref<2x10xf32, #tpu.memory_space<vmem>>, vector<2x10xf32>,
    return
  }
}

</mosaic_0001>

<llo_original>
// kernel: net_forward.1
$region0: #{net_forward.1}
  #allocation0 [shape = 'u32[]', space=smem, size = 0x4, offset = 0x4, fixed_abs, tag = 'smem constant byte address 0x4 - core index']
  #allocation1 [shape = 'u32[144,128]{1,0:T(1,128)}', space=vmem, size = 0x12000, scoped, tag = 'internal scratch']
  %s0 = inlined_call_operand.vmem [shape: f32[160,256], index: 0, kind: input, shape index: {}]
  %s1 = inlined_call_operand.vmem [shape: f32[24,160], index: 1, kind: input, shape index: {}]
  %s2 = inlined_call_operand.vmem [shape: f32[24,1], index: 2, kind: input, shape index: {}]
  %s3 = inlined_call_operand.vmem [shape: f32[25,128], index: 3, kind: input, shape index: {}]
  %s4 = inlined_call_operand.vmem [shape: f32[24,600], index: 4, kind: input, shape index: {}]
  %s5 = inlined_call_operand.vmem [shape: f32[24,1], index: 5, kind: input, shape index: {}]
  %s6 = inlined_call_operand.vmem [shape: f32[25,128], index: 6, kind: input, shape index: {}]
  %s7 = inlined_call_operand.vmem [shape: f32[24,600], index: 7, kind: input, shape index: {}]
  %s8 = inlined_call_operand.vmem [shape: f32[24,1], index: 8, kind: input, shape index: {}]
  %s9 = inlined_call_operand.vmem [shape: f32[10,768], index: 9, kind: input, shape index: {}]
  %s10 = inlined_call_operand.vmem [shape: f32[1,10], index: 10, kind: input, shape index: {}]
  %s11 = inlined_call_operand.hbm [shape: f32[2,10], index: 11, kind: output, shape index: {}]
  %s12 = sld [smem:[#allocation0]]
  $region54: #{net_forward.1} parent=0
    _
  %s14 = ssub.s32 1, %s12
  %s15 = scalar_select 0, %s14, %s12
  $region1: #{net_forward.1} parent=0
    #allocation2 [shape = 'u8[1024]{0}', space=vmem, size = 0x400, scoped, tag = 'output window, operand 0, single buffered']
    #allocation3 [shape = 's32[1]{0}', space=sflag, size = 0x4, scoped, tag = 'scoped memory for net_forward.1']
    %16 = vsyncpa [#allocation3], 0
    // Predicated region
    $region2: #{net_forward.1} parent=1 // pred_check
      _
    $region3: #{net_forward.1} parent=1 // pred_check_branch
      %18 = sbr.rel (0) target = $region5
    $region4: #{net_forward.1} parent=1 // pred_region
      _
    $region5: #{net_forward.1} parent=1 // pred_fallthru
      _
    // Predicated region
    $region6: #{net_forward.1} parent=1 // pred_check
      _
    $region7: #{net_forward.1} parent=1 // pred_check_branch
      %20 = sbr.rel (0) target = $region9
    $region8: #{net_forward.1} parent=1 // pred_region
      _
    $region9: #{net_forward.1} parent=1 // pred_fallthru
      _
    // Predicated region
    $region10: #{net_forward.1} parent=1 // pred_check
      _
    $region11: #{net_forward.1} parent=1 // pred_check_branch
      %22 = sbr.rel (0) target = $region13
    $region12: #{net_forward.1} parent=1 // pred_region
      _
    $region13: #{net_forward.1} parent=1 // pred_fallthru
      _
    // Predicated region
    $region14: #{net_forward.1} parent=1 // pred_check
      _
    $region15: #{net_forward.1} parent=1 // pred_check_branch
      %24 = sbr.rel (0) target = $region17
    $region16: #{net_forward.1} parent=1 // pred_region
      _
    $region17: #{net_forward.1} parent=1 // pred_fallthru
      _
    // Predicated region
    $region18: #{net_forward.1} parent=1 // pred_check
      _
    $region19: #{net_forward.1} parent=1 // pred_check_branch
      %26 = sbr.rel (0) target = $region21
    $region20: #{net_forward.1} parent=1 // pred_region
      _
    $region21: #{net_forward.1} parent=1 // pred_fallthru
      _
    // Predicated region
    $region22: #{net_forward.1} parent=1 // pred_check
      _
    $region23: #{net_forward.1} parent=1 // pred_check_branch
      %28 = sbr.rel (0) target = $region25
    $region24: #{net_forward.1} parent=1 // pred_region
      _
    $region25: #{net_forward.1} parent=1 // pred_fallthru
      _
    // Predicated region
    $region26: #{net_forward.1} parent=1 // pred_check
      _
    $region27: #{net_forward.1} parent=1 // pred_check_branch
      %30 = sbr.rel (0) target = $region29
    $region28: #{net_forward.1} parent=1 // pred_region
      _
    $region29: #{net_forward.1} parent=1 // pred_fallthru
      _
    // Predicated region
    $region30: #{net_forward.1} parent=1 // pred_check
      _
    $region31: #{net_forward.1} parent=1 // pred_check_branch
      %32 = sbr.rel (0) target = $region33
    $region32: #{net_forward.1} parent=1 // pred_region
      _
    $region33: #{net_forward.1} parent=1 // pred_fallthru
      _
    // Predicated region
    $region34: #{net_forward.1} parent=1 // pred_check
      _
    $region35: #{net_forward.1} parent=1 // pred_check_branch
      %34 = sbr.rel (0) target = $region37
    $region36: #{net_forward.1} parent=1 // pred_region
      _
    $region37: #{net_forward.1} parent=1 // pred_fallthru
      _
    // Predicated region
    $region38: #{net_forward.1} parent=1 // pred_check
      _
    $region39: #{net_forward.1} parent=1 // pred_check_branch
      %36 = sbr.rel (0) target = $region41
    $region40: #{net_forward.1} parent=1 // pred_region
      _
    $region41: #{net_forward.1} parent=1 // pred_fallthru
      _
    // Predicated region
    $region42: #{net_forward.1} parent=1 // pred_check
      _
    $region43: #{net_forward.1} parent=1 // pred_check_branch
      %38 = sbr.rel (0) target = $region45
    $region44: #{net_forward.1} parent=1 // pred_region
      _
    $region45: #{net_forward.1} parent=1 // pred_fallthru
      _
    %v39 = vld [vmem:[%s1] sm:$0xff]
    %v40 = vld [vmem:[%s1 + $0x8] sm:$0xff]
    %v41 = vld [vmem:[%s1 + $0x10] sm:$0xff]
    %v42 = vld [vmem:[%s1 + $0x18] sm:$0xff]
    %v43 = vld [vmem:[%s1 + $0x20] sm:$0xff]
    %v44 = vld [vmem:[%s1 + $0x28] sm:$0xff]
    %v45 = vld [vmem:[%s0] sm:$0xff]
    %v46 = vld [vmem:[%s0 + $0x8] sm:$0xff]
    %v47 = vld [vmem:[%s0 + $0x10] sm:$0xff]
    %v48 = vld [vmem:[%s0 + $0x18] sm:$0xff]
    %v49 = vld [vmem:[%s0 + $0x20] sm:$0xff]
    %v50 = vld [vmem:[%s0 + $0x28] sm:$0xff]
    %v51 = vld [vmem:[%s0 + $0x30] sm:$0xff]
    %v52 = vld [vmem:[%s0 + $0x38] sm:$0xff]
    %v53 = vld [vmem:[%s0 + $0x40] sm:$0xff]
    %v54 = vld [vmem:[%s0 + $0x48] sm:$0xff]
    %v55 = vld [vmem:[%s0 + $0x50] sm:$0xff]
    %v56 = vld [vmem:[%s0 + $0x58] sm:$0xff]
    %v57 = vld [vmem:[%s0 + $0x60] sm:$0xff]
    %v58 = vld [vmem:[%s0 + $0x68] sm:$0xff]
    %v59 = vld [vmem:[%s0 + $0x70] sm:$0xff]
    %v60 = vld [vmem:[%s0 + $0x78] sm:$0xff]
    %v61 = vld [vmem:[%s0 + $0x80] sm:$0xff]
    %v62 = vld [vmem:[%s0 + $0x88] sm:$0xff]
    %v63 = vld [vmem:[%s0 + $0x90] sm:$0xff]
    %v64 = vld [vmem:[%s0 + $0x98] sm:$0xff]
    %v65 = vld [vmem:[%s0 + $0xa0] sm:$0xff]
    %v66 = vld [vmem:[%s0 + $0xa8] sm:$0xff]
    %v67 = vld [vmem:[%s0 + $0xb0] sm:$0xff]
    %v68 = vld [vmem:[%s0 + $0xb8] sm:$0xff]
    %v69 = vld [vmem:[%s0 + $0xc0] sm:$0xff]
    %v70 = vld [vmem:[%s0 + $0xc8] sm:$0xff]
    %v71 = vld [vmem:[%s0 + $0xd0] sm:$0xff]
    %v72 = vld [vmem:[%s0 + $0xd8] sm:$0xff]
    %v73 = vld [vmem:[%s0 + $0xe0] sm:$0xff]
    %v74 = vld [vmem:[%s0 + $0xe8] sm:$0xff]
    %v75 = vld [vmem:[%s0 + $0xf0] sm:$0xff]
    %v76 = vld [vmem:[%s0 + $0xf8] sm:$0xff]
    %v77 = vld [vmem:[%s0 + $0x100] sm:$0xff]
    %v78 = vld [vmem:[%s0 + $0x108] sm:$0xff]
    %v79 = vld [vmem:[%s0 + $0x110] sm:$0xff]
    %v80 = vld [vmem:[%s0 + $0x118] sm:$0xff]
    %v81 = vld [vmem:[%s0 + $0x120] sm:$0xff]
    %v82 = vld [vmem:[%s0 + $0x128] sm:$0xff]
    %v83 = vld [vmem:[%s0 + $0x130] sm:$0xff]
    %v84 = vld [vmem:[%s0 + $0x138] sm:$0xff]
    %v85 = vld [vmem:[%s2] sm:$0xff]
    %v86 = vld [vmem:[%s2 + $0x8] sm:$0xff]
    %v87 = vld [vmem:[%s2 + $0x10] sm:$0xff]
    %89 = vset.pattern.permute.xlu0 0
    %90 = vperm.xlu0 %89, %v85
    %v91 = vpop.permute.xlu0 %90
    %94 = vset.pattern.permute.xlu0 0
    %95 = vperm.xlu0 %94, %v86
    %v96 = vpop.permute.xlu0 %95
    %99 = vset.pattern.permute.xlu0 0
    %100 = vperm.xlu0 %99, %v87
    %v101 = vpop.permute.xlu0 %100
    %vm103 = vcmask 261120
    %v105 = vsel %vm103, %v40, 0
    %v108 = vsel %vm103, %v42, 0
    %v111 = vsel %vm103, %v44, 0
    %113 = vmatprep.subr.mxu0 %v46
    %114 = vmatpush1.msra.mxu0 %v45
    %115 = vmatprep.subr.mxu0 %v48
    %116 = vmatpush1.msra.mxu0 %v47
    %117 = vmatprep.subr.mxu0 %v50
    %118 = vmatpush1.msra.mxu0 %v49
    %119 = vmatprep.subr.mxu0 %v52
    %120 = vmatpush1.msra.mxu0 %v51
    %121 = vmatprep.subr.mxu0 %v54
    %122 = vmatpush1.msra.mxu0 %v53
    %123 = vmatprep.subr.mxu0 %v56
    %124 = vmatpush1.msra.mxu0 %v55
    %125 = vmatprep.subr.mxu0 %v58
    %126 = vmatpush1.msra.mxu0 %v57
    %127 = vmatprep.subr.mxu0 %v60
    %128 = vmatpush1.msra.mxu0 %v59
    %129 = vmatprep.subr.mxu0 %v62
    %130 = vmatpush1.msra.mxu0 %v61
    %131 = vmatprep.subr.mxu0 %v64
    %132 = vmatpush1.msra.mxu0 %v63
    %133 = vmatprep.subr.mxu0 %v66
    %134 = vmatpush1.msra.mxu0 %v65
    %135 = vmatprep.subr.mxu0 %v68
    %136 = vmatpush1.msra.mxu0 %v67
    %137 = vmatprep.subr.mxu0 %v70
    %138 = vmatpush1.msra.mxu0 %v69
    %139 = vmatprep.subr.mxu0 %v72
    %140 = vmatpush1.msra.mxu0 %v71
    %141 = vmatprep.subr.mxu0 %v74
    %142 = vmatpush1.msra.mxu0 %v73
    %143 = vmatprep.subr.mxu0 %v76
    %144 = vmatpush1.msra.mxu0 %v75
    %145 = vmatprep.subr.mxu0 %v78
    %146 = vmatpush1.msra.mxu0 %v77
    %147 = vmatprep.subr.mxu0 %v80
    %148 = vmatpush1.msra.mxu0 %v79
    %149 = vmatprep.subr.mxu0 %v82
    %150 = vmatpush1.msra.mxu0 %v81
    %151 = vmatprep.subr.mxu0 %v84
    %152 = vmatpush1.msra.mxu0 %v83
    %153 = vmatprep.subr.mxu0 0.0
    %154 = vmatpush1.msra.mxu0 0.0
    %155 = vmatprep.subr.mxu0 0.0
    %156 = vmatpush1.msra.mxu0 0.0
    %157 = vmatprep.subr.mxu0 0.0
    %158 = vmatpush1.msra.mxu0 0.0
    %159 = vmatprep.subr.mxu0 0.0
    %160 = vmatpush1.msra.mxu0 0.0
    %161 = vmatprep.subr.mxu0 0.0
    %162 = vmatpush1.msra.mxu0 0.0
    %163 = vmatprep.subr.mxu0 0.0
    %164 = vmatpush1.msra.mxu0 0.0
    %165 = vmatprep.subr.mxu0 0.0
    %166 = vmatpush1.msra.mxu0 0.0
    %167 = vmatprep.subr.mxu0 0.0
    %168 = vmatpush1.msra.mxu0 0.0
    %169 = vmatprep.subr.mxu0 0.0
    %170 = vmatpush1.msra.mxu0 0.0
    %171 = vmatprep.subr.mxu0 0.0
    %172 = vmatpush1.msra.mxu0 0.0
    %173 = vmatprep.subr.mxu0 0.0
    %174 = vmatpush1.msra.mxu0 0.0
    %175 = vmatprep.subr.mxu0 0.0
    %176 = vmatpush1.msra.mxu0 0.0
    %177 = vmatprep.mubr.f32.mxu0 %v105
    %178 = vmatmul.mubr.f32.gmra.mrb[0].mxu0 %v39
    %v179 = vpop.f32.mrb[0].mxu0
    %v180 = vadd.f32 %v91, %v179
    %v181 = vpop.f32.mrb[0].mxu0
    %v182 = vadd.f32 %v91, %v181
    %183 = vmatprep.mubr.f32.mxu0 %v108
    %184 = vmatmul.mubr.f32.gmra.mrb[0].mxu0 %v41
    %v185 = vpop.f32.mrb[0].mxu0
    %v186 = vadd.f32 %v96, %v185
    %v187 = vpop.f32.mrb[0].mxu0
    %v188 = vadd.f32 %v96, %v187
    %189 = vmatprep.mubr.f32.mxu0 %v111
    %190 = vmatmul.mubr.f32.gmra.mrb[0].mxu0 %v43
    %v191 = vpop.f32.mrb[0].mxu0
    %v192 = vadd.f32 %v101, %v191
    %v193 = vpop.f32.mrb[0].mxu0
    %v194 = vadd.f32 %v101, %v193
    %195 = vdwg.mxu0
    %v196 = vmax.f32 %v180, 0.0
    %v197 = vmax.f32 %v182, 0.0
    %v198 = vmax.f32 %v186, 0.0
    %v199 = vmax.f32 %v188, 0.0
    %v200 = vmax.f32 %v192, 0.0
    %v201 = vmax.f32 %v194, 0.0
    %202 = vrot.lane.b32.xlu0 %v196, 9
    %v203 = vpop.permute.xlu0 %202
    %204 = vrot.lane.b32.xlu0 %v198, 9
    %v205 = vpop.permute.xlu0 %204
    %206 = vrot.lane.b32.xlu0 %v200, 9
    %v207 = vpop.permute.xlu0 %206
    %208 = vrot.lane.b32.xlu0 %v197, 9
    %v209 = vpop.permute.xlu0 %208
    %210 = vrot.lane.b32.xlu0 %v199, 9
    %v211 = vpop.permute.xlu0 %210
    %212 = vrot.lane.b32.xlu0 %v201, 9
    %v213 = vpop.permute.xlu0 %212
    %v214 = vlaneseq
    %v215 = vand.u32 %v214, 127
    %vm216 = vcmp.lt.s32.totalorder %v215, 9
    %v217 = vsel %vm216, %v209, %v203
    %v218 = vsel %vm216, %v211, %v205
    %v219 = vsel %vm216, %v213, %v207
    %v220 = vld [vmem:[%s3] sm:$0x1]
    %v221 = vlaneseq
    %v222 = vshrl.u32 %v221, 7
    %v223 = vsub.s32 0, %v222
    %v224 = vrot.slane %v220, %v223
    %v225 = vmul.f32 %v217, %v224
    %v226 = vmul.f32 %v218, %v224
    %v227 = vmul.f32 %v219, %v224
    %228 = vrot.lane.b32.xlu0 %v196, 73
    %v229 = vpop.permute.xlu0 %228
    %230 = vrot.lane.b32.xlu0 %v198, 73
    %v231 = vpop.permute.xlu0 %230
    %232 = vrot.lane.b32.xlu0 %v200, 73
    %v233 = vpop.permute.xlu0 %232
    %234 = vrot.lane.b32.xlu0 %v197, 73
    %v235 = vpop.permute.xlu0 %234
    %236 = vrot.lane.b32.xlu0 %v199, 73
    %v237 = vpop.permute.xlu0 %236
    %238 = vrot.lane.b32.xlu0 %v201, 73
    %v239 = vpop.permute.xlu0 %238
    %vm240 = vcmp.lt.s32.totalorder %v215, 73
    %v241 = vsel %vm240, %v229, %v235
    %v242 = vsel %vm240, %v231, %v237
    %v243 = vsel %vm240, %v233, %v239
    %v244 = vld [vmem:[%s3 + $0x1] sm:$0x1]
    %v245 = vlaneseq
    %v246 = vshrl.u32 %v245, 7
    %v247 = vsub.s32 0, %v246
    %v248 = vrot.slane %v244, %v247
    %v249 = vmul.f32 %v241, %v248
    %v250 = vmul.f32 %v242, %v248
    %v251 = vmul.f32 %v243, %v248
    %252 = vrot.lane.b32.xlu0 %v196, 8
    %v253 = vpop.permute.xlu0 %252
    %254 = vrot.lane.b32.xlu0 %v198, 8
    %v255 = vpop.permute.xlu0 %254
    %256 = vrot.lane.b32.xlu0 %v200, 8
    %v257 = vpop.permute.xlu0 %256
    %258 = vrot.lane.b32.xlu0 %v197, 8
    %v259 = vpop.permute.xlu0 %258
    %260 = vrot.lane.b32.xlu0 %v199, 8
    %v261 = vpop.permute.xlu0 %260
    %262 = vrot.lane.b32.xlu0 %v201, 8
    %v263 = vpop.permute.xlu0 %262
    %vm264 = vcmp.lt.s32.totalorder %v215, 8
    %v265 = vsel %vm264, %v259, %v253
    %v266 = vsel %vm264, %v261, %v255
    %v267 = vsel %vm264, %v263, %v257
    %v268 = vld [vmem:[%s3 + $0x2] sm:$0x1]
    %v269 = vlaneseq
    %v270 = vshrl.u32 %v269, 7
    %v271 = vsub.s32 0, %v270
    %v272 = vrot.slane %v268, %v271
    %v273 = vmul.f32 %v265, %v272
    %v274 = vmul.f32 %v266, %v272
    %v275 = vmul.f32 %v267, %v272
    %276 = vrot.lane.b32.xlu0 %v196, 72
    %v277 = vpop.permute.xlu0 %276
    %278 = vrot.lane.b32.xlu0 %v198, 72
    %v279 = vpop.permute.xlu0 %278
    %280 = vrot.lane.b32.xlu0 %v200, 72
    %v281 = vpop.permute.xlu0 %280
    %282 = vrot.lane.b32.xlu0 %v197, 72
    %v283 = vpop.permute.xlu0 %282
    %284 = vrot.lane.b32.xlu0 %v199, 72
    %v285 = vpop.permute.xlu0 %284
    %286 = vrot.lane.b32.xlu0 %v201, 72
    %v287 = vpop.permute.xlu0 %286
    %vm288 = vcmp.lt.s32.totalorder %v215, 72
    %v289 = vsel %vm288, %v277, %v283
    %v290 = vsel %vm288, %v279, %v285
    %v291 = vsel %vm288, %v281, %v287
    %v292 = vld [vmem:[%s3 + $0x3] sm:$0x1]
    %v293 = vlaneseq
    %v294 = vshrl.u32 %v293, 7
    %v295 = vsub.s32 0, %v294
    %v296 = vrot.slane %v292, %v295
    %v297 = vmul.f32 %v289, %v296
    %v298 = vmul.f32 %v290, %v296
    %v299 = vmul.f32 %v291, %v296
    %300 = vrot.lane.b32.xlu0 %v196, 7
    %v301 = vpop.permute.xlu0 %300
    %302 = vrot.lane.b32.xlu0 %v198, 7
    %v303 = vpop.permute.xlu0 %302
    %304 = vrot.lane.b32.xlu0 %v200, 7
    %v305 = vpop.permute.xlu0 %304
    %306 = vrot.lane.b32.xlu0 %v197, 7
    %v307 = vpop.permute.xlu0 %306
    %308 = vrot.lane.b32.xlu0 %v199, 7
    %v309 = vpop.permute.xlu0 %308
    %310 = vrot.lane.b32.xlu0 %v201, 7
    %v311 = vpop.permute.xlu0 %310
    %vm312 = vcmp.lt.s32.totalorder %v215, 7
    %v313 = vsel %vm312, %v307, %v301
    %v314 = vsel %vm312, %v309, %v303
    %v315 = vsel %vm312, %v311, %v305
    %v316 = vld [vmem:[%s3 + $0x4] sm:$0x1]
    %v317 = vlaneseq
    %v318 = vshrl.u32 %v317, 7
    %v319 = vsub.s32 0, %v318
    %v320 = vrot.slane %v316, %v319
    %v321 = vmul.f32 %v313, %v320
    %v322 = vmul.f32 %v314, %v320
    %v323 = vmul.f32 %v315, %v320
    %v324 = vsel %vm216, %v203, %v209
    %v325 = vsel %vm216, %v205, %v211
    %v326 = vsel %vm216, %v207, %v213
    %v327 = vld [vmem:[%s3 + $0x5] sm:$0x1]
    %v328 = vlaneseq
    %v329 = vshrl.u32 %v328, 7
    %v330 = vsub.s32 0, %v329
    %v331 = vrot.slane %v327, %v330
    %v332 = vmul.f32 %v324, %v331
    %v333 = vmul.f32 %v325, %v331
    %v334 = vmul.f32 %v326, %v331
    %v335 = vsel %vm240, %v235, %v229
    %v336 = vsel %vm240, %v237, %v231
    %v337 = vsel %vm240, %v239, %v233
    %v338 = vld [vmem:[%s3 + $0x6] sm:$0x1]
    %v339 = vlaneseq
    %v340 = vshrl.u32 %v339, 7
    %v341 = vsub.s32 0, %v340
    %v342 = vrot.slane %v338, %v341
    %v343 = vmul.f32 %v335, %v342
    %v344 = vmul.f32 %v336, %v342
    %v345 = vmul.f32 %v337, %v342
    %v346 = vsel %vm264, %v253, %v259
    %v347 = vsel %vm264, %v255, %v261
    %v348 = vsel %vm264, %v257, %v263
    %v349 = vld [vmem:[%s3 + $0x7] sm:$0x1]
    %v350 = vlaneseq
    %v351 = vshrl.u32 %v350, 7
    %v352 = vsub.s32 0, %v351
    %v353 = vrot.slane %v349, %v352
    %v354 = vmul.f32 %v346, %v353
    %v355 = vmul.f32 %v347, %v353
    %v356 = vmul.f32 %v348, %v353
    %v357 = vsel %vm288, %v283, %v277
    %v358 = vsel %vm288, %v285, %v279
    %v359 = vsel %vm288, %v287, %v281
    %v360 = vld [vmem:[%s3 + $0x8] sm:$0x1]
    %v361 = vlaneseq
    %v362 = vshrl.u32 %v361, 7
    %v363 = vsub.s32 0, %v362
    %v364 = vrot.slane %v360, %v363
    %v365 = vmul.f32 %v357, %v364
    %v366 = vmul.f32 %v358, %v364
    %v367 = vmul.f32 %v359, %v364
    %v368 = vsel %vm312, %v301, %v307
    %v369 = vsel %vm312, %v303, %v309
    %v370 = vsel %vm312, %v305, %v311
    %v371 = vld [vmem:[%s3 + $0x9] sm:$0x1]
    %v372 = vlaneseq
    %v373 = vshrl.u32 %v372, 7
    %v374 = vsub.s32 0, %v373
    %v375 = vrot.slane %v371, %v374
    %v376 = vmul.f32 %v368, %v375
    %v377 = vmul.f32 %v369, %v375
    %v378 = vmul.f32 %v370, %v375
    %379 = vrot.lane.b32.xlu0 %v196, 1
    %v380 = vpop.permute.xlu0 %379
    %381 = vrot.lane.b32.xlu0 %v198, 1
    %v382 = vpop.permute.xlu0 %381
    %383 = vrot.lane.b32.xlu0 %v200, 1
    %v384 = vpop.permute.xlu0 %383
    %385 = vrot.lane.b32.xlu0 %v197, 1
    %v386 = vpop.permute.xlu0 %385
    %387 = vrot.lane.b32.xlu0 %v199, 1
    %v388 = vpop.permute.xlu0 %387
    %389 = vrot.lane.b32.xlu0 %v201, 1
    %v390 = vpop.permute.xlu0 %389
    %vm391 = vcmp.lt.s32.totalorder %v215, 1
    %v392 = vsel %vm391, %v386, %v380
    %v393 = vsel %vm391, %v388, %v382
    %v394 = vsel %vm391, %v390, %v384
    %v395 = vld [vmem:[%s3 + $0xa] sm:$0x1]
    %v396 = vlaneseq
    %v397 = vshrl.u32 %v396, 7
    %v398 = vsub.s32 0, %v397
    %v399 = vrot.slane %v395, %v398
    %v400 = vmul.f32 %v392, %v399
    %v401 = vmul.f32 %v393, %v399
    %v402 = vmul.f32 %v394, %v399
    %403 = vrot.lane.b32.xlu0 %v196, 65
    %v404 = vpop.permute.xlu0 %403
    %405 = vrot.lane.b32.xlu0 %v198, 65
    %v406 = vpop.permute.xlu0 %405
    %407 = vrot.lane.b32.xlu0 %v200, 65
    %v408 = vpop.permute.xlu0 %407
    %409 = vrot.lane.b32.xlu0 %v197, 65
    %v410 = vpop.permute.xlu0 %409
    %411 = vrot.lane.b32.xlu0 %v199, 65
    %v412 = vpop.permute.xlu0 %411
    %413 = vrot.lane.b32.xlu0 %v201, 65
    %v414 = vpop.permute.xlu0 %413
    %vm415 = vcmp.lt.s32.totalorder %v215, 65
    %v416 = vsel %vm415, %v404, %v410
    %v417 = vsel %vm415, %v406, %v412
    %v418 = vsel %vm415, %v408, %v414
    %v419 = vld [vmem:[%s3 + $0xb] sm:$0x1]
    %v420 = vlaneseq
    %v421 = vshrl.u32 %v420, 7
    %v422 = vsub.s32 0, %v421
    %v423 = vrot.slane %v419, %v422
    %v424 = vmul.f32 %v416, %v423
    %v425 = vmul.f32 %v417, %v423
    %v426 = vmul.f32 %v418, %v423
    %v427 = vld [vmem:[%s3 + $0xc] sm:$0x1]
    %v428 = vlaneseq
    %v429 = vshrl.u32 %v428, 7
    %v430 = vsub.s32 0, %v429
    %v431 = vrot.slane %v427, %v430
    %v432 = vmul.f32 %v196, %v431
    %v433 = vmul.f32 %v198, %v431
    %v434 = vmul.f32 %v200, %v431
    %435 = vrot.lane.b32.xlu0 %v196, 64
    %v436 = vpop.permute.xlu0 %435
    %437 = vrot.lane.b32.xlu0 %v198, 64
    %v438 = vpop.permute.xlu0 %437
    %439 = vrot.lane.b32.xlu0 %v200, 64
    %v440 = vpop.permute.xlu0 %439
    %441 = vrot.lane.b32.xlu0 %v197, 64
    %v442 = vpop.permute.xlu0 %441
    %443 = vrot.lane.b32.xlu0 %v199, 64
    %v444 = vpop.permute.xlu0 %443
    %445 = vrot.lane.b32.xlu0 %v201, 64
    %v446 = vpop.permute.xlu0 %445
    %vm447 = vcmp.lt.s32.totalorder %v215, 64
    %v448 = vsel %vm447, %v436, %v442
    %v449 = vsel %vm447, %v438, %v444
    %v450 = vsel %vm447, %v440, %v446
    %v451 = vld [vmem:[%s3 + $0xd] sm:$0x1]
    %v452 = vlaneseq
    %v453 = vshrl.u32 %v452, 7
    %v454 = vsub.s32 0, %v453
    %v455 = vrot.slane %v451, %v454
    %v456 = vmul.f32 %v448, %v455
    %v457 = vmul.f32 %v449, %v455
    %v458 = vmul.f32 %v450, %v455
    %459 = vrot.lane.b32.xlu0 %v196, 127
    %v460 = vpop.permute.xlu0 %459
    %461 = vrot.lane.b32.xlu0 %v198, 127
    %v462 = vpop.permute.xlu0 %461
    %463 = vrot.lane.b32.xlu0 %v200, 127
    %v464 = vpop.permute.xlu0 %463
    %465 = vrot.lane.b32.xlu0 %v197, 127
    %v466 = vpop.permute.xlu0 %465
    %467 = vrot.lane.b32.xlu0 %v199, 127
    %v468 = vpop.permute.xlu0 %467
    %469 = vrot.lane.b32.xlu0 %v201, 127
    %v470 = vpop.permute.xlu0 %469
    %vm471 = vcmp.lt.s32.totalorder %v215, 127
    %v472 = vsel %vm471, %v460, %v466
    %v473 = vsel %vm471, %v462, %v468
    %v474 = vsel %vm471, %v464, %v470
    %v475 = vld [vmem:[%s3 + $0xe] sm:$0x1]
    %v476 = vlaneseq
    %v477 = vshrl.u32 %v476, 7
    %v478 = vsub.s32 0, %v477
    %v479 = vrot.slane %v475, %v478
    %v480 = vmul.f32 %v472, %v479
    %v481 = vmul.f32 %v473, %v479
    %v482 = vmul.f32 %v474, %v479
    %v483 = vsel %vm391, %v380, %v386
    %v484 = vsel %vm391, %v382, %v388
    %v485 = vsel %vm391, %v384, %v390
    %v486 = vld [vmem:[%s3 + $0xf] sm:$0x1]
    %v487 = vlaneseq
    %v488 = vshrl.u32 %v487, 7
    %v489 = vsub.s32 0, %v488
    %v490 = vrot.slane %v486, %v489
    %v491 = vmul.f32 %v483, %v490
    %v492 = vmul.f32 %v484, %v490
    %v493 = vmul.f32 %v485, %v490
    %v494 = vsel %vm415, %v410, %v404
    %v495 = vsel %vm415, %v412, %v406
    %v496 = vsel %vm415, %v414, %v408
    %v497 = vld [vmem:[%s3 + $0x10] sm:$0x1]
    %v498 = vlaneseq
    %v499 = vshrl.u32 %v498, 7
    %v500 = vsub.s32 0, %v499
    %v501 = vrot.slane %v497, %v500
    %v502 = vmul.f32 %v494, %v501
    %v503 = vmul.f32 %v495, %v501
    %v504 = vmul.f32 %v496, %v501
    %v505 = vld [vmem:[%s3 + $0x11] sm:$0x1]
    %v506 = vlaneseq
    %v507 = vshrl.u32 %v506, 7
    %v508 = vsub.s32 0, %v507
    %v509 = vrot.slane %v505, %v508
    %v510 = vmul.f32 %v197, %v509
    %v511 = vmul.f32 %v199, %v509
    %v512 = vmul.f32 %v201, %v509
    %v513 = vsel %vm447, %v442, %v436
    %v514 = vsel %vm447, %v444, %v438
    %v515 = vsel %vm447, %v446, %v440
    %v516 = vld [vmem:[%s3 + $0x12] sm:$0x1]
    %v517 = vlaneseq
    %v518 = vshrl.u32 %v517, 7
    %v519 = vsub.s32 0, %v518
    %v520 = vrot.slane %v516, %v519
    %v521 = vmul.f32 %v513, %v520
    %v522 = vmul.f32 %v514, %v520
    %v523 = vmul.f32 %v515, %v520
    %v524 = vsel %vm471, %v466, %v460
    %v525 = vsel %vm471, %v468, %v462
    %v526 = vsel %vm471, %v470, %v464
    %v527 = vld [vmem:[%s3 + $0x13] sm:$0x1]
    %v528 = vlaneseq
    %v529 = vshrl.u32 %v528, 7
    %v530 = vsub.s32 0, %v529
    %v531 = vrot.slane %v527, %v530
    %v532 = vmul.f32 %v524, %v531
    %v533 = vmul.f32 %v525, %v531
    %v534 = vmul.f32 %v526, %v531
    %535 = vrot.lane.b32.xlu0 %v196, 121
    %v536 = vpop.permute.xlu0 %535
    %537 = vrot.lane.b32.xlu0 %v198, 121
    %v538 = vpop.permute.xlu0 %537
    %539 = vrot.lane.b32.xlu0 %v200, 121
    %v540 = vpop.permute.xlu0 %539
    %541 = vrot.lane.b32.xlu0 %v197, 121
    %v542 = vpop.permute.xlu0 %541
    %543 = vrot.lane.b32.xlu0 %v199, 121
    %v544 = vpop.permute.xlu0 %543
    %545 = vrot.lane.b32.xlu0 %v201, 121
    %v546 = vpop.permute.xlu0 %545
    %vm547 = vcmp.lt.s32.totalorder %v215, 121
    %v548 = vsel %vm547, %v536, %v542
    %v549 = vsel %vm547, %v538, %v544
    %v550 = vsel %vm547, %v540, %v546
    %v551 = vld [vmem:[%s3 + $0x14] sm:$0x1]
    %v552 = vlaneseq
    %v553 = vshrl.u32 %v552, 7
    %v554 = vsub.s32 0, %v553
    %v555 = vrot.slane %v551, %v554
    %v556 = vmul.f32 %v548, %v555
    %v557 = vmul.f32 %v549, %v555
    %v558 = vmul.f32 %v550, %v555
    %559 = vrot.lane.b32.xlu0 %v196, 57
    %v560 = vpop.permute.xlu0 %559
    %561 = vrot.lane.b32.xlu0 %v198, 57
    %v562 = vpop.permute.xlu0 %561
    %563 = vrot.lane.b32.xlu0 %v200, 57
    %v564 = vpop.permute.xlu0 %563
    %565 = vrot.lane.b32.xlu0 %v197, 57
    %v566 = vpop.permute.xlu0 %565
    %567 = vrot.lane.b32.xlu0 %v199, 57
    %v568 = vpop.permute.xlu0 %567
    %569 = vrot.lane.b32.xlu0 %v201, 57
    %v570 = vpop.permute.xlu0 %569
    %vm571 = vcmp.lt.s32.totalorder %v215, 57
    %v572 = vsel %vm571, %v560, %v566
    %v573 = vsel %vm571, %v562, %v568
    %v574 = vsel %vm571, %v564, %v570
    %v575 = vld [vmem:[%s3 + $0x15] sm:$0x1]
    %v576 = vlaneseq
    %v577 = vshrl.u32 %v576, 7
    %v578 = vsub.s32 0, %v577
    %v579 = vrot.slane %v575, %v578
    %v580 = vmul.f32 %v572, %v579
    %v581 = vmul.f32 %v573, %v579
    %v582 = vmul.f32 %v574, %v579
    %583 = vrot.lane.b32.xlu0 %v196, 120
    %v584 = vpop.permute.xlu0 %583
    %585 = vrot.lane.b32.xlu0 %v198, 120
    %v586 = vpop.permute.xlu0 %585
    %587 = vrot.lane.b32.xlu0 %v200, 120
    %v588 = vpop.permute.xlu0 %587
    %589 = vrot.lane.b32.xlu0 %v197, 120
    %v590 = vpop.permute.xlu0 %589
    %591 = vrot.lane.b32.xlu0 %v199, 120
    %v592 = vpop.permute.xlu0 %591
    %593 = vrot.lane.b32.xlu0 %v201, 120
    %v594 = vpop.permute.xlu0 %593
    %vm595 = vcmp.lt.s32.totalorder %v215, 120
    %v596 = vsel %vm595, %v584, %v590
    %v597 = vsel %vm595, %v586, %v592
    %v598 = vsel %vm595, %v588, %v594
    %v599 = vld [vmem:[%s3 + $0x16] sm:$0x1]
    %v600 = vlaneseq
    %v601 = vshrl.u32 %v600, 7
    %v602 = vsub.s32 0, %v601
    %v603 = vrot.slane %v599, %v602
    %v604 = vmul.f32 %v596, %v603
    %v605 = vmul.f32 %v597, %v603
    %v606 = vmul.f32 %v598, %v603
    %607 = vrot.lane.b32.xlu0 %v196, 56
    %v608 = vpop.permute.xlu0 %607
    %609 = vrot.lane.b32.xlu0 %v198, 56
    %v610 = vpop.permute.xlu0 %609
    %611 = vrot.lane.b32.xlu0 %v200, 56
    %v612 = vpop.permute.xlu0 %611
    %613 = vrot.lane.b32.xlu0 %v197, 56
    %v614 = vpop.permute.xlu0 %613
    %615 = vrot.lane.b32.xlu0 %v199, 56
    %v616 = vpop.permute.xlu0 %615
    %617 = vrot.lane.b32.xlu0 %v201, 56
    %v618 = vpop.permute.xlu0 %617
    %vm619 = vcmp.lt.s32.totalorder %v215, 56
    %v620 = vsel %vm619, %v608, %v614
    %v621 = vsel %vm619, %v610, %v616
    %v622 = vsel %vm619, %v612, %v618
    %v623 = vld [vmem:[%s3 + $0x17] sm:$0x1]
    %v624 = vlaneseq
    %v625 = vshrl.u32 %v624, 7
    %v626 = vsub.s32 0, %v625
    %v627 = vrot.slane %v623, %v626
    %v628 = vmul.f32 %v620, %v627
    %v629 = vmul.f32 %v621, %v627
    %v630 = vmul.f32 %v622, %v627
    %631 = vrot.lane.b32.xlu0 %v196, 119
    %v632 = vpop.permute.xlu0 %631
    %633 = vrot.lane.b32.xlu0 %v198, 119
    %v634 = vpop.permute.xlu0 %633
    %635 = vrot.lane.b32.xlu0 %v200, 119
    %v636 = vpop.permute.xlu0 %635
    %637 = vrot.lane.b32.xlu0 %v197, 119
    %v638 = vpop.permute.xlu0 %637
    %639 = vrot.lane.b32.xlu0 %v199, 119
    %v640 = vpop.permute.xlu0 %639
    %641 = vrot.lane.b32.xlu0 %v201, 119
    %v642 = vpop.permute.xlu0 %641
    %vm643 = vcmp.lt.s32.totalorder %v215, 119
    %v644 = vsel %vm643, %v632, %v638
    %v645 = vsel %vm643, %v634, %v640
    %v646 = vsel %vm643, %v636, %v642
    %v647 = vld [vmem:[%s3 + $0x18] sm:$0x1]
    %v648 = vlaneseq
    %v649 = vshrl.u32 %v648, 7
    %v650 = vsub.s32 0, %v649
    %v651 = vrot.slane %v647, %v650
    %v652 = vmul.f32 %v644, %v651
    %v653 = vmul.f32 %v645, %v651
    %v654 = vmul.f32 %v646, %v651
    %v655 = vld [vmem:[%s4] sm:$0xff]
    %v656 = vld [vmem:[%s4 + $0x8] sm:$0xff]
    %v657 = vld [vmem:[%s4 + $0x10] sm:$0xff]
    %v658 = vld [vmem:[%s4 + $0x18] sm:$0xff]
    %v659 = vld [vmem:[%s4 + $0x20] sm:$0xff]
    %v660 = vld [vmem:[%s4 + $0x28] sm:$0xff]
    %v661 = vld [vmem:[%s4 + $0x30] sm:$0xff]
    %v662 = vld [vmem:[%s4 + $0x38] sm:$0xff]
    %v663 = vld [vmem:[%s4 + $0x40] sm:$0xff]
    %v664 = vld [vmem:[%s4 + $0x48] sm:$0xff]
    %v665 = vld [vmem:[%s4 + $0x50] sm:$0xff]
    %v666 = vld [vmem:[%s4 + $0x58] sm:$0xff]
    %v667 = vld [vmem:[%s4 + $0x60] sm:$0xff]
    %v668 = vld [vmem:[%s4 + $0x68] sm:$0xff]
    %v669 = vld [vmem:[%s4 + $0x70] sm:$0xff]
    %v670 = vld [vmem:[%s5] sm:$0xff]
    %v671 = vld [vmem:[%s5 + $0x8] sm:$0xff]
    %v672 = vld [vmem:[%s5 + $0x10] sm:$0xff]
    %674 = vset.pattern.permute.xlu0 0
    %675 = vperm.xlu0 %674, %v670
    %v676 = vpop.permute.xlu0 %675
    %679 = vset.pattern.permute.xlu0 0
    %680 = vperm.xlu0 %679, %v671
    %v681 = vpop.permute.xlu0 %680
    %684 = vset.pattern.permute.xlu0 0
    %685 = vperm.xlu0 %684, %v672
    %v686 = vpop.permute.xlu0 %685
    %vm688 = vcmask 719872
    %v690 = vsel %vm688, %v659, 0
    %v693 = vsel %vm688, %v664, 0
    %v696 = vsel %vm688, %v669, 0
    %698 = vmatprep.subr.mxu0 0.0
    %699 = vmatpush1.msra.mxu0 %v225
    %700 = vmatprep.subr.mxu0 0.0
    %701 = vmatpush1.msra.mxu0 %v226
    %702 = vmatprep.subr.mxu0 0.0
    %703 = vmatpush1.msra.mxu0 %v227
    %704 = vmatprep.subr.mxu0 0.0
    %705 = vmatpush1.msra.mxu0 %v249
    %706 = vmatprep.subr.mxu0 0.0
    %707 = vmatpush1.msra.mxu0 %v250
    %708 = vmatprep.subr.mxu0 0.0
    %709 = vmatpush1.msra.mxu0 %v251
    %710 = vmatprep.subr.mxu0 0.0
    %711 = vmatpush1.msra.mxu0 %v273
    %712 = vmatprep.subr.mxu0 0.0
    %713 = vmatpush1.msra.mxu0 %v274
    %714 = vmatprep.subr.mxu0 0.0
    %715 = vmatpush1.msra.mxu0 %v275
    %716 = vmatprep.subr.mxu0 0.0
    %717 = vmatpush1.msra.mxu0 %v297
    %718 = vmatprep.subr.mxu0 0.0
    %719 = vmatpush1.msra.mxu0 %v298
    %720 = vmatprep.subr.mxu0 0.0
    %721 = vmatpush1.msra.mxu0 %v299
    %722 = vmatprep.subr.mxu0 0.0
    %723 = vmatpush1.msra.mxu0 %v321
    %724 = vmatprep.subr.mxu0 0.0
    %725 = vmatpush1.msra.mxu0 %v322
    %726 = vmatprep.subr.mxu0 0.0
    %727 = vmatpush1.msra.mxu0 %v323
    %728 = vmatprep.subr.mxu0 0.0
    %729 = vmatpush1.msra.mxu0 %v332
    %730 = vmatprep.subr.mxu0 0.0
    %731 = vmatpush1.msra.mxu0 %v333
    %732 = vmatprep.subr.mxu0 0.0
    %733 = vmatpush1.msra.mxu0 %v334
    %734 = vmatprep.subr.mxu0 0.0
    %735 = vmatpush1.msra.mxu0 %v343
    %736 = vmatprep.subr.mxu0 0.0
    %737 = vmatpush1.msra.mxu0 %v344
    %738 = vmatprep.subr.mxu0 0.0
    %739 = vmatpush1.msra.mxu0 %v345
    %740 = vmatprep.subr.mxu0 0.0
    %741 = vmatpush1.msra.mxu0 %v354
    %742 = vmatprep.subr.mxu0 0.0
    %743 = vmatpush1.msra.mxu0 %v355
    %744 = vmatprep.subr.mxu0 0.0
    %745 = vmatpush1.msra.mxu0 %v356
    %746 = vmatprep.subr.mxu0 0.0
    %747 = vmatpush1.msra.mxu0 %v365
    %748 = vmatprep.subr.mxu0 0.0
    %749 = vmatpush1.msra.mxu0 %v366
    %750 = vmatprep.subr.mxu0 0.0
    %751 = vmatpush1.msra.mxu0 %v367
    %752 = vmatprep.subr.mxu0 0.0
    %753 = vmatpush1.msra.mxu0 %v376
    %754 = vmatprep.subr.mxu0 0.0
    %755 = vmatpush1.msra.mxu0 %v377
    %756 = vmatprep.subr.mxu0 0.0
    %757 = vmatpush1.msra.mxu0 %v378
    %758 = vmatprep.subr.mxu0 0.0
    %759 = vmatpush1.msra.mxu0 %v400
    %760 = vmatprep.subr.mxu0 0.0
    %761 = vmatpush1.msra.mxu0 %v401
    %762 = vmatprep.mubr.f32.mxu0 %v656
    %763 = vmatmul.mubr.f32.gmra.mrb[0].mxu0 %v655
    %v764 = vpop.f32.mrb[0].mxu0
    %v765 = vadd.f32 %v676, %v764
    %v766 = vpop.f32.mrb[0].mxu0
    %767 = vmatprep.mubr.f32.mxu0 %v661
    %768 = vmatmul.mubr.f32.gmra.mrb[0].mxu0 %v660
    %v769 = vpop.f32.mrb[0].mxu0
    %v770 = vadd.f32 %v681, %v769
    %v771 = vpop.f32.mrb[0].mxu0
    %772 = vmatprep.mubr.f32.mxu0 %v666
    %773 = vmatmul.mubr.f32.gmra.mrb[0].mxu0 %v665
    %v774 = vpop.f32.mrb[0].mxu0
    %v775 = vadd.f32 %v686, %v774
    %v776 = vpop.f32.mrb[0].mxu0
    %777 = vdwg.mxu0
    %778 = vmatprep.subr.mxu0 0.0
    %779 = vmatpush1.msra.mxu0 %v402
    %780 = vmatprep.subr.mxu0 0.0
    %781 = vmatpush1.msra.mxu0 %v424
    %782 = vmatprep.subr.mxu0 0.0
    %783 = vmatpush1.msra.mxu0 %v425
    %784 = vmatprep.subr.mxu0 0.0
    %785 = vmatpush1.msra.mxu0 %v426
    %786 = vmatprep.subr.mxu0 0.0
    %787 = vmatpush1.msra.mxu0 %v432
    %788 = vmatprep.subr.mxu0 0.0
    %789 = vmatpush1.msra.mxu0 %v433
    %790 = vmatprep.subr.mxu0 0.0
    %791 = vmatpush1.msra.mxu0 %v434
    %792 = vmatprep.subr.mxu0 0.0
    %793 = vmatpush1.msra.mxu0 %v456
    %794 = vmatprep.subr.mxu0 0.0
    %795 = vmatpush1.msra.mxu0 %v457
    %796 = vmatprep.subr.mxu0 0.0
    %797 = vmatpush1.msra.mxu0 %v458
    %798 = vmatprep.subr.mxu0 0.0
    %799 = vmatpush1.msra.mxu0 %v480
    %800 = vmatprep.subr.mxu0 0.0
    %801 = vmatpush1.msra.mxu0 %v481
    %802 = vmatprep.subr.mxu0 0.0
    %803 = vmatpush1.msra.mxu0 %v482
    %804 = vmatprep.subr.mxu0 0.0
    %805 = vmatpush1.msra.mxu0 %v491
    %806 = vmatprep.subr.mxu0 0.0
    %807 = vmatpush1.msra.mxu0 %v492
    %808 = vmatprep.subr.mxu0 0.0
    %809 = vmatpush1.msra.mxu0 %v493
    %810 = vmatprep.subr.mxu0 0.0
    %811 = vmatpush1.msra.mxu0 %v502
    %812 = vmatprep.subr.mxu0 0.0
    %813 = vmatpush1.msra.mxu0 %v503
    %814 = vmatprep.subr.mxu0 0.0
    %815 = vmatpush1.msra.mxu0 %v504
    %816 = vmatprep.subr.mxu0 0.0
    %817 = vmatpush1.msra.mxu0 %v510
    %818 = vmatprep.subr.mxu0 0.0
    %819 = vmatpush1.msra.mxu0 %v511
    %820 = vmatprep.subr.mxu0 0.0
    %821 = vmatpush1.msra.mxu0 %v512
    %822 = vmatprep.subr.mxu0 0.0
    %823 = vmatpush1.msra.mxu0 %v521
    %824 = vmatprep.subr.mxu0 0.0
    %825 = vmatpush1.msra.mxu0 %v522
    %826 = vmatprep.subr.mxu0 0.0
    %827 = vmatpush1.msra.mxu0 %v523
    %828 = vmatprep.subr.mxu0 0.0
    %829 = vmatpush1.msra.mxu0 %v532
    %830 = vmatprep.subr.mxu0 0.0
    %831 = vmatpush1.msra.mxu0 %v533
    %832 = vmatprep.subr.mxu0 0.0
    %833 = vmatpush1.msra.mxu0 %v534
    %834 = vmatprep.subr.mxu0 0.0
    %835 = vmatpush1.msra.mxu0 %v556
    %836 = vmatprep.subr.mxu0 0.0
    %837 = vmatpush1.msra.mxu0 %v557
    %838 = vmatprep.subr.mxu0 0.0
    %839 = vmatpush1.msra.mxu0 %v558
    %840 = vmatprep.subr.mxu0 0.0
    %841 = vmatpush1.msra.mxu0 %v580
    %842 = vmatprep.mubr.f32.mxu0 %v658
    %843 = vmatmul.mubr.f32.gmra.mrb[0].mxu0 %v657
    %v844 = vpop.f32.mrb[0].mxu0
    %v845 = vadd.f32 %v765, %v844
    %v846 = vpop.f32.mrb[0].mxu0
    %847 = vmatprep.mubr.f32.mxu0 %v663
    %848 = vmatmul.mubr.f32.gmra.mrb[0].mxu0 %v662
    %v849 = vpop.f32.mrb[0].mxu0
    %v850 = vadd.f32 %v770, %v849
    %v851 = vpop.f32.mrb[0].mxu0
    %852 = vmatprep.mubr.f32.mxu0 %v668
    %853 = vmatmul.mubr.f32.gmra.mrb[0].mxu0 %v667
    %v854 = vpop.f32.mrb[0].mxu0
    %v855 = vadd.f32 %v775, %v854
    %v856 = vpop.f32.mrb[0].mxu0
    %857 = vdwg.mxu0
    %858 = vmatprep.subr.mxu0 0.0
    %859 = vmatpush1.msra.mxu0 %v581
    %860 = vmatprep.subr.mxu0 0.0
    %861 = vmatpush1.msra.mxu0 %v582
    %862 = vmatprep.subr.mxu0 0.0
    %863 = vmatpush1.msra.mxu0 %v604
    %864 = vmatprep.subr.mxu0 0.0
    %865 = vmatpush1.msra.mxu0 %v605
    %866 = vmatprep.subr.mxu0 0.0
    %867 = vmatpush1.msra.mxu0 %v606
    %868 = vmatprep.subr.mxu0 0.0
    %869 = vmatpush1.msra.mxu0 %v628
    %870 = vmatprep.subr.mxu0 0.0
    %871 = vmatpush1.msra.mxu0 %v629
    %872 = vmatprep.subr.mxu0 0.0
    %873 = vmatpush1.msra.mxu0 %v630
    %874 = vmatprep.subr.mxu0 0.0
    %875 = vmatpush1.msra.mxu0 %v652
    %876 = vmatprep.subr.mxu0 0.0
    %877 = vmatpush1.msra.mxu0 %v653
    %878 = vmatprep.subr.mxu0 0.0
    %879 = vmatpush1.msra.mxu0 %v654
    %880 = vmatprep.subr.mxu0 0.0
    %881 = vmatpush1.msra.mxu0 0.0
    %882 = vmatprep.subr.mxu0 0.0
    %883 = vmatpush1.msra.mxu0 0.0
    %884 = vmatprep.subr.mxu0 0.0
    %885 = vmatpush1.msra.mxu0 0.0
    %886 = vmatprep.subr.mxu0 0.0
    %887 = vmatpush1.msra.mxu0 0.0
    %888 = vmatprep.subr.mxu0 0.0
    %889 = vmatpush1.msra.mxu0 0.0
    %890 = vmatprep.subr.mxu0 0.0
    %891 = vmatpush1.msra.mxu0 0.0
    %892 = vmatprep.subr.mxu0 0.0
    %893 = vmatpush1.msra.mxu0 0.0
    %894 = vmatprep.subr.mxu0 0.0
    %895 = vmatpush1.msra.mxu0 0.0
    %896 = vmatprep.subr.mxu0 0.0
    %897 = vmatpush1.msra.mxu0 0.0
    %898 = vmatprep.subr.mxu0 0.0
    %899 = vmatpush1.msra.mxu0 0.0
    %900 = vmatprep.subr.mxu0 0.0
    %901 = vmatpush1.msra.mxu0 0.0
    %902 = vmatprep.subr.mxu0 0.0
    %903 = vmatpush1.msra.mxu0 0.0
    %904 = vmatprep.subr.mxu0 0.0
    %905 = vmatpush1.msra.mxu0 0.0
    %906 = vmatprep.subr.mxu0 0.0
    %907 = vmatpush1.msra.mxu0 0.0
    %908 = vmatprep.subr.mxu0 0.0
    %909 = vmatpush1.msra.mxu0 0.0
    %910 = vmatprep.subr.mxu0 0.0
    %911 = vmatpush1.msra.mxu0 0.0
    %912 = vmatprep.subr.mxu0 0.0
    %913 = vmatpush1.msra.mxu0 0.0
    %914 = vmatprep.subr.mxu0 0.0
    %915 = vmatpush1.msra.mxu0 0.0
    %916 = vmatprep.subr.mxu0 0.0
    %917 = vmatpush1.msra.mxu0 0.0
    %918 = vmatprep.subr.mxu0 0.0
    %919 = vmatpush1.msra.mxu0 0.0
    %920 = vmatprep.subr.mxu0 0.0
    %921 = vmatpush1.msra.mxu0 0.0
    %922 = vmatprep.mubr.f32.mxu0 0.0
    %923 = vmatmul.mubr.f32.gmra.mrb[0].mxu0 %v690
    %v924 = vpop.f32.mrb[0].mxu0
    %v925 = vadd.f32 %v845, %v924
    %v926 = vpop.f32.mrb[0].mxu0
    %927 = vmatprep.mubr.f32.mxu0 0.0
    %928 = vmatmul.mubr.f32.gmra.mrb[0].mxu0 %v693
    %v929 = vpop.f32.mrb[0].mxu0
    %v930 = vadd.f32 %v850, %v929
    %v931 = vpop.f32.mrb[0].mxu0
    %932 = vmatprep.mubr.f32.mxu0 0.0
    %933 = vmatmul.mubr.f32.gmra.mrb[0].mxu0 %v696
    %v934 = vpop.f32.mrb[0].mxu0
    %v935 = vadd.f32 %v855, %v934
    %v936 = vpop.f32.mrb[0].mxu0
    %937 = vdwg.mxu0
    %v938 = vmax.f32 %v925, 0.0
    %v939 = vmax.f32 %v930, 0.0
    %v940 = vmax.f32 %v935, 0.0
    %941 = vrot.lane.b32.xlu0 %v938, 18
    %v942 = vpop.permute.xlu0 %941
    %943 = vrot.lane.b32.xlu0 %v939, 18
    %v944 = vpop.permute.xlu0 %943
    %945 = vrot.lane.b32.xlu0 %v940, 18
    %v946 = vpop.permute.xlu0 %945
    %v947 = vld [vmem:[%s6] sm:$0x1]
    %v948 = vlaneseq
    %v949 = vshrl.u32 %v948, 7
    %v950 = vsub.s32 0, %v949
    %v951 = vrot.slane %v947, %v950
    %v952 = vmul.f32 %v942, %v951
    %v953 = vmul.f32 %v944, %v951
    %v954 = vmul.f32 %v946, %v951
    %955 = vrot.lane.b32.xlu0 %v938, 17
    %v956 = vpop.permute.xlu0 %955
    %957 = vrot.lane.b32.xlu0 %v939, 17
    %v958 = vpop.permute.xlu0 %957
    %959 = vrot.lane.b32.xlu0 %v940, 17
    %v960 = vpop.permute.xlu0 %959
    %v961 = vld [vmem:[%s6 + $0x1] sm:$0x1]
    %v962 = vlaneseq
    %v963 = vshrl.u32 %v962, 7
    %v964 = vsub.s32 0, %v963
    %v965 = vrot.slane %v961, %v964
    %v966 = vmul.f32 %v956, %v965
    %v967 = vmul.f32 %v958, %v965
    %v968 = vmul.f32 %v960, %v965
    %969 = vrot.lane.b32.xlu0 %v938, 16
    %v970 = vpop.permute.xlu0 %969
    %971 = vrot.lane.b32.xlu0 %v939, 16
    %v972 = vpop.permute.xlu0 %971
    %973 = vrot.lane.b32.xlu0 %v940, 16
    %v974 = vpop.permute.xlu0 %973
    %v975 = vld [vmem:[%s6 + $0x2] sm:$0x1]
    %v976 = vlaneseq
    %v977 = vshrl.u32 %v976, 7
    %v978 = vsub.s32 0, %v977
    %v979 = vrot.slane %v975, %v978
    %v980 = vmul.f32 %v970, %v979
    %v981 = vmul.f32 %v972, %v979
    %v982 = vmul.f32 %v974, %v979
    %983 = vrot.lane.b32.xlu0 %v938, 15
    %v984 = vpop.permute.xlu0 %983
    %985 = vrot.lane.b32.xlu0 %v939, 15
    %v986 = vpop.permute.xlu0 %985
    %987 = vrot.lane.b32.xlu0 %v940, 15
    %v988 = vpop.permute.xlu0 %987
    %v989 = vld [vmem:[%s6 + $0x3] sm:$0x1]
    %v990 = vlaneseq
    %v991 = vshrl.u32 %v990, 7
    %v992 = vsub.s32 0, %v991
    %v993 = vrot.slane %v989, %v992
    %v994 = vmul.f32 %v984, %v993
    %v995 = vmul.f32 %v986, %v993
    %v996 = vmul.f32 %v988, %v993
    %997 = vrot.lane.b32.xlu0 %v938, 14
    %v998 = vpop.permute.xlu0 %997
    %999 = vrot.lane.b32.xlu0 %v939, 14
    %v1000 = vpop.permute.xlu0 %999
    %1001 = vrot.lane.b32.xlu0 %v940, 14
    %v1002 = vpop.permute.xlu0 %1001
    %v1003 = vld [vmem:[%s6 + $0x4] sm:$0x1]
    %v1004 = vlaneseq
    %v1005 = vshrl.u32 %v1004, 7
    %v1006 = vsub.s32 0, %v1005
    %v1007 = vrot.slane %v1003, %v1006
    %v1008 = vmul.f32 %v998, %v1007
    %v1009 = vmul.f32 %v1000, %v1007
    %v1010 = vmul.f32 %v1002, %v1007
    %1011 = vrot.lane.b32.xlu0 %v938, 10
    %v1012 = vpop.permute.xlu0 %1011
    %1013 = vrot.lane.b32.xlu0 %v939, 10
    %v1014 = vpop.permute.xlu0 %1013
    %1015 = vrot.lane.b32.xlu0 %v940, 10
    %v1016 = vpop.permute.xlu0 %1015
    %v1017 = vld [vmem:[%s6 + $0x5] sm:$0x1]
    %v1018 = vlaneseq
    %v1019 = vshrl.u32 %v1018, 7
    %v1020 = vsub.s32 0, %v1019
    %v1021 = vrot.slane %v1017, %v1020
    %v1022 = vmul.f32 %v1012, %v1021
    %v1023 = vmul.f32 %v1014, %v1021
    %v1024 = vmul.f32 %v1016, %v1021
    %1025 = vrot.lane.b32.xlu0 %v938, 9
    %v1026 = vpop.permute.xlu0 %1025
    %1027 = vrot.lane.b32.xlu0 %v939, 9
    %v1028 = vpop.permute.xlu0 %1027
    %1029 = vrot.lane.b32.xlu0 %v940, 9
    %v1030 = vpop.permute.xlu0 %1029
    %v1031 = vld [vmem:[%s6 + $0x6] sm:$0x1]
    %v1032 = vlaneseq
    %v1033 = vshrl.u32 %v1032, 7
    %v1034 = vsub.s32 0, %v1033
    %v1035 = vrot.slane %v1031, %v1034
    %v1036 = vmul.f32 %v1026, %v1035
    %v1037 = vmul.f32 %v1028, %v1035
    %v1038 = vmul.f32 %v1030, %v1035
    %1039 = vrot.lane.b32.xlu0 %v938, 8
    %v1040 = vpop.permute.xlu0 %1039
    %1041 = vrot.lane.b32.xlu0 %v939, 8
    %v1042 = vpop.permute.xlu0 %1041
    %1043 = vrot.lane.b32.xlu0 %v940, 8
    %v1044 = vpop.permute.xlu0 %1043
    %v1045 = vld [vmem:[%s6 + $0x7] sm:$0x1]
    %v1046 = vlaneseq
    %v1047 = vshrl.u32 %v1046, 7
    %v1048 = vsub.s32 0, %v1047
    %v1049 = vrot.slane %v1045, %v1048
    %v1050 = vmul.f32 %v1040, %v1049
    %v1051 = vmul.f32 %v1042, %v1049
    %v1052 = vmul.f32 %v1044, %v1049
    %1053 = vrot.lane.b32.xlu0 %v938, 7
    %v1054 = vpop.permute.xlu0 %1053
    %1055 = vrot.lane.b32.xlu0 %v939, 7
    %v1056 = vpop.permute.xlu0 %1055
    %1057 = vrot.lane.b32.xlu0 %v940, 7
    %v1058 = vpop.permute.xlu0 %1057
    %v1059 = vld [vmem:[%s6 + $0x8] sm:$0x1]
    %v1060 = vlaneseq
    %v1061 = vshrl.u32 %v1060, 7
    %v1062 = vsub.s32 0, %v1061
    %v1063 = vrot.slane %v1059, %v1062
    %v1064 = vmul.f32 %v1054, %v1063
    %v1065 = vmul.f32 %v1056, %v1063
    %v1066 = vmul.f32 %v1058, %v1063
    %1067 = vrot.lane.b32.xlu0 %v938, 6
    %v1068 = vpop.permute.xlu0 %1067
    %1069 = vrot.lane.b32.xlu0 %v939, 6
    %v1070 = vpop.permute.xlu0 %1069
    %1071 = vrot.lane.b32.xlu0 %v940, 6
    %v1072 = vpop.permute.xlu0 %1071
    %v1073 = vld [vmem:[%s6 + $0x9] sm:$0x1]
    %v1074 = vlaneseq
    %v1075 = vshrl.u32 %v1074, 7
    %v1076 = vsub.s32 0, %v1075
    %v1077 = vrot.slane %v1073, %v1076
    %v1078 = vmul.f32 %v1068, %v1077
    %v1079 = vmul.f32 %v1070, %v1077
    %v1080 = vmul.f32 %v1072, %v1077
    %1081 = vrot.lane.b32.xlu0 %v938, 2
    %v1082 = vpop.permute.xlu0 %1081
    %1083 = vrot.lane.b32.xlu0 %v939, 2
    %v1084 = vpop.permute.xlu0 %1083
    %1085 = vrot.lane.b32.xlu0 %v940, 2
    %v1086 = vpop.permute.xlu0 %1085
    %v1087 = vld [vmem:[%s6 + $0xa] sm:$0x1]
    %v1088 = vlaneseq
    %v1089 = vshrl.u32 %v1088, 7
    %v1090 = vsub.s32 0, %v1089
    %v1091 = vrot.slane %v1087, %v1090
    %v1092 = vmul.f32 %v1082, %v1091
    %v1093 = vmul.f32 %v1084, %v1091
    %v1094 = vmul.f32 %v1086, %v1091
    %1095 = vrot.lane.b32.xlu0 %v938, 1
    %v1096 = vpop.permute.xlu0 %1095
    %1097 = vrot.lane.b32.xlu0 %v939, 1
    %v1098 = vpop.permute.xlu0 %1097
    %1099 = vrot.lane.b32.xlu0 %v940, 1
    %v1100 = vpop.permute.xlu0 %1099
    %v1101 = vld [vmem:[%s6 + $0xb] sm:$0x1]
    %v1102 = vlaneseq
    %v1103 = vshrl.u32 %v1102, 7
    %v1104 = vsub.s32 0, %v1103
    %v1105 = vrot.slane %v1101, %v1104
    %v1106 = vmul.f32 %v1096, %v1105
    %v1107 = vmul.f32 %v1098, %v1105
    %v1108 = vmul.f32 %v1100, %v1105
    %v1109 = vld [vmem:[%s6 + $0xc] sm:$0x1]
    %v1110 = vlaneseq
    %v1111 = vshrl.u32 %v1110, 7
    %v1112 = vsub.s32 0, %v1111
    %v1113 = vrot.slane %v1109, %v1112
    %v1114 = vmul.f32 %v938, %v1113
    %v1115 = vmul.f32 %v939, %v1113
    %v1116 = vmul.f32 %v940, %v1113
    %1117 = vrot.lane.b32.xlu0 %v938, 127
    %v1118 = vpop.permute.xlu0 %1117
    %1119 = vrot.lane.b32.xlu0 %v939, 127
    %v1120 = vpop.permute.xlu0 %1119
    %1121 = vrot.lane.b32.xlu0 %v940, 127
    %v1122 = vpop.permute.xlu0 %1121
    %v1123 = vld [vmem:[%s6 + $0xd] sm:$0x1]
    %v1124 = vlaneseq
    %v1125 = vshrl.u32 %v1124, 7
    %v1126 = vsub.s32 0, %v1125
    %v1127 = vrot.slane %v1123, %v1126
    %v1128 = vmul.f32 %v1118, %v1127
    %v1129 = vmul.f32 %v1120, %v1127
    %v1130 = vmul.f32 %v1122, %v1127
    %1131 = vrot.lane.b32.xlu0 %v938, 126
    %v1132 = vpop.permute.xlu0 %1131
    %1133 = vrot.lane.b32.xlu0 %v939, 126
    %v1134 = vpop.permute.xlu0 %1133
    %1135 = vrot.lane.b32.xlu0 %v940, 126
    %v1136 = vpop.permute.xlu0 %1135
    %v1137 = vld [vmem:[%s6 + $0xe] sm:$0x1]
    %v1138 = vlaneseq
    %v1139 = vshrl.u32 %v1138, 7
    %v1140 = vsub.s32 0, %v1139
    %v1141 = vrot.slane %v1137, %v1140
    %v1142 = vmul.f32 %v1132, %v1141
    %v1143 = vmul.f32 %v1134, %v1141
    %v1144 = vmul.f32 %v1136, %v1141
    %1145 = vrot.lane.b32.xlu0 %v938, 122
    %v1146 = vpop.permute.xlu0 %1145
    %1147 = vrot.lane.b32.xlu0 %v939, 122
    %v1148 = vpop.permute.xlu0 %1147
    %1149 = vrot.lane.b32.xlu0 %v940, 122
    %v1150 = vpop.permute.xlu0 %1149
    %v1151 = vld [vmem:[%s6 + $0xf] sm:$0x1]
    %v1152 = vlaneseq
    %v1153 = vshrl.u32 %v1152, 7
    %v1154 = vsub.s32 0, %v1153
    %v1155 = vrot.slane %v1151, %v1154
    %v1156 = vmul.f32 %v1146, %v1155
    %v1157 = vmul.f32 %v1148, %v1155
    %v1158 = vmul.f32 %v1150, %v1155
    %1159 = vrot.lane.b32.xlu0 %v938, 121
    %v1160 = vpop.permute.xlu0 %1159
    %1161 = vrot.lane.b32.xlu0 %v939, 121
    %v1162 = vpop.permute.xlu0 %1161
    %1163 = vrot.lane.b32.xlu0 %v940, 121
    %v1164 = vpop.permute.xlu0 %1163
    %v1165 = vld [vmem:[%s6 + $0x10] sm:$0x1]
    %v1166 = vlaneseq
    %v1167 = vshrl.u32 %v1166, 7
    %v1168 = vsub.s32 0, %v1167
    %v1169 = vrot.slane %v1165, %v1168
    %v1170 = vmul.f32 %v1160, %v1169
    %v1171 = vmul.f32 %v1162, %v1169
    %v1172 = vmul.f32 %v1164, %v1169
    %1173 = vrot.lane.b32.xlu0 %v938, 120
    %v1174 = vpop.permute.xlu0 %1173
    %1175 = vrot.lane.b32.xlu0 %v939, 120
    %v1176 = vpop.permute.xlu0 %1175
    %1177 = vrot.lane.b32.xlu0 %v940, 120
    %v1178 = vpop.permute.xlu0 %1177
    %v1179 = vld [vmem:[%s6 + $0x11] sm:$0x1]
    %v1180 = vlaneseq
    %v1181 = vshrl.u32 %v1180, 7
    %v1182 = vsub.s32 0, %v1181
    %v1183 = vrot.slane %v1179, %v1182
    %v1184 = vmul.f32 %v1174, %v1183
    %v1185 = vmul.f32 %v1176, %v1183
    %v1186 = vmul.f32 %v1178, %v1183
    %1187 = vrot.lane.b32.xlu0 %v938, 119
    %v1188 = vpop.permute.xlu0 %1187
    %1189 = vrot.lane.b32.xlu0 %v939, 119
    %v1190 = vpop.permute.xlu0 %1189
    %1191 = vrot.lane.b32.xlu0 %v940, 119
    %v1192 = vpop.permute.xlu0 %1191
    %v1193 = vld [vmem:[%s6 + $0x12] sm:$0x1]
    %v1194 = vlaneseq
    %v1195 = vshrl.u32 %v1194, 7
    %v1196 = vsub.s32 0, %v1195
    %v1197 = vrot.slane %v1193, %v1196
    %v1198 = vmul.f32 %v1188, %v1197
    %v1199 = vmul.f32 %v1190, %v1197
    %v1200 = vmul.f32 %v1192, %v1197
    %1201 = vrot.lane.b32.xlu0 %v938, 118
    %v1202 = vpop.permute.xlu0 %1201
    %1203 = vrot.lane.b32.xlu0 %v939, 118
    %v1204 = vpop.permute.xlu0 %1203
    %1205 = vrot.lane.b32.xlu0 %v940, 118
    %v1206 = vpop.permute.xlu0 %1205
    %v1207 = vld [vmem:[%s6 + $0x13] sm:$0x1]
    %v1208 = vlaneseq
    %v1209 = vshrl.u32 %v1208, 7
    %v1210 = vsub.s32 0, %v1209
    %v1211 = vrot.slane %v1207, %v1210
    %v1212 = vmul.f32 %v1202, %v1211
    %v1213 = vmul.f32 %v1204, %v1211
    %v1214 = vmul.f32 %v1206, %v1211
    %1215 = vrot.lane.b32.xlu0 %v938, 114
    %v1216 = vpop.permute.xlu0 %1215
    %1217 = vrot.lane.b32.xlu0 %v939, 114
    %v1218 = vpop.permute.xlu0 %1217
    %1219 = vrot.lane.b32.xlu0 %v940, 114
    %v1220 = vpop.permute.xlu0 %1219
    %v1221 = vld [vmem:[%s6 + $0x14] sm:$0x1]
    %v1222 = vlaneseq
    %v1223 = vshrl.u32 %v1222, 7
    %v1224 = vsub.s32 0, %v1223
    %v1225 = vrot.slane %v1221, %v1224
    %v1226 = vmul.f32 %v1216, %v1225
    %v1227 = vmul.f32 %v1218, %v1225
    %v1228 = vmul.f32 %v1220, %v1225
    %1229 = vrot.lane.b32.xlu0 %v938, 113
    %v1230 = vpop.permute.xlu0 %1229
    %1231 = vrot.lane.b32.xlu0 %v939, 113
    %v1232 = vpop.permute.xlu0 %1231
    %1233 = vrot.lane.b32.xlu0 %v940, 113
    %v1234 = vpop.permute.xlu0 %1233
    %v1235 = vld [vmem:[%s6 + $0x15] sm:$0x1]
    %v1236 = vlaneseq
    %v1237 = vshrl.u32 %v1236, 7
    %v1238 = vsub.s32 0, %v1237
    %v1239 = vrot.slane %v1235, %v1238
    %v1240 = vmul.f32 %v1230, %v1239
    %v1241 = vmul.f32 %v1232, %v1239
    %v1242 = vmul.f32 %v1234, %v1239
    %1243 = vrot.lane.b32.xlu0 %v938, 112
    %v1244 = vpop.permute.xlu0 %1243
    %1245 = vrot.lane.b32.xlu0 %v939, 112
    %v1246 = vpop.permute.xlu0 %1245
    %1247 = vrot.lane.b32.xlu0 %v940, 112
    %v1248 = vpop.permute.xlu0 %1247
    %v1249 = vld [vmem:[%s6 + $0x16] sm:$0x1]
    %v1250 = vlaneseq
    %v1251 = vshrl.u32 %v1250, 7
    %v1252 = vsub.s32 0, %v1251
    %v1253 = vrot.slane %v1249, %v1252
    %v1254 = vmul.f32 %v1244, %v1253
    %v1255 = vmul.f32 %v1246, %v1253
    %v1256 = vmul.f32 %v1248, %v1253
    %1257 = vrot.lane.b32.xlu0 %v938, 111
    %v1258 = vpop.permute.xlu0 %1257
    %1259 = vrot.lane.b32.xlu0 %v939, 111
    %v1260 = vpop.permute.xlu0 %1259
    %1261 = vrot.lane.b32.xlu0 %v940, 111
    %v1262 = vpop.permute.xlu0 %1261
    %v1263 = vld [vmem:[%s6 + $0x17] sm:$0x1]
    %v1264 = vlaneseq
    %v1265 = vshrl.u32 %v1264, 7
    %v1266 = vsub.s32 0, %v1265
    %v1267 = vrot.slane %v1263, %v1266
    %v1268 = vmul.f32 %v1258, %v1267
    %v1269 = vmul.f32 %v1260, %v1267
    %v1270 = vmul.f32 %v1262, %v1267
    %1271 = vrot.lane.b32.xlu0 %v938, 110
    %v1272 = vpop.permute.xlu0 %1271
    %1273 = vrot.lane.b32.xlu0 %v939, 110
    %v1274 = vpop.permute.xlu0 %1273
    %1275 = vrot.lane.b32.xlu0 %v940, 110
    %v1276 = vpop.permute.xlu0 %1275
    %v1277 = vld [vmem:[%s6 + $0x18] sm:$0x1]
    %v1278 = vlaneseq
    %v1279 = vshrl.u32 %v1278, 7
    %v1280 = vsub.s32 0, %v1279
    %v1281 = vrot.slane %v1277, %v1280
    %v1282 = vmul.f32 %v1272, %v1281
    %v1283 = vmul.f32 %v1274, %v1281
    %v1284 = vmul.f32 %v1276, %v1281
    %v1285 = vld [vmem:[%s7] sm:$0xff]
    %v1286 = vld [vmem:[%s7 + $0x8] sm:$0xff]
    %v1287 = vld [vmem:[%s7 + $0x10] sm:$0xff]
    %v1288 = vld [vmem:[%s7 + $0x18] sm:$0xff]
    %v1289 = vld [vmem:[%s7 + $0x20] sm:$0xff]
    %v1290 = vld [vmem:[%s7 + $0x28] sm:$0xff]
    %v1291 = vld [vmem:[%s7 + $0x30] sm:$0xff]
    %v1292 = vld [vmem:[%s7 + $0x38] sm:$0xff]
    %v1293 = vld [vmem:[%s7 + $0x40] sm:$0xff]
    %v1294 = vld [vmem:[%s7 + $0x48] sm:$0xff]
    %v1295 = vld [vmem:[%s7 + $0x50] sm:$0xff]
    %v1296 = vld [vmem:[%s7 + $0x58] sm:$0xff]
    %v1297 = vld [vmem:[%s7 + $0x60] sm:$0xff]
    %v1298 = vld [vmem:[%s7 + $0x68] sm:$0xff]
    %v1299 = vld [vmem:[%s7 + $0x70] sm:$0xff]
    %v1300 = vld [vmem:[%s8] sm:$0xff]
    %v1301 = vld [vmem:[%s8 + $0x8] sm:$0xff]
    %v1302 = vld [vmem:[%s8 + $0x10] sm:$0xff]
    %1304 = vset.pattern.permute.xlu0 0
    %1305 = vperm.xlu0 %1304, %v1300
    %v1306 = vpop.permute.xlu0 %1305
    %1309 = vset.pattern.permute.xlu0 0
    %1310 = vperm.xlu0 %1309, %v1301
    %v1311 = vpop.permute.xlu0 %1310
    %1314 = vset.pattern.permute.xlu0 0
    %1315 = vperm.xlu0 %1314, %v1302
    %v1316 = vpop.permute.xlu0 %1315
    %v1319 = vsel %vm688, %v1289, 0
    %v1322 = vsel %vm688, %v1294, 0
    %v1325 = vsel %vm688, %v1299, 0
    %1327 = vmatprep.subr.mxu0 0.0
    %1328 = vmatpush1.msra.mxu0 %v952
    %1329 = vmatprep.subr.mxu0 0.0
    %1330 = vmatpush1.msra.mxu0 %v953
    %1331 = vmatprep.subr.mxu0 0.0
    %1332 = vmatpush1.msra.mxu0 %v954
    %1333 = vmatprep.subr.mxu0 0.0
    %1334 = vmatpush1.msra.mxu0 %v966
    %1335 = vmatprep.subr.mxu0 0.0
    %1336 = vmatpush1.msra.mxu0 %v967
    %1337 = vmatprep.subr.mxu0 0.0
    %1338 = vmatpush1.msra.mxu0 %v968
    %1339 = vmatprep.subr.mxu0 0.0
    %1340 = vmatpush1.msra.mxu0 %v980
    %1341 = vmatprep.subr.mxu0 0.0
    %1342 = vmatpush1.msra.mxu0 %v981
    %1343 = vmatprep.subr.mxu0 0.0
    %1344 = vmatpush1.msra.mxu0 %v982
    %1345 = vmatprep.subr.mxu0 0.0
    %1346 = vmatpush1.msra.mxu0 %v994
    %1347 = vmatprep.subr.mxu0 0.0
    %1348 = vmatpush1.msra.mxu0 %v995
    %1349 = vmatprep.subr.mxu0 0.0
    %1350 = vmatpush1.msra.mxu0 %v996
    %1351 = vmatprep.subr.mxu0 0.0
    %1352 = vmatpush1.msra.mxu0 %v1008
    %1353 = vmatprep.subr.mxu0 0.0
    %1354 = vmatpush1.msra.mxu0 %v1009
    %1355 = vmatprep.subr.mxu0 0.0
    %1356 = vmatpush1.msra.mxu0 %v1010
    %1357 = vmatprep.subr.mxu0 0.0
    %1358 = vmatpush1.msra.mxu0 %v1022
    %1359 = vmatprep.subr.mxu0 0.0
    %1360 = vmatpush1.msra.mxu0 %v1023
    %1361 = vmatprep.subr.mxu0 0.0
    %1362 = vmatpush1.msra.mxu0 %v1024
    %1363 = vmatprep.subr.mxu0 0.0
    %1364 = vmatpush1.msra.mxu0 %v1036
    %1365 = vmatprep.subr.mxu0 0.0
    %1366 = vmatpush1.msra.mxu0 %v1037
    %1367 = vmatprep.subr.mxu0 0.0
    %1368 = vmatpush1.msra.mxu0 %v1038
    %1369 = vmatprep.subr.mxu0 0.0
    %1370 = vmatpush1.msra.mxu0 %v1050
    %1371 = vmatprep.subr.mxu0 0.0
    %1372 = vmatpush1.msra.mxu0 %v1051
    %1373 = vmatprep.subr.mxu0 0.0
    %1374 = vmatpush1.msra.mxu0 %v1052
    %1375 = vmatprep.subr.mxu0 0.0
    %1376 = vmatpush1.msra.mxu0 %v1064
    %1377 = vmatprep.subr.mxu0 0.0
    %1378 = vmatpush1.msra.mxu0 %v1065
    %1379 = vmatprep.subr.mxu0 0.0
    %1380 = vmatpush1.msra.mxu0 %v1066
    %1381 = vmatprep.subr.mxu0 0.0
    %1382 = vmatpush1.msra.mxu0 %v1078
    %1383 = vmatprep.subr.mxu0 0.0
    %1384 = vmatpush1.msra.mxu0 %v1079
    %1385 = vmatprep.subr.mxu0 0.0
    %1386 = vmatpush1.msra.mxu0 %v1080
    %1387 = vmatprep.subr.mxu0 0.0
    %1388 = vmatpush1.msra.mxu0 %v1092
    %1389 = vmatprep.subr.mxu0 0.0
    %1390 = vmatpush1.msra.mxu0 %v1093
    %1391 = vmatprep.mubr.f32.mxu0 %v1286
    %1392 = vmatmul.mubr.f32.gmra.mrb[0].mxu0 %v1285
    %v1393 = vpop.f32.mrb[0].mxu0
    %v1394 = vadd.f32 %v1306, %v1393
    %v1395 = vpop.f32.mrb[0].mxu0
    %1396 = vmatprep.mubr.f32.mxu0 %v1291
    %1397 = vmatmul.mubr.f32.gmra.mrb[0].mxu0 %v1290
    %v1398 = vpop.f32.mrb[0].mxu0
    %v1399 = vadd.f32 %v1311, %v1398
    %v1400 = vpop.f32.mrb[0].mxu0
    %1401 = vmatprep.mubr.f32.mxu0 %v1296
    %1402 = vmatmul.mubr.f32.gmra.mrb[0].mxu0 %v1295
    %v1403 = vpop.f32.mrb[0].mxu0
    %v1404 = vadd.f32 %v1316, %v1403
    %v1405 = vpop.f32.mrb[0].mxu0
    %1406 = vdwg.mxu0
    %1407 = vmatprep.subr.mxu0 0.0
    %1408 = vmatpush1.msra.mxu0 %v1094
    %1409 = vmatprep.subr.mxu0 0.0
    %1410 = vmatpush1.msra.mxu0 %v1106
    %1411 = vmatprep.subr.mxu0 0.0
    %1412 = vmatpush1.msra.mxu0 %v1107
    %1413 = vmatprep.subr.mxu0 0.0
    %1414 = vmatpush1.msra.mxu0 %v1108
    %1415 = vmatprep.subr.mxu0 0.0
    %1416 = vmatpush1.msra.mxu0 %v1114
    %1417 = vmatprep.subr.mxu0 0.0
    %1418 = vmatpush1.msra.mxu0 %v1115
    %1419 = vmatprep.subr.mxu0 0.0
    %1420 = vmatpush1.msra.mxu0 %v1116
    %1421 = vmatprep.subr.mxu0 0.0
    %1422 = vmatpush1.msra.mxu0 %v1128
    %1423 = vmatprep.subr.mxu0 0.0
    %1424 = vmatpush1.msra.mxu0 %v1129
    %1425 = vmatprep.subr.mxu0 0.0
    %1426 = vmatpush1.msra.mxu0 %v1130
    %1427 = vmatprep.subr.mxu0 0.0
    %1428 = vmatpush1.msra.mxu0 %v1142
    %1429 = vmatprep.subr.mxu0 0.0
    %1430 = vmatpush1.msra.mxu0 %v1143
    %1431 = vmatprep.subr.mxu0 0.0
    %1432 = vmatpush1.msra.mxu0 %v1144
    %1433 = vmatprep.subr.mxu0 0.0
    %1434 = vmatpush1.msra.mxu0 %v1156
    %1435 = vmatprep.subr.mxu0 0.0
    %1436 = vmatpush1.msra.mxu0 %v1157
    %1437 = vmatprep.subr.mxu0 0.0
    %1438 = vmatpush1.msra.mxu0 %v1158
    %1439 = vmatprep.subr.mxu0 0.0
    %1440 = vmatpush1.msra.mxu0 %v1170
    %1441 = vmatprep.subr.mxu0 0.0
    %1442 = vmatpush1.msra.mxu0 %v1171
    %1443 = vmatprep.subr.mxu0 0.0
    %1444 = vmatpush1.msra.mxu0 %v1172
    %1445 = vmatprep.subr.mxu0 0.0
    %1446 = vmatpush1.msra.mxu0 %v1184
    %1447 = vmatprep.subr.mxu0 0.0
    %1448 = vmatpush1.msra.mxu0 %v1185
    %1449 = vmatprep.subr.mxu0 0.0
    %1450 = vmatpush1.msra.mxu0 %v1186
    %1451 = vmatprep.subr.mxu0 0.0
    %1452 = vmatpush1.msra.mxu0 %v1198
    %1453 = vmatprep.subr.mxu0 0.0
    %1454 = vmatpush1.msra.mxu0 %v1199
    %1455 = vmatprep.subr.mxu0 0.0
    %1456 = vmatpush1.msra.mxu0 %v1200
    %1457 = vmatprep.subr.mxu0 0.0
    %1458 = vmatpush1.msra.mxu0 %v1212
    %1459 = vmatprep.subr.mxu0 0.0
    %1460 = vmatpush1.msra.mxu0 %v1213
    %1461 = vmatprep.subr.mxu0 0.0
    %1462 = vmatpush1.msra.mxu0 %v1214
    %1463 = vmatprep.subr.mxu0 0.0
    %1464 = vmatpush1.msra.mxu0 %v1226
    %1465 = vmatprep.subr.mxu0 0.0
    %1466 = vmatpush1.msra.mxu0 %v1227
    %1467 = vmatprep.subr.mxu0 0.0
    %1468 = vmatpush1.msra.mxu0 %v1228
    %1469 = vmatprep.subr.mxu0 0.0
    %1470 = vmatpush1.msra.mxu0 %v1240
    %1471 = vmatprep.mubr.f32.mxu0 %v1288
    %1472 = vmatmul.mubr.f32.gmra.mrb[0].mxu0 %v1287
    %v1473 = vpop.f32.mrb[0].mxu0
    %v1474 = vadd.f32 %v1394, %v1473
    %v1475 = vpop.f32.mrb[0].mxu0
    %1476 = vmatprep.mubr.f32.mxu0 %v1293
    %1477 = vmatmul.mubr.f32.gmra.mrb[0].mxu0 %v1292
    %v1478 = vpop.f32.mrb[0].mxu0
    %v1479 = vadd.f32 %v1399, %v1478
    %v1480 = vpop.f32.mrb[0].mxu0
    %1481 = vmatprep.mubr.f32.mxu0 %v1298
    %1482 = vmatmul.mubr.f32.gmra.mrb[0].mxu0 %v1297
    %v1483 = vpop.f32.mrb[0].mxu0
    %v1484 = vadd.f32 %v1404, %v1483
    %v1485 = vpop.f32.mrb[0].mxu0
    %1486 = vdwg.mxu0
    %1487 = vmatprep.subr.mxu0 0.0
    %1488 = vmatpush1.msra.mxu0 %v1241
    %1489 = vmatprep.subr.mxu0 0.0
    %1490 = vmatpush1.msra.mxu0 %v1242
    %1491 = vmatprep.subr.mxu0 0.0
    %1492 = vmatpush1.msra.mxu0 %v1254
    %1493 = vmatprep.subr.mxu0 0.0
    %1494 = vmatpush1.msra.mxu0 %v1255
    %1495 = vmatprep.subr.mxu0 0.0
    %1496 = vmatpush1.msra.mxu0 %v1256
    %1497 = vmatprep.subr.mxu0 0.0
    %1498 = vmatpush1.msra.mxu0 %v1268
    %1499 = vmatprep.subr.mxu0 0.0
    %1500 = vmatpush1.msra.mxu0 %v1269
    %1501 = vmatprep.subr.mxu0 0.0
    %1502 = vmatpush1.msra.mxu0 %v1270
    %1503 = vmatprep.subr.mxu0 0.0
    %1504 = vmatpush1.msra.mxu0 %v1282
    %1505 = vmatprep.subr.mxu0 0.0
    %1506 = vmatpush1.msra.mxu0 %v1283
    %1507 = vmatprep.subr.mxu0 0.0
    %1508 = vmatpush1.msra.mxu0 %v1284
    %1509 = vmatprep.subr.mxu0 0.0
    %1510 = vmatpush1.msra.mxu0 0.0
    %1511 = vmatprep.subr.mxu0 0.0
    %1512 = vmatpush1.msra.mxu0 0.0
    %1513 = vmatprep.subr.mxu0 0.0
    %1514 = vmatpush1.msra.mxu0 0.0
    %1515 = vmatprep.subr.mxu0 0.0
    %1516 = vmatpush1.msra.mxu0 0.0
    %1517 = vmatprep.subr.mxu0 0.0
    %1518 = vmatpush1.msra.mxu0 0.0
    %1519 = vmatprep.subr.mxu0 0.0
    %1520 = vmatpush1.msra.mxu0 0.0
    %1521 = vmatprep.subr.mxu0 0.0
    %1522 = vmatpush1.msra.mxu0 0.0
    %1523 = vmatprep.subr.mxu0 0.0
    %1524 = vmatpush1.msra.mxu0 0.0
    %1525 = vmatprep.subr.mxu0 0.0
    %1526 = vmatpush1.msra.mxu0 0.0
    %1527 = vmatprep.subr.mxu0 0.0
    %1528 = vmatpush1.msra.mxu0 0.0
    %1529 = vmatprep.subr.mxu0 0.0
    %1530 = vmatpush1.msra.mxu0 0.0
    %1531 = vmatprep.subr.mxu0 0.0
    %1532 = vmatpush1.msra.mxu0 0.0
    %1533 = vmatprep.subr.mxu0 0.0
    %1534 = vmatpush1.msra.mxu0 0.0
    %1535 = vmatprep.subr.mxu0 0.0
    %1536 = vmatpush1.msra.mxu0 0.0
    %1537 = vmatprep.subr.mxu0 0.0
    %1538 = vmatpush1.msra.mxu0 0.0
    %1539 = vmatprep.subr.mxu0 0.0
    %1540 = vmatpush1.msra.mxu0 0.0
    %1541 = vmatprep.subr.mxu0 0.0
    %1542 = vmatpush1.msra.mxu0 0.0
    %1543 = vmatprep.subr.mxu0 0.0
    %1544 = vmatpush1.msra.mxu0 0.0
    %1545 = vmatprep.subr.mxu0 0.0
    %1546 = vmatpush1.msra.mxu0 0.0
    %1547 = vmatprep.subr.mxu0 0.0
    %1548 = vmatpush1.msra.mxu0 0.0
    %1549 = vmatprep.subr.mxu0 0.0
    %1550 = vmatpush1.msra.mxu0 0.0
    %1551 = vmatprep.mubr.f32.mxu0 0.0
    %1552 = vmatmul.mubr.f32.gmra.mrb[0].mxu0 %v1319
    %v1553 = vpop.f32.mrb[0].mxu0
    %v1554 = vadd.f32 %v1474, %v1553
    %v1555 = vpop.f32.mrb[0].mxu0
    %1556 = vmatprep.mubr.f32.mxu0 0.0
    %1557 = vmatmul.mubr.f32.gmra.mrb[0].mxu0 %v1322
    %v1558 = vpop.f32.mrb[0].mxu0
    %v1559 = vadd.f32 %v1479, %v1558
    %v1560 = vpop.f32.mrb[0].mxu0
    %1561 = vmatprep.mubr.f32.mxu0 0.0
    %1562 = vmatmul.mubr.f32.gmra.mrb[0].mxu0 %v1325
    %v1563 = vpop.f32.mrb[0].mxu0
    %v1564 = vadd.f32 %v1484, %v1563
    %v1565 = vpop.f32.mrb[0].mxu0
    %1566 = vdwg.mxu0
    %v1567 = vmax.f32 %v1554, 0.0
    %v1568 = vmax.f32 %v1559, 0.0
    %v1569 = vmax.f32 %v1564, 0.0
    %v1570 = vld [vmem:[%s9] sm:$0xff]
    %v1571 = vld [vmem:[%s9 + $0x30] sm:$0x3]
    %v1573 = vrot.slane %v1567, 2
    %1576 = vrot.lane.b32.xlu0 %v1570, 64
    %v1577 = vpop.permute.xlu0 %1576
    %1578 = vrot.lane.b32.xlu0 %v1571, 64
    %v1579 = vpop.permute.xlu0 %1578
    %vm1580 = vcmask 523264
    %v1581 = vsel %vm1580, %v1573, 0
    %v1583 = vsel %vm1580, %v1577, 0
    %v1585 = vsel %vm1580, %v1579, 0
    %1587 = vmatprep.subr.mxu0 0.0
    %1588 = vmatpush1.xpose.msra.mxu0 %v1583
    %1589 = vmatprep.subr.mxu0 0.0
    %1590 = vmatpush1.xpose.msra.mxu0 %v1585
    %1591 = vmatprep.subr.mxu0 0.0
    %1592 = vmatpush1.xpose.msra.mxu0 0.0
    %1593 = vmatprep.subr.mxu0 0.0
    %1594 = vmatpush1.xpose.msra.mxu0 0.0
    %1595 = vmatprep.subr.mxu0 0.0
    %1596 = vmatpush1.xpose.msra.mxu0 0.0
    %1597 = vmatprep.subr.mxu0 0.0
    %1598 = vmatpush1.xpose.msra.mxu0 0.0
    %1599 = vmatprep.subr.mxu0 0.0
    %1600 = vmatpush1.xpose.msra.mxu0 0.0
    %1601 = vmatprep.subr.mxu0 0.0
    %1602 = vmatpush1.xpose.msra.mxu0 0.0
    %1603 = vmatprep.subr.mxu0 0.0
    %1604 = vmatpush1.xpose.msra.mxu0 0.0
    %1605 = vmatprep.subr.mxu0 0.0
    %1606 = vmatpush1.xpose.msra.mxu0 0.0
    %1607 = vmatprep.subr.mxu0 0.0
    %1608 = vmatpush1.xpose.msra.mxu0 0.0
    %1609 = vmatprep.subr.mxu0 0.0
    %1610 = vmatpush1.xpose.msra.mxu0 0.0
    %1611 = vmatprep.subr.mxu0 0.0
    %1612 = vmatpush1.xpose.msra.mxu0 0.0
    %1613 = vmatprep.subr.mxu0 0.0
    %1614 = vmatpush1.xpose.msra.mxu0 0.0
    %1615 = vmatprep.subr.mxu0 0.0
    %1616 = vmatpush1.xpose.msra.mxu0 0.0
    %1617 = vmatprep.subr.mxu0 0.0
    %1618 = vmatpush1.xpose.msra.mxu0 0.0
    %1619 = vmatprep.subr.mxu0 0.0
    %1620 = vmatpush1.xpose.msra.mxu0 0.0
    %1621 = vmatprep.subr.mxu0 0.0
    %1622 = vmatpush1.xpose.msra.mxu0 0.0
    %1623 = vmatprep.subr.mxu0 0.0
    %1624 = vmatpush1.xpose.msra.mxu0 0.0
    %1625 = vmatprep.subr.mxu0 0.0
    %1626 = vmatpush1.xpose.msra.mxu0 0.0
    %1627 = vmatprep.subr.mxu0 0.0
    %1628 = vmatpush1.xpose.msra.mxu0 0.0
    %1629 = vmatprep.subr.mxu0 0.0
    %1630 = vmatpush1.xpose.msra.mxu0 0.0
    %1631 = vmatprep.subr.mxu0 0.0
    %1632 = vmatpush1.xpose.msra.mxu0 0.0
    %1633 = vmatprep.subr.mxu0 0.0
    %1634 = vmatpush1.xpose.msra.mxu0 0.0
    %1635 = vmatprep.subr.mxu0 0.0
    %1636 = vmatpush1.xpose.msra.mxu0 0.0
    %1637 = vmatprep.subr.mxu0 0.0
    %1638 = vmatpush1.xpose.msra.mxu0 0.0
    %1639 = vmatprep.subr.mxu0 0.0
    %1640 = vmatpush1.xpose.msra.mxu0 0.0
    %1641 = vmatprep.subr.mxu0 0.0
    %1642 = vmatpush1.xpose.msra.mxu0 0.0
    %1643 = vmatprep.subr.mxu0 0.0
    %1644 = vmatpush1.xpose.msra.mxu0 0.0
    %1645 = vmatprep.subr.mxu0 0.0
    %1646 = vmatpush1.xpose.msra.mxu0 0.0
    %1647 = vmatprep.subr.mxu0 0.0
    %1648 = vmatpush1.xpose.msra.mxu0 0.0
    %1649 = vmatprep.subr.mxu0 0.0
    %1650 = vmatpush1.xpose.msra.mxu0 0.0
    %1651 = vmatprep.mubr.f32.mxu0 0.0
    %1652 = vmatmul.mubr.f32.gmra.mrb[0].mxu0 %v1581
    %v1653 = vpop.f32.mrb[0].mxu0
    %v1654 = vadd.f32 0.0, %v1653
    %v1655 = vpop.f32.mrb[0].mxu0
    %1656 = vdwg.mxu0
    %v1657 = vsel %vm1580, %v1567, 0
    %v1659 = vsel %vm1580, %v1570, 0
    %v1661 = vsel %vm1580, %v1571, 0
    %1663 = vmatprep.subr.mxu0 0.0
    %1664 = vmatpush1.xpose.msra.mxu0 %v1659
    %1665 = vmatprep.subr.mxu0 0.0
    %1666 = vmatpush1.xpose.msra.mxu0 %v1661
    %1667 = vmatprep.subr.mxu0 0.0
    %1668 = vmatpush1.xpose.msra.mxu0 0.0
    %1669 = vmatprep.subr.mxu0 0.0
    %1670 = vmatpush1.xpose.msra.mxu0 0.0
    %1671 = vmatprep.subr.mxu0 0.0
    %1672 = vmatpush1.xpose.msra.mxu0 0.0
    %1673 = vmatprep.subr.mxu0 0.0
    %1674 = vmatpush1.xpose.msra.mxu0 0.0
    %1675 = vmatprep.subr.mxu0 0.0
    %1676 = vmatpush1.xpose.msra.mxu0 0.0
    %1677 = vmatprep.subr.mxu0 0.0
    %1678 = vmatpush1.xpose.msra.mxu0 0.0
    %1679 = vmatprep.subr.mxu0 0.0
    %1680 = vmatpush1.xpose.msra.mxu0 0.0
    %1681 = vmatprep.subr.mxu0 0.0
    %1682 = vmatpush1.xpose.msra.mxu0 0.0
    %1683 = vmatprep.subr.mxu0 0.0
    %1684 = vmatpush1.xpose.msra.mxu0 0.0
    %1685 = vmatprep.subr.mxu0 0.0
    %1686 = vmatpush1.xpose.msra.mxu0 0.0
    %1687 = vmatprep.subr.mxu0 0.0
    %1688 = vmatpush1.xpose.msra.mxu0 0.0
    %1689 = vmatprep.subr.mxu0 0.0
    %1690 = vmatpush1.xpose.msra.mxu0 0.0
    %1691 = vmatprep.subr.mxu0 0.0
    %1692 = vmatpush1.xpose.msra.mxu0 0.0
    %1693 = vmatprep.subr.mxu0 0.0
    %1694 = vmatpush1.xpose.msra.mxu0 0.0
    %1695 = vmatprep.subr.mxu0 0.0
    %1696 = vmatpush1.xpose.msra.mxu0 0.0
    %1697 = vmatprep.subr.mxu0 0.0
    %1698 = vmatpush1.xpose.msra.mxu0 0.0
    %1699 = vmatprep.subr.mxu0 0.0
    %1700 = vmatpush1.xpose.msra.mxu0 0.0
    %1701 = vmatprep.subr.mxu0 0.0
    %1702 = vmatpush1.xpose.msra.mxu0 0.0
    %1703 = vmatprep.subr.mxu0 0.0
    %1704 = vmatpush1.xpose.msra.mxu0 0.0
    %1705 = vmatprep.subr.mxu0 0.0
    %1706 = vmatpush1.xpose.msra.mxu0 0.0
    %1707 = vmatprep.subr.mxu0 0.0
    %1708 = vmatpush1.xpose.msra.mxu0 0.0
    %1709 = vmatprep.subr.mxu0 0.0
    %1710 = vmatpush1.xpose.msra.mxu0 0.0
    %1711 = vmatprep.subr.mxu0 0.0
    %1712 = vmatpush1.xpose.msra.mxu0 0.0
    %1713 = vmatprep.subr.mxu0 0.0
    %1714 = vmatpush1.xpose.msra.mxu0 0.0
    %1715 = vmatprep.subr.mxu0 0.0
    %1716 = vmatpush1.xpose.msra.mxu0 0.0
    %1717 = vmatprep.subr.mxu0 0.0
    %1718 = vmatpush1.xpose.msra.mxu0 0.0
    %1719 = vmatprep.subr.mxu0 0.0
    %1720 = vmatpush1.xpose.msra.mxu0 0.0
    %1721 = vmatprep.subr.mxu0 0.0
    %1722 = vmatpush1.xpose.msra.mxu0 0.0
    %1723 = vmatprep.subr.mxu0 0.0
    %1724 = vmatpush1.xpose.msra.mxu0 0.0
    %1725 = vmatprep.subr.mxu0 0.0
    %1726 = vmatpush1.xpose.msra.mxu0 0.0
    %1727 = vmatprep.mubr.f32.mxu0 0.0
    %1728 = vmatmul.mubr.f32.gmra.mrb[0].mxu0 %v1657
    %v1729 = vpop.f32.mrb[0].mxu0
    %v1730 = vadd.f32 %v1654, %v1729
    %v1731 = vpop.f32.mrb[0].mxu0
    %1732 = vdwg.mxu0
    %v1733 = vld [vmem:[%s9 + $0x8] sm:$0xff]
    %v1734 = vld [vmem:[%s9 + $0x38] sm:$0x3]
    %v1735 = vrot.slane %v1567, 4
    %v1736 = vsel %vm1580, %v1735, 0
    %v1739 = vsel %vm1580, %v1733, 0
    %v1742 = vsel %vm1580, %v1734, 0
    %1744 = vmatprep.subr.mxu0 0.0
    %1745 = vmatpush1.xpose.msra.mxu0 %v1739
    %1746 = vmatprep.subr.mxu0 0.0
    %1747 = vmatpush1.xpose.msra.mxu0 %v1742
    %1748 = vmatprep.subr.mxu0 0.0
    %1749 = vmatpush1.xpose.msra.mxu0 0.0
    %1750 = vmatprep.subr.mxu0 0.0
    %1751 = vmatpush1.xpose.msra.mxu0 0.0
    %1752 = vmatprep.subr.mxu0 0.0
    %1753 = vmatpush1.xpose.msra.mxu0 0.0
    %1754 = vmatprep.subr.mxu0 0.0
    %1755 = vmatpush1.xpose.msra.mxu0 0.0
    %1756 = vmatprep.subr.mxu0 0.0
    %1757 = vmatpush1.xpose.msra.mxu0 0.0
    %1758 = vmatprep.subr.mxu0 0.0
    %1759 = vmatpush1.xpose.msra.mxu0 0.0
    %1760 = vmatprep.subr.mxu0 0.0
    %1761 = vmatpush1.xpose.msra.mxu0 0.0
    %1762 = vmatprep.subr.mxu0 0.0
    %1763 = vmatpush1.xpose.msra.mxu0 0.0
    %1764 = vmatprep.subr.mxu0 0.0
    %1765 = vmatpush1.xpose.msra.mxu0 0.0
    %1766 = vmatprep.subr.mxu0 0.0
    %1767 = vmatpush1.xpose.msra.mxu0 0.0
    %1768 = vmatprep.subr.mxu0 0.0
    %1769 = vmatpush1.xpose.msra.mxu0 0.0
    %1770 = vmatprep.subr.mxu0 0.0
    %1771 = vmatpush1.xpose.msra.mxu0 0.0
    %1772 = vmatprep.subr.mxu0 0.0
    %1773 = vmatpush1.xpose.msra.mxu0 0.0
    %1774 = vmatprep.subr.mxu0 0.0
    %1775 = vmatpush1.xpose.msra.mxu0 0.0
    %1776 = vmatprep.subr.mxu0 0.0
    %1777 = vmatpush1.xpose.msra.mxu0 0.0
    %1778 = vmatprep.subr.mxu0 0.0
    %1779 = vmatpush1.xpose.msra.mxu0 0.0
    %1780 = vmatprep.subr.mxu0 0.0
    %1781 = vmatpush1.xpose.msra.mxu0 0.0
    %1782 = vmatprep.subr.mxu0 0.0
    %1783 = vmatpush1.xpose.msra.mxu0 0.0
    %1784 = vmatprep.subr.mxu0 0.0
    %1785 = vmatpush1.xpose.msra.mxu0 0.0
    %1786 = vmatprep.subr.mxu0 0.0
    %1787 = vmatpush1.xpose.msra.mxu0 0.0
    %1788 = vmatprep.subr.mxu0 0.0
    %1789 = vmatpush1.xpose.msra.mxu0 0.0
    %1790 = vmatprep.subr.mxu0 0.0
    %1791 = vmatpush1.xpose.msra.mxu0 0.0
    %1792 = vmatprep.subr.mxu0 0.0
    %1793 = vmatpush1.xpose.msra.mxu0 0.0
    %1794 = vmatprep.subr.mxu0 0.0
    %1795 = vmatpush1.xpose.msra.mxu0 0.0
    %1796 = vmatprep.subr.mxu0 0.0
    %1797 = vmatpush1.xpose.msra.mxu0 0.0
    %1798 = vmatprep.subr.mxu0 0.0
    %1799 = vmatpush1.xpose.msra.mxu0 0.0
    %1800 = vmatprep.subr.mxu0 0.0
    %1801 = vmatpush1.xpose.msra.mxu0 0.0
    %1802 = vmatprep.subr.mxu0 0.0
    %1803 = vmatpush1.xpose.msra.mxu0 0.0
    %1804 = vmatprep.subr.mxu0 0.0
    %1805 = vmatpush1.xpose.msra.mxu0 0.0
    %1806 = vmatprep.subr.mxu0 0.0
    %1807 = vmatpush1.xpose.msra.mxu0 0.0
    %1808 = vmatprep.mubr.f32.mxu0 0.0
    %1809 = vmatmul.mubr.f32.gmra.mrb[0].mxu0 %v1736
    %v1810 = vpop.f32.mrb[0].mxu0
    %v1811 = vadd.f32 0.0, %v1810
    %v1812 = vpop.f32.mrb[0].mxu0
    %1813 = vdwg.mxu0
    %v1814 = vadd.f32 %v1730, %v1811
    %v1815 = vrot.slane %v1567, 6
    %1816 = vrot.lane.b32.xlu0 %v1733, 64
    %v1817 = vpop.permute.xlu0 %1816
    %1818 = vrot.lane.b32.xlu0 %v1734, 64
    %v1819 = vpop.permute.xlu0 %1818
    %v1820 = vsel %vm1580, %v1815, 0
    %v1822 = vsel %vm1580, %v1817, 0
    %v1824 = vsel %vm1580, %v1819, 0
    %1826 = vmatprep.subr.mxu0 0.0
    %1827 = vmatpush1.xpose.msra.mxu0 %v1822
    %1828 = vmatprep.subr.mxu0 0.0
    %1829 = vmatpush1.xpose.msra.mxu0 %v1824
    %1830 = vmatprep.subr.mxu0 0.0
    %1831 = vmatpush1.xpose.msra.mxu0 0.0
    %1832 = vmatprep.subr.mxu0 0.0
    %1833 = vmatpush1.xpose.msra.mxu0 0.0
    %1834 = vmatprep.subr.mxu0 0.0
    %1835 = vmatpush1.xpose.msra.mxu0 0.0
    %1836 = vmatprep.subr.mxu0 0.0
    %1837 = vmatpush1.xpose.msra.mxu0 0.0
    %1838 = vmatprep.subr.mxu0 0.0
    %1839 = vmatpush1.xpose.msra.mxu0 0.0
    %1840 = vmatprep.subr.mxu0 0.0
    %1841 = vmatpush1.xpose.msra.mxu0 0.0
    %1842 = vmatprep.subr.mxu0 0.0
    %1843 = vmatpush1.xpose.msra.mxu0 0.0
    %1844 = vmatprep.subr.mxu0 0.0
    %1845 = vmatpush1.xpose.msra.mxu0 0.0
    %1846 = vmatprep.subr.mxu0 0.0
    %1847 = vmatpush1.xpose.msra.mxu0 0.0
    %1848 = vmatprep.subr.mxu0 0.0
    %1849 = vmatpush1.xpose.msra.mxu0 0.0
    %1850 = vmatprep.subr.mxu0 0.0
    %1851 = vmatpush1.xpose.msra.mxu0 0.0
    %1852 = vmatprep.subr.mxu0 0.0
    %1853 = vmatpush1.xpose.msra.mxu0 0.0
    %1854 = vmatprep.subr.mxu0 0.0
    %1855 = vmatpush1.xpose.msra.mxu0 0.0
    %1856 = vmatprep.subr.mxu0 0.0
    %1857 = vmatpush1.xpose.msra.mxu0 0.0
    %1858 = vmatprep.subr.mxu0 0.0
    %1859 = vmatpush1.xpose.msra.mxu0 0.0
    %1860 = vmatprep.subr.mxu0 0.0
    %1861 = vmatpush1.xpose.msra.mxu0 0.0
    %1862 = vmatprep.subr.mxu0 0.0
    %1863 = vmatpush1.xpose.msra.mxu0 0.0
    %1864 = vmatprep.subr.mxu0 0.0
    %1865 = vmatpush1.xpose.msra.mxu0 0.0
    %1866 = vmatprep.subr.mxu0 0.0
    %1867 = vmatpush1.xpose.msra.mxu0 0.0
    %1868 = vmatprep.subr.mxu0 0.0
    %1869 = vmatpush1.xpose.msra.mxu0 0.0
    %1870 = vmatprep.subr.mxu0 0.0
    %1871 = vmatpush1.xpose.msra.mxu0 0.0
    %1872 = vmatprep.subr.mxu0 0.0
    %1873 = vmatpush1.xpose.msra.mxu0 0.0
    %1874 = vmatprep.subr.mxu0 0.0
    %1875 = vmatpush1.xpose.msra.mxu0 0.0
    %1876 = vmatprep.subr.mxu0 0.0
    %1877 = vmatpush1.xpose.msra.mxu0 0.0
    %1878 = vmatprep.subr.mxu0 0.0
    %1879 = vmatpush1.xpose.msra.mxu0 0.0
    %1880 = vmatprep.subr.mxu0 0.0
    %1881 = vmatpush1.xpose.msra.mxu0 0.0
    %1882 = vmatprep.subr.mxu0 0.0
    %1883 = vmatpush1.xpose.msra.mxu0 0.0
    %1884 = vmatprep.subr.mxu0 0.0
    %1885 = vmatpush1.xpose.msra.mxu0 0.0
    %1886 = vmatprep.subr.mxu0 0.0
    %1887 = vmatpush1.xpose.msra.mxu0 0.0
    %1888 = vmatprep.subr.mxu0 0.0
    %1889 = vmatpush1.xpose.msra.mxu0 0.0
    %1890 = vmatprep.mubr.f32.mxu0 0.0
    %1891 = vmatmul.mubr.f32.gmra.mrb[0].mxu0 %v1820
    %v1892 = vpop.f32.mrb[0].mxu0
    %v1893 = vadd.f32 0.0, %v1892
    %v1894 = vpop.f32.mrb[0].mxu0
    %1895 = vdwg.mxu0
    %v1896 = vadd.f32 %v1814, %v1893
    %v1897 = vld [vmem:[%s9 + $0x10] sm:$0xff]
    %v1898 = vld [vmem:[%s9 + $0x40] sm:$0x3]
    %v1900 = vsel %vm1580, %v1568, 0
    %v1903 = vsel %vm1580, %v1897, 0
    %v1906 = vsel %vm1580, %v1898, 0
    %1908 = vmatprep.subr.mxu0 0.0
    %1909 = vmatpush1.xpose.msra.mxu0 %v1903
    %1910 = vmatprep.subr.mxu0 0.0
    %1911 = vmatpush1.xpose.msra.mxu0 %v1906
    %1912 = vmatprep.subr.mxu0 0.0
    %1913 = vmatpush1.xpose.msra.mxu0 0.0
    %1914 = vmatprep.subr.mxu0 0.0
    %1915 = vmatpush1.xpose.msra.mxu0 0.0
    %1916 = vmatprep.subr.mxu0 0.0
    %1917 = vmatpush1.xpose.msra.mxu0 0.0
    %1918 = vmatprep.subr.mxu0 0.0
    %1919 = vmatpush1.xpose.msra.mxu0 0.0
    %1920 = vmatprep.subr.mxu0 0.0
    %1921 = vmatpush1.xpose.msra.mxu0 0.0
    %1922 = vmatprep.subr.mxu0 0.0
    %1923 = vmatpush1.xpose.msra.mxu0 0.0
    %1924 = vmatprep.subr.mxu0 0.0
    %1925 = vmatpush1.xpose.msra.mxu0 0.0
    %1926 = vmatprep.subr.mxu0 0.0
    %1927 = vmatpush1.xpose.msra.mxu0 0.0
    %1928 = vmatprep.subr.mxu0 0.0
    %1929 = vmatpush1.xpose.msra.mxu0 0.0
    %1930 = vmatprep.subr.mxu0 0.0
    %1931 = vmatpush1.xpose.msra.mxu0 0.0
    %1932 = vmatprep.subr.mxu0 0.0
    %1933 = vmatpush1.xpose.msra.mxu0 0.0
    %1934 = vmatprep.subr.mxu0 0.0
    %1935 = vmatpush1.xpose.msra.mxu0 0.0
    %1936 = vmatprep.subr.mxu0 0.0
    %1937 = vmatpush1.xpose.msra.mxu0 0.0
    %1938 = vmatprep.subr.mxu0 0.0
    %1939 = vmatpush1.xpose.msra.mxu0 0.0
    %1940 = vmatprep.subr.mxu0 0.0
    %1941 = vmatpush1.xpose.msra.mxu0 0.0
    %1942 = vmatprep.subr.mxu0 0.0
    %1943 = vmatpush1.xpose.msra.mxu0 0.0
    %1944 = vmatprep.subr.mxu0 0.0
    %1945 = vmatpush1.xpose.msra.mxu0 0.0
    %1946 = vmatprep.subr.mxu0 0.0
    %1947 = vmatpush1.xpose.msra.mxu0 0.0
    %1948 = vmatprep.subr.mxu0 0.0
    %1949 = vmatpush1.xpose.msra.mxu0 0.0
    %1950 = vmatprep.subr.mxu0 0.0
    %1951 = vmatpush1.xpose.msra.mxu0 0.0
    %1952 = vmatprep.subr.mxu0 0.0
    %1953 = vmatpush1.xpose.msra.mxu0 0.0
    %1954 = vmatprep.subr.mxu0 0.0
    %1955 = vmatpush1.xpose.msra.mxu0 0.0
    %1956 = vmatprep.subr.mxu0 0.0
    %1957 = vmatpush1.xpose.msra.mxu0 0.0
    %1958 = vmatprep.subr.mxu0 0.0
    %1959 = vmatpush1.xpose.msra.mxu0 0.0
    %1960 = vmatprep.subr.mxu0 0.0
    %1961 = vmatpush1.xpose.msra.mxu0 0.0
    %1962 = vmatprep.subr.mxu0 0.0
    %1963 = vmatpush1.xpose.msra.mxu0 0.0
    %1964 = vmatprep.subr.mxu0 0.0
    %1965 = vmatpush1.xpose.msra.mxu0 0.0
    %1966 = vmatprep.subr.mxu0 0.0
    %1967 = vmatpush1.xpose.msra.mxu0 0.0
    %1968 = vmatprep.subr.mxu0 0.0
    %1969 = vmatpush1.xpose.msra.mxu0 0.0
    %1970 = vmatprep.subr.mxu0 0.0
    %1971 = vmatpush1.xpose.msra.mxu0 0.0
    %1972 = vmatprep.mubr.f32.mxu0 0.0
    %1973 = vmatmul.mubr.f32.gmra.mrb[0].mxu0 %v1900
    %v1974 = vpop.f32.mrb[0].mxu0
    %v1975 = vadd.f32 0.0, %v1974
    %v1976 = vpop.f32.mrb[0].mxu0
    %1977 = vdwg.mxu0
    %v1978 = vadd.f32 %v1896, %v1975
    %v1979 = vrot.slane %v1568, 2
    %1980 = vrot.lane.b32.xlu0 %v1897, 64
    %v1981 = vpop.permute.xlu0 %1980
    %1982 = vrot.lane.b32.xlu0 %v1898, 64
    %v1983 = vpop.permute.xlu0 %1982
    %v1984 = vsel %vm1580, %v1979, 0
    %v1986 = vsel %vm1580, %v1981, 0
    %v1988 = vsel %vm1580, %v1983, 0
    %1990 = vmatprep.subr.mxu0 0.0
    %1991 = vmatpush1.xpose.msra.mxu0 %v1986
    %1992 = vmatprep.subr.mxu0 0.0
    %1993 = vmatpush1.xpose.msra.mxu0 %v1988
    %1994 = vmatprep.subr.mxu0 0.0
    %1995 = vmatpush1.xpose.msra.mxu0 0.0
    %1996 = vmatprep.subr.mxu0 0.0
    %1997 = vmatpush1.xpose.msra.mxu0 0.0
    %1998 = vmatprep.subr.mxu0 0.0
    %1999 = vmatpush1.xpose.msra.mxu0 0.0
    %2000 = vmatprep.subr.mxu0 0.0
    %2001 = vmatpush1.xpose.msra.mxu0 0.0
    %2002 = vmatprep.subr.mxu0 0.0
    %2003 = vmatpush1.xpose.msra.mxu0 0.0
    %2004 = vmatprep.subr.mxu0 0.0
    %2005 = vmatpush1.xpose.msra.mxu0 0.0
    %2006 = vmatprep.subr.mxu0 0.0
    %2007 = vmatpush1.xpose.msra.mxu0 0.0
    %2008 = vmatprep.subr.mxu0 0.0
    %2009 = vmatpush1.xpose.msra.mxu0 0.0
    %2010 = vmatprep.subr.mxu0 0.0
    %2011 = vmatpush1.xpose.msra.mxu0 0.0
    %2012 = vmatprep.subr.mxu0 0.0
    %2013 = vmatpush1.xpose.msra.mxu0 0.0
    %2014 = vmatprep.subr.mxu0 0.0
    %2015 = vmatpush1.xpose.msra.mxu0 0.0
    %2016 = vmatprep.subr.mxu0 0.0
    %2017 = vmatpush1.xpose.msra.mxu0 0.0
    %2018 = vmatprep.subr.mxu0 0.0
    %2019 = vmatpush1.xpose.msra.mxu0 0.0
    %2020 = vmatprep.subr.mxu0 0.0
    %2021 = vmatpush1.xpose.msra.mxu0 0.0
    %2022 = vmatprep.subr.mxu0 0.0
    %2023 = vmatpush1.xpose.msra.mxu0 0.0
    %2024 = vmatprep.subr.mxu0 0.0
    %2025 = vmatpush1.xpose.msra.mxu0 0.0
    %2026 = vmatprep.subr.mxu0 0.0
    %2027 = vmatpush1.xpose.msra.mxu0 0.0
    %2028 = vmatprep.subr.mxu0 0.0
    %2029 = vmatpush1.xpose.msra.mxu0 0.0
    %2030 = vmatprep.subr.mxu0 0.0
    %2031 = vmatpush1.xpose.msra.mxu0 0.0
    %2032 = vmatprep.subr.mxu0 0.0
    %2033 = vmatpush1.xpose.msra.mxu0 0.0
    %2034 = vmatprep.subr.mxu0 0.0
    %2035 = vmatpush1.xpose.msra.mxu0 0.0
    %2036 = vmatprep.subr.mxu0 0.0
    %2037 = vmatpush1.xpose.msra.mxu0 0.0
    %2038 = vmatprep.subr.mxu0 0.0
    %2039 = vmatpush1.xpose.msra.mxu0 0.0
    %2040 = vmatprep.subr.mxu0 0.0
    %2041 = vmatpush1.xpose.msra.mxu0 0.0
    %2042 = vmatprep.subr.mxu0 0.0
    %2043 = vmatpush1.xpose.msra.mxu0 0.0
    %2044 = vmatprep.subr.mxu0 0.0
    %2045 = vmatpush1.xpose.msra.mxu0 0.0
    %2046 = vmatprep.subr.mxu0 0.0
    %2047 = vmatpush1.xpose.msra.mxu0 0.0
    %2048 = vmatprep.subr.mxu0 0.0
    %2049 = vmatpush1.xpose.msra.mxu0 0.0
    %2050 = vmatprep.subr.mxu0 0.0
    %2051 = vmatpush1.xpose.msra.mxu0 0.0
    %2052 = vmatprep.subr.mxu0 0.0
    %2053 = vmatpush1.xpose.msra.mxu0 0.0
    %2054 = vmatprep.mubr.f32.mxu0 0.0
    %2055 = vmatmul.mubr.f32.gmra.mrb[0].mxu0 %v1984
    %v2056 = vpop.f32.mrb[0].mxu0
    %v2057 = vadd.f32 0.0, %v2056
    %v2058 = vpop.f32.mrb[0].mxu0
    %2059 = vdwg.mxu0
    %v2060 = vadd.f32 %v1978, %v2057
    %v2061 = vld [vmem:[%s9 + $0x18] sm:$0xff]
    %v2062 = vld [vmem:[%s9 + $0x48] sm:$0x3]
    %v2063 = vrot.slane %v1568, 4
    %v2064 = vsel %vm1580, %v2063, 0
    %v2067 = vsel %vm1580, %v2061, 0
    %v2070 = vsel %vm1580, %v2062, 0
    %2072 = vmatprep.subr.mxu0 0.0
    %2073 = vmatpush1.xpose.msra.mxu0 %v2067
    %2074 = vmatprep.subr.mxu0 0.0
    %2075 = vmatpush1.xpose.msra.mxu0 %v2070
    %2076 = vmatprep.subr.mxu0 0.0
    %2077 = vmatpush1.xpose.msra.mxu0 0.0
    %2078 = vmatprep.subr.mxu0 0.0
    %2079 = vmatpush1.xpose.msra.mxu0 0.0
    %2080 = vmatprep.subr.mxu0 0.0
    %2081 = vmatpush1.xpose.msra.mxu0 0.0
    %2082 = vmatprep.subr.mxu0 0.0
    %2083 = vmatpush1.xpose.msra.mxu0 0.0
    %2084 = vmatprep.subr.mxu0 0.0
    %2085 = vmatpush1.xpose.msra.mxu0 0.0
    %2086 = vmatprep.subr.mxu0 0.0
    %2087 = vmatpush1.xpose.msra.mxu0 0.0
    %2088 = vmatprep.subr.mxu0 0.0
    %2089 = vmatpush1.xpose.msra.mxu0 0.0
    %2090 = vmatprep.subr.mxu0 0.0
    %2091 = vmatpush1.xpose.msra.mxu0 0.0
    %2092 = vmatprep.subr.mxu0 0.0
    %2093 = vmatpush1.xpose.msra.mxu0 0.0
    %2094 = vmatprep.subr.mxu0 0.0
    %2095 = vmatpush1.xpose.msra.mxu0 0.0
    %2096 = vmatprep.subr.mxu0 0.0
    %2097 = vmatpush1.xpose.msra.mxu0 0.0
    %2098 = vmatprep.subr.mxu0 0.0
    %2099 = vmatpush1.xpose.msra.mxu0 0.0
    %2100 = vmatprep.subr.mxu0 0.0
    %2101 = vmatpush1.xpose.msra.mxu0 0.0
    %2102 = vmatprep.subr.mxu0 0.0
    %2103 = vmatpush1.xpose.msra.mxu0 0.0
    %2104 = vmatprep.subr.mxu0 0.0
    %2105 = vmatpush1.xpose.msra.mxu0 0.0
    %2106 = vmatprep.subr.mxu0 0.0
    %2107 = vmatpush1.xpose.msra.mxu0 0.0
    %2108 = vmatprep.subr.mxu0 0.0
    %2109 = vmatpush1.xpose.msra.mxu0 0.0
    %2110 = vmatprep.subr.mxu0 0.0
    %2111 = vmatpush1.xpose.msra.mxu0 0.0
    %2112 = vmatprep.subr.mxu0 0.0
    %2113 = vmatpush1.xpose.msra.mxu0 0.0
    %2114 = vmatprep.subr.mxu0 0.0
    %2115 = vmatpush1.xpose.msra.mxu0 0.0
    %2116 = vmatprep.subr.mxu0 0.0
    %2117 = vmatpush1.xpose.msra.mxu0 0.0
    %2118 = vmatprep.subr.mxu0 0.0
    %2119 = vmatpush1.xpose.msra.mxu0 0.0
    %2120 = vmatprep.subr.mxu0 0.0
    %2121 = vmatpush1.xpose.msra.mxu0 0.0
    %2122 = vmatprep.subr.mxu0 0.0
    %2123 = vmatpush1.xpose.msra.mxu0 0.0
    %2124 = vmatprep.subr.mxu0 0.0
    %2125 = vmatpush1.xpose.msra.mxu0 0.0
    %2126 = vmatprep.subr.mxu0 0.0
    %2127 = vmatpush1.xpose.msra.mxu0 0.0
    %2128 = vmatprep.subr.mxu0 0.0
    %2129 = vmatpush1.xpose.msra.mxu0 0.0
    %2130 = vmatprep.subr.mxu0 0.0
    %2131 = vmatpush1.xpose.msra.mxu0 0.0
    %2132 = vmatprep.subr.mxu0 0.0
    %2133 = vmatpush1.xpose.msra.mxu0 0.0
    %2134 = vmatprep.subr.mxu0 0.0
    %2135 = vmatpush1.xpose.msra.mxu0 0.0
    %2136 = vmatprep.mubr.f32.mxu0 0.0
    %2137 = vmatmul.mubr.f32.gmra.mrb[0].mxu0 %v2064
    %v2138 = vpop.f32.mrb[0].mxu0
    %v2139 = vadd.f32 0.0, %v2138
    %v2140 = vpop.f32.mrb[0].mxu0
    %2141 = vdwg.mxu0
    %v2142 = vadd.f32 %v2060, %v2139
    %v2143 = vrot.slane %v1568, 6
    %2144 = vrot.lane.b32.xlu0 %v2061, 64
    %v2145 = vpop.permute.xlu0 %2144
    %2146 = vrot.lane.b32.xlu0 %v2062, 64
    %v2147 = vpop.permute.xlu0 %2146
    %v2148 = vsel %vm1580, %v2143, 0
    %v2150 = vsel %vm1580, %v2145, 0
    %v2152 = vsel %vm1580, %v2147, 0
    %2154 = vmatprep.subr.mxu0 0.0
    %2155 = vmatpush1.xpose.msra.mxu0 %v2150
    %2156 = vmatprep.subr.mxu0 0.0
    %2157 = vmatpush1.xpose.msra.mxu0 %v2152
    %2158 = vmatprep.subr.mxu0 0.0
    %2159 = vmatpush1.xpose.msra.mxu0 0.0
    %2160 = vmatprep.subr.mxu0 0.0
    %2161 = vmatpush1.xpose.msra.mxu0 0.0
    %2162 = vmatprep.subr.mxu0 0.0
    %2163 = vmatpush1.xpose.msra.mxu0 0.0
    %2164 = vmatprep.subr.mxu0 0.0
    %2165 = vmatpush1.xpose.msra.mxu0 0.0
    %2166 = vmatprep.subr.mxu0 0.0
    %2167 = vmatpush1.xpose.msra.mxu0 0.0
    %2168 = vmatprep.subr.mxu0 0.0
    %2169 = vmatpush1.xpose.msra.mxu0 0.0
    %2170 = vmatprep.subr.mxu0 0.0
    %2171 = vmatpush1.xpose.msra.mxu0 0.0
    %2172 = vmatprep.subr.mxu0 0.0
    %2173 = vmatpush1.xpose.msra.mxu0 0.0
    %2174 = vmatprep.subr.mxu0 0.0
    %2175 = vmatpush1.xpose.msra.mxu0 0.0
    %2176 = vmatprep.subr.mxu0 0.0
    %2177 = vmatpush1.xpose.msra.mxu0 0.0
    %2178 = vmatprep.subr.mxu0 0.0
    %2179 = vmatpush1.xpose.msra.mxu0 0.0
    %2180 = vmatprep.subr.mxu0 0.0
    %2181 = vmatpush1.xpose.msra.mxu0 0.0
    %2182 = vmatprep.subr.mxu0 0.0
    %2183 = vmatpush1.xpose.msra.mxu0 0.0
    %2184 = vmatprep.subr.mxu0 0.0
    %2185 = vmatpush1.xpose.msra.mxu0 0.0
    %2186 = vmatprep.subr.mxu0 0.0
    %2187 = vmatpush1.xpose.msra.mxu0 0.0
    %2188 = vmatprep.subr.mxu0 0.0
    %2189 = vmatpush1.xpose.msra.mxu0 0.0
    %2190 = vmatprep.subr.mxu0 0.0
    %2191 = vmatpush1.xpose.msra.mxu0 0.0
    %2192 = vmatprep.subr.mxu0 0.0
    %2193 = vmatpush1.xpose.msra.mxu0 0.0
    %2194 = vmatprep.subr.mxu0 0.0
    %2195 = vmatpush1.xpose.msra.mxu0 0.0
    %2196 = vmatprep.subr.mxu0 0.0
    %2197 = vmatpush1.xpose.msra.mxu0 0.0
    %2198 = vmatprep.subr.mxu0 0.0
    %2199 = vmatpush1.xpose.msra.mxu0 0.0
    %2200 = vmatprep.subr.mxu0 0.0
    %2201 = vmatpush1.xpose.msra.mxu0 0.0
    %2202 = vmatprep.subr.mxu0 0.0
    %2203 = vmatpush1.xpose.msra.mxu0 0.0
    %2204 = vmatprep.subr.mxu0 0.0
    %2205 = vmatpush1.xpose.msra.mxu0 0.0
    %2206 = vmatprep.subr.mxu0 0.0
    %2207 = vmatpush1.xpose.msra.mxu0 0.0
    %2208 = vmatprep.subr.mxu0 0.0
    %2209 = vmatpush1.xpose.msra.mxu0 0.0
    %2210 = vmatprep.subr.mxu0 0.0
    %2211 = vmatpush1.xpose.msra.mxu0 0.0
    %2212 = vmatprep.subr.mxu0 0.0
    %2213 = vmatpush1.xpose.msra.mxu0 0.0
    %2214 = vmatprep.subr.mxu0 0.0
    %2215 = vmatpush1.xpose.msra.mxu0 0.0
    %2216 = vmatprep.subr.mxu0 0.0
    %2217 = vmatpush1.xpose.msra.mxu0 0.0
    %2218 = vmatprep.mubr.f32.mxu0 0.0
    %2219 = vmatmul.mubr.f32.gmra.mrb[0].mxu0 %v2148
    %v2220 = vpop.f32.mrb[0].mxu0
    %v2221 = vadd.f32 0.0, %v2220
    %v2222 = vpop.f32.mrb[0].mxu0
    %2223 = vdwg.mxu0
    %v2224 = vadd.f32 %v2142, %v2221
    %v2225 = vld [vmem:[%s9 + $0x20] sm:$0xff]
    %v2226 = vld [vmem:[%s9 + $0x50] sm:$0x3]
    %v2228 = vsel %vm1580, %v1569, 0
    %v2231 = vsel %vm1580, %v2225, 0
    %v2234 = vsel %vm1580, %v2226, 0
    %2236 = vmatprep.subr.mxu0 0.0
    %2237 = vmatpush1.xpose.msra.mxu0 %v2231
    %2238 = vmatprep.subr.mxu0 0.0
    %2239 = vmatpush1.xpose.msra.mxu0 %v2234
    %2240 = vmatprep.subr.mxu0 0.0
    %2241 = vmatpush1.xpose.msra.mxu0 0.0
    %2242 = vmatprep.subr.mxu0 0.0
    %2243 = vmatpush1.xpose.msra.mxu0 0.0
    %2244 = vmatprep.subr.mxu0 0.0
    %2245 = vmatpush1.xpose.msra.mxu0 0.0
    %2246 = vmatprep.subr.mxu0 0.0
    %2247 = vmatpush1.xpose.msra.mxu0 0.0
    %2248 = vmatprep.subr.mxu0 0.0
    %2249 = vmatpush1.xpose.msra.mxu0 0.0
    %2250 = vmatprep.subr.mxu0 0.0
    %2251 = vmatpush1.xpose.msra.mxu0 0.0
    %2252 = vmatprep.subr.mxu0 0.0
    %2253 = vmatpush1.xpose.msra.mxu0 0.0
    %2254 = vmatprep.subr.mxu0 0.0
    %2255 = vmatpush1.xpose.msra.mxu0 0.0
    %2256 = vmatprep.subr.mxu0 0.0
    %2257 = vmatpush1.xpose.msra.mxu0 0.0
    %2258 = vmatprep.subr.mxu0 0.0
    %2259 = vmatpush1.xpose.msra.mxu0 0.0
    %2260 = vmatprep.subr.mxu0 0.0
    %2261 = vmatpush1.xpose.msra.mxu0 0.0
    %2262 = vmatprep.subr.mxu0 0.0
    %2263 = vmatpush1.xpose.msra.mxu0 0.0
    %2264 = vmatprep.subr.mxu0 0.0
    %2265 = vmatpush1.xpose.msra.mxu0 0.0
    %2266 = vmatprep.subr.mxu0 0.0
    %2267 = vmatpush1.xpose.msra.mxu0 0.0
    %2268 = vmatprep.subr.mxu0 0.0
    %2269 = vmatpush1.xpose.msra.mxu0 0.0
    %2270 = vmatprep.subr.mxu0 0.0
    %2271 = vmatpush1.xpose.msra.mxu0 0.0
    %2272 = vmatprep.subr.mxu0 0.0
    %2273 = vmatpush1.xpose.msra.mxu0 0.0
    %2274 = vmatprep.subr.mxu0 0.0
    %2275 = vmatpush1.xpose.msra.mxu0 0.0
    %2276 = vmatprep.subr.mxu0 0.0
    %2277 = vmatpush1.xpose.msra.mxu0 0.0
    %2278 = vmatprep.subr.mxu0 0.0
    %2279 = vmatpush1.xpose.msra.mxu0 0.0
    %2280 = vmatprep.subr.mxu0 0.0
    %2281 = vmatpush1.xpose.msra.mxu0 0.0
    %2282 = vmatprep.subr.mxu0 0.0
    %2283 = vmatpush1.xpose.msra.mxu0 0.0
    %2284 = vmatprep.subr.mxu0 0.0
    %2285 = vmatpush1.xpose.msra.mxu0 0.0
    %2286 = vmatprep.subr.mxu0 0.0
    %2287 = vmatpush1.xpose.msra.mxu0 0.0
    %2288 = vmatprep.subr.mxu0 0.0
    %2289 = vmatpush1.xpose.msra.mxu0 0.0
    %2290 = vmatprep.subr.mxu0 0.0
    %2291 = vmatpush1.xpose.msra.mxu0 0.0
    %2292 = vmatprep.subr.mxu0 0.0
    %2293 = vmatpush1.xpose.msra.mxu0 0.0
    %2294 = vmatprep.subr.mxu0 0.0
    %2295 = vmatpush1.xpose.msra.mxu0 0.0
    %2296 = vmatprep.subr.mxu0 0.0
    %2297 = vmatpush1.xpose.msra.mxu0 0.0
    %2298 = vmatprep.subr.mxu0 0.0
    %2299 = vmatpush1.xpose.msra.mxu0 0.0
    %2300 = vmatprep.mubr.f32.mxu0 0.0
    %2301 = vmatmul.mubr.f32.gmra.mrb[0].mxu0 %v2228
    %v2302 = vpop.f32.mrb[0].mxu0
    %v2303 = vadd.f32 0.0, %v2302
    %v2304 = vpop.f32.mrb[0].mxu0
    %2305 = vdwg.mxu0
    %v2306 = vadd.f32 %v2224, %v2303
    %v2307 = vrot.slane %v1569, 2
    %2308 = vrot.lane.b32.xlu0 %v2225, 64
    %v2309 = vpop.permute.xlu0 %2308
    %2310 = vrot.lane.b32.xlu0 %v2226, 64
    %v2311 = vpop.permute.xlu0 %2310
    %v2312 = vsel %vm1580, %v2307, 0
    %v2314 = vsel %vm1580, %v2309, 0
    %v2316 = vsel %vm1580, %v2311, 0
    %2318 = vmatprep.subr.mxu0 0.0
    %2319 = vmatpush1.xpose.msra.mxu0 %v2314
    %2320 = vmatprep.subr.mxu0 0.0
    %2321 = vmatpush1.xpose.msra.mxu0 %v2316
    %2322 = vmatprep.subr.mxu0 0.0
    %2323 = vmatpush1.xpose.msra.mxu0 0.0
    %2324 = vmatprep.subr.mxu0 0.0
    %2325 = vmatpush1.xpose.msra.mxu0 0.0
    %2326 = vmatprep.subr.mxu0 0.0
    %2327 = vmatpush1.xpose.msra.mxu0 0.0
    %2328 = vmatprep.subr.mxu0 0.0
    %2329 = vmatpush1.xpose.msra.mxu0 0.0
    %2330 = vmatprep.subr.mxu0 0.0
    %2331 = vmatpush1.xpose.msra.mxu0 0.0
    %2332 = vmatprep.subr.mxu0 0.0
    %2333 = vmatpush1.xpose.msra.mxu0 0.0
    %2334 = vmatprep.subr.mxu0 0.0
    %2335 = vmatpush1.xpose.msra.mxu0 0.0
    %2336 = vmatprep.subr.mxu0 0.0
    %2337 = vmatpush1.xpose.msra.mxu0 0.0
    %2338 = vmatprep.subr.mxu0 0.0
    %2339 = vmatpush1.xpose.msra.mxu0 0.0
    %2340 = vmatprep.subr.mxu0 0.0
    %2341 = vmatpush1.xpose.msra.mxu0 0.0
    %2342 = vmatprep.subr.mxu0 0.0
    %2343 = vmatpush1.xpose.msra.mxu0 0.0
    %2344 = vmatprep.subr.mxu0 0.0
    %2345 = vmatpush1.xpose.msra.mxu0 0.0
    %2346 = vmatprep.subr.mxu0 0.0
    %2347 = vmatpush1.xpose.msra.mxu0 0.0
    %2348 = vmatprep.subr.mxu0 0.0
    %2349 = vmatpush1.xpose.msra.mxu0 0.0
    %2350 = vmatprep.subr.mxu0 0.0
    %2351 = vmatpush1.xpose.msra.mxu0 0.0
    %2352 = vmatprep.subr.mxu0 0.0
    %2353 = vmatpush1.xpose.msra.mxu0 0.0
    %2354 = vmatprep.subr.mxu0 0.0
    %2355 = vmatpush1.xpose.msra.mxu0 0.0
    %2356 = vmatprep.subr.mxu0 0.0
    %2357 = vmatpush1.xpose.msra.mxu0 0.0
    %2358 = vmatprep.subr.mxu0 0.0
    %2359 = vmatpush1.xpose.msra.mxu0 0.0
    %2360 = vmatprep.subr.mxu0 0.0
    %2361 = vmatpush1.xpose.msra.mxu0 0.0
    %2362 = vmatprep.subr.mxu0 0.0
    %2363 = vmatpush1.xpose.msra.mxu0 0.0
    %2364 = vmatprep.subr.mxu0 0.0
    %2365 = vmatpush1.xpose.msra.mxu0 0.0
    %2366 = vmatprep.subr.mxu0 0.0
    %2367 = vmatpush1.xpose.msra.mxu0 0.0
    %2368 = vmatprep.subr.mxu0 0.0
    %2369 = vmatpush1.xpose.msra.mxu0 0.0
    %2370 = vmatprep.subr.mxu0 0.0
    %2371 = vmatpush1.xpose.msra.mxu0 0.0
    %2372 = vmatprep.subr.mxu0 0.0
    %2373 = vmatpush1.xpose.msra.mxu0 0.0
    %2374 = vmatprep.subr.mxu0 0.0
    %2375 = vmatpush1.xpose.msra.mxu0 0.0
    %2376 = vmatprep.subr.mxu0 0.0
    %2377 = vmatpush1.xpose.msra.mxu0 0.0
    %2378 = vmatprep.subr.mxu0 0.0
    %2379 = vmatpush1.xpose.msra.mxu0 0.0
    %2380 = vmatprep.subr.mxu0 0.0
    %2381 = vmatpush1.xpose.msra.mxu0 0.0
    %2382 = vmatprep.mubr.f32.mxu0 0.0
    %2383 = vmatmul.mubr.f32.gmra.mrb[0].mxu0 %v2312
    %v2384 = vpop.f32.mrb[0].mxu0
    %v2385 = vadd.f32 0.0, %v2384
    %v2386 = vpop.f32.mrb[0].mxu0
    %2387 = vdwg.mxu0
    %v2388 = vadd.f32 %v2306, %v2385
    %v2389 = vld [vmem:[%s9 + $0x28] sm:$0xff]
    %v2390 = vld [vmem:[%s9 + $0x58] sm:$0x3]
    %v2391 = vrot.slane %v1569, 4
    %v2392 = vsel %vm1580, %v2391, 0
    %v2395 = vsel %vm1580, %v2389, 0
    %v2398 = vsel %vm1580, %v2390, 0
    %2400 = vmatprep.subr.mxu0 0.0
    %2401 = vmatpush1.xpose.msra.mxu0 %v2395
    %2402 = vmatprep.subr.mxu0 0.0
    %2403 = vmatpush1.xpose.msra.mxu0 %v2398
    %2404 = vmatprep.subr.mxu0 0.0
    %2405 = vmatpush1.xpose.msra.mxu0 0.0
    %2406 = vmatprep.subr.mxu0 0.0
    %2407 = vmatpush1.xpose.msra.mxu0 0.0
    %2408 = vmatprep.subr.mxu0 0.0
    %2409 = vmatpush1.xpose.msra.mxu0 0.0
    %2410 = vmatprep.subr.mxu0 0.0
    %2411 = vmatpush1.xpose.msra.mxu0 0.0
    %2412 = vmatprep.subr.mxu0 0.0
    %2413 = vmatpush1.xpose.msra.mxu0 0.0
    %2414 = vmatprep.subr.mxu0 0.0
    %2415 = vmatpush1.xpose.msra.mxu0 0.0
    %2416 = vmatprep.subr.mxu0 0.0
    %2417 = vmatpush1.xpose.msra.mxu0 0.0
    %2418 = vmatprep.subr.mxu0 0.0
    %2419 = vmatpush1.xpose.msra.mxu0 0.0
    %2420 = vmatprep.subr.mxu0 0.0
    %2421 = vmatpush1.xpose.msra.mxu0 0.0
    %2422 = vmatprep.subr.mxu0 0.0
    %2423 = vmatpush1.xpose.msra.mxu0 0.0
    %2424 = vmatprep.subr.mxu0 0.0
    %2425 = vmatpush1.xpose.msra.mxu0 0.0
    %2426 = vmatprep.subr.mxu0 0.0
    %2427 = vmatpush1.xpose.msra.mxu0 0.0
    %2428 = vmatprep.subr.mxu0 0.0
    %2429 = vmatpush1.xpose.msra.mxu0 0.0
    %2430 = vmatprep.subr.mxu0 0.0
    %2431 = vmatpush1.xpose.msra.mxu0 0.0
    %2432 = vmatprep.subr.mxu0 0.0
    %2433 = vmatpush1.xpose.msra.mxu0 0.0
    %2434 = vmatprep.subr.mxu0 0.0
    %2435 = vmatpush1.xpose.msra.mxu0 0.0
    %2436 = vmatprep.subr.mxu0 0.0
    %2437 = vmatpush1.xpose.msra.mxu0 0.0
    %2438 = vmatprep.subr.mxu0 0.0
    %2439 = vmatpush1.xpose.msra.mxu0 0.0
    %2440 = vmatprep.subr.mxu0 0.0
    %2441 = vmatpush1.xpose.msra.mxu0 0.0
    %2442 = vmatprep.subr.mxu0 0.0
    %2443 = vmatpush1.xpose.msra.mxu0 0.0
    %2444 = vmatprep.subr.mxu0 0.0
    %2445 = vmatpush1.xpose.msra.mxu0 0.0
    %2446 = vmatprep.subr.mxu0 0.0
    %2447 = vmatpush1.xpose.msra.mxu0 0.0
    %2448 = vmatprep.subr.mxu0 0.0
    %2449 = vmatpush1.xpose.msra.mxu0 0.0
    %2450 = vmatprep.subr.mxu0 0.0
    %2451 = vmatpush1.xpose.msra.mxu0 0.0
    %2452 = vmatprep.subr.mxu0 0.0
    %2453 = vmatpush1.xpose.msra.mxu0 0.0
    %2454 = vmatprep.subr.mxu0 0.0
    %2455 = vmatpush1.xpose.msra.mxu0 0.0
    %2456 = vmatprep.subr.mxu0 0.0
    %2457 = vmatpush1.xpose.msra.mxu0 0.0
    %2458 = vmatprep.subr.mxu0 0.0
    %2459 = vmatpush1.xpose.msra.mxu0 0.0
    %2460 = vmatprep.subr.mxu0 0.0
    %2461 = vmatpush1.xpose.msra.mxu0 0.0
    %2462 = vmatprep.subr.mxu0 0.0
    %2463 = vmatpush1.xpose.msra.mxu0 0.0
    %2464 = vmatprep.mubr.f32.mxu0 0.0
    %2465 = vmatmul.mubr.f32.gmra.mrb[0].mxu0 %v2392
    %v2466 = vpop.f32.mrb[0].mxu0
    %v2467 = vadd.f32 0.0, %v2466
    %v2468 = vpop.f32.mrb[0].mxu0
    %2469 = vdwg.mxu0
    %v2470 = vadd.f32 %v2388, %v2467
    %v2471 = vrot.slane %v1569, 6
    %2472 = vrot.lane.b32.xlu0 %v2389, 64
    %v2473 = vpop.permute.xlu0 %2472
    %2474 = vrot.lane.b32.xlu0 %v2390, 64
    %v2475 = vpop.permute.xlu0 %2474
    %v2476 = vsel %vm1580, %v2471, 0
    %v2478 = vsel %vm1580, %v2473, 0
    %v2480 = vsel %vm1580, %v2475, 0
    %2482 = vmatprep.subr.mxu0 0.0
    %2483 = vmatpush1.xpose.msra.mxu0 %v2478
    %2484 = vmatprep.subr.mxu0 0.0
    %2485 = vmatpush1.xpose.msra.mxu0 %v2480
    %2486 = vmatprep.subr.mxu0 0.0
    %2487 = vmatpush1.xpose.msra.mxu0 0.0
    %2488 = vmatprep.subr.mxu0 0.0
    %2489 = vmatpush1.xpose.msra.mxu0 0.0
    %2490 = vmatprep.subr.mxu0 0.0
    %2491 = vmatpush1.xpose.msra.mxu0 0.0
    %2492 = vmatprep.subr.mxu0 0.0
    %2493 = vmatpush1.xpose.msra.mxu0 0.0
    %2494 = vmatprep.subr.mxu0 0.0
    %2495 = vmatpush1.xpose.msra.mxu0 0.0
    %2496 = vmatprep.subr.mxu0 0.0
    %2497 = vmatpush1.xpose.msra.mxu0 0.0
    %2498 = vmatprep.subr.mxu0 0.0
    %2499 = vmatpush1.xpose.msra.mxu0 0.0
    %2500 = vmatprep.subr.mxu0 0.0
    %2501 = vmatpush1.xpose.msra.mxu0 0.0
    %2502 = vmatprep.subr.mxu0 0.0
    %2503 = vmatpush1.xpose.msra.mxu0 0.0
    %2504 = vmatprep.subr.mxu0 0.0
    %2505 = vmatpush1.xpose.msra.mxu0 0.0
    %2506 = vmatprep.subr.mxu0 0.0
    %2507 = vmatpush1.xpose.msra.mxu0 0.0
    %2508 = vmatprep.subr.mxu0 0.0
    %2509 = vmatpush1.xpose.msra.mxu0 0.0
    %2510 = vmatprep.subr.mxu0 0.0
    %2511 = vmatpush1.xpose.msra.mxu0 0.0
    %2512 = vmatprep.subr.mxu0 0.0
    %2513 = vmatpush1.xpose.msra.mxu0 0.0
    %2514 = vmatprep.subr.mxu0 0.0
    %2515 = vmatpush1.xpose.msra.mxu0 0.0
    %2516 = vmatprep.subr.mxu0 0.0
    %2517 = vmatpush1.xpose.msra.mxu0 0.0
    %2518 = vmatprep.subr.mxu0 0.0
    %2519 = vmatpush1.xpose.msra.mxu0 0.0
    %2520 = vmatprep.subr.mxu0 0.0
    %2521 = vmatpush1.xpose.msra.mxu0 0.0
    %2522 = vmatprep.subr.mxu0 0.0
    %2523 = vmatpush1.xpose.msra.mxu0 0.0
    %2524 = vmatprep.subr.mxu0 0.0
    %2525 = vmatpush1.xpose.msra.mxu0 0.0
    %2526 = vmatprep.subr.mxu0 0.0
    %2527 = vmatpush1.xpose.msra.mxu0 0.0
    %2528 = vmatprep.subr.mxu0 0.0
    %2529 = vmatpush1.xpose.msra.mxu0 0.0
    %2530 = vmatprep.subr.mxu0 0.0
    %2531 = vmatpush1.xpose.msra.mxu0 0.0
    %2532 = vmatprep.subr.mxu0 0.0
    %2533 = vmatpush1.xpose.msra.mxu0 0.0
    %2534 = vmatprep.subr.mxu0 0.0
    %2535 = vmatpush1.xpose.msra.mxu0 0.0
    %2536 = vmatprep.subr.mxu0 0.0
    %2537 = vmatpush1.xpose.msra.mxu0 0.0
    %2538 = vmatprep.subr.mxu0 0.0
    %2539 = vmatpush1.xpose.msra.mxu0 0.0
    %2540 = vmatprep.subr.mxu0 0.0
    %2541 = vmatpush1.xpose.msra.mxu0 0.0
    %2542 = vmatprep.subr.mxu0 0.0
    %2543 = vmatpush1.xpose.msra.mxu0 0.0
    %2544 = vmatprep.subr.mxu0 0.0
    %2545 = vmatpush1.xpose.msra.mxu0 0.0
    %2546 = vmatprep.mubr.f32.mxu0 0.0
    %2547 = vmatmul.mubr.f32.gmra.mrb[0].mxu0 %v2476
    %v2548 = vpop.f32.mrb[0].mxu0
    %v2549 = vadd.f32 0.0, %v2548
    %v2550 = vpop.f32.mrb[0].mxu0
    %2551 = vdwg.mxu0
    %v2552 = vadd.f32 %v2470, %v2549
    %v2553 = vld [vmem:[%s10] sm:$0x1]
    %v2555 = vlaneseq
    %v2556 = vshrl.u32 %v2555, 7
    %v2557 = vsub.s32 0, %v2556
    %v2558 = vrot.slane %v2553, %v2557
    %v2560 = vadd.f32 %v2552, %v2558
    %vm2561 = vcmask 74752
    %2562 = vst.msk [vmem:[#allocation2] sm:$0x3] %vm2561, %v2560
    // Predicated region
    $region46: #{net_forward.1} parent=1 // pred_check
      _
    $region47: #{net_forward.1} parent=1 // pred_check_branch
      %2564 = sbr.rel (0) target = $region49
    $region48: #{net_forward.1} parent=1 // pred_region
      %s2566 = ssub.s32 32, 32
      %2567 = vsyncadd [#allocation3], %s2566
      %s2569 = sshll.u32 [#allocation2], 4
      %s2570 = int_to_ptr.vmem [resolvable:$true] %s2569
      %2572 = dma.vmem_to_hbm [thread:$0]  %s2570, 32, %s11, [#allocation3]
    $region49: #{net_forward.1} parent=1 // pred_fallthru
      _
    // Predicated region
    $region50: #{net_forward.1} parent=1 // pred_check
      _
    $region51: #{net_forward.1} parent=1 // pred_check_branch
      %2574 = sbr.rel (0) target = $region53
    $region52: #{net_forward.1} parent=1 // pred_region
      %2575 = dma.done [#allocation3], 32
    $region53: #{net_forward.1} parent=1 // pred_fallthru
      _
    %2576 = vsyncpa [#allocation3], 1

</llo_original>
